<compile_context>
chip_gen: v7x
topology: tpu7x:2x2x1
jax: 0.10.0
libtpu: 0.0.40
codegen_flags: <defaults>
</compile_context>

<pallas_src>
import functools

import jax
import jax.numpy as jnp
from jax import lax
from jax.experimental import pallas as pl
from jax.experimental.pallas import tpu as pltpu

_MATMUL_VMEM_LIMIT = 32 * 1024 * 1024
_REC_VMEM_LIMIT = 48 * 1024 * 1024


def _pick_tile(dim, preferred):
    """Largest preferred tile that divides dim; fall back to the full dim."""
    for t in preferred:
        if t <= dim and dim % t == 0:
            return t
    # TODO(synk): pad instead of full-dim fallback if dim is huge and ragged.
    return dim


# ---------------------------------------------------------------------------
# Generic tiled matmul + bias:  out = x @ w + b
#   x tile is cast to bf16 in-kernel (rides the VPU under the MXU for free),
#   w is bf16, accumulation is f32.
# ---------------------------------------------------------------------------
def _matmul_bias_kernel(x_ref, w_ref, b_ref, o_ref, acc_ref):
    @pl.when(pl.program_id(2) == 0)
    def _():
        acc_ref[...] = jnp.zeros_like(acc_ref)

    acc_ref[...] += jnp.dot(x_ref[...].astype(jnp.bfloat16), w_ref[...],
                            preferred_element_type=jnp.float32)

    @pl.when(pl.program_id(2) == pl.num_programs(2) - 1)
    def _():
        o_ref[...] = (acc_ref[...] + b_ref[...]).astype(o_ref.dtype)


def _matmul_bias(x, w, b, *, out_dtype=jnp.float32):
    """x: (M, K) any float dtype, w: (K, N) bf16, b: (1, N) f32 -> (M, N)."""
    M, K = x.shape
    K2, N = w.shape
    assert K == K2 and b.shape == (1, N)

    # MXU-friendly tiles: tm up to 256, tn 512 (multiple of 256 for v6e/v7x,
    # of 128 for v5e), tk up to the full reduction dim so the x tile index is
    # constant across j (no re-DMA of x per output column block).
    tm = _pick_tile(M, (256, 128, 64, 32, 16, 8))
    tn = _pick_tile(N, (512, 256, 128))
    tk = _pick_tile(K, (2048, 1024, 512, 256, 128))
    assert M % tm == 0 and N % tn == 0 and K % tk == 0, (M, N, K, tm, tn, tk)

    return pl.pallas_call(
        _matmul_bias_kernel,
        out_shape=jax.ShapeDtypeStruct((M, N), out_dtype),
        grid=(M // tm, N // tn, K // tk),
        in_specs=[
            pl.BlockSpec((tm, tk), lambda i, j, k: (i, k)),
            pl.BlockSpec((tk, tn), lambda i, j, k: (k, j)),
            pl.BlockSpec((1, tn), lambda i, j, k: (0, j)),
        ],
        out_specs=pl.BlockSpec((tm, tn), lambda i, j, k: (i, j)),
        scratch_shapes=[pltpu.VMEM((tm, tn), jnp.float32)],
        compiler_params=pltpu.CompilerParams(
            dimension_semantics=("parallel", "parallel", "arbitrary"),
            vmem_limit_bytes=_MATMUL_VMEM_LIMIT),
    )(x, w, b)


# ---------------------------------------------------------------------------
# Recurrent kernel: processes `t_unroll` timesteps per grid step.
#   gx_ref:     (B, Tu*4H) bf16  precomputed x@W_ih + bias for this time chunk
#   w_hh_hbm:   (4, H, H)  bf16  per-gate W_hh blocks, raw HBM ref (pl.ANY)
#   out_ref:    (B, Tu*H)  bf16  hidden states for this chunk (lane-dense)
#   h_ref/c_ref:(B, H)     f32   recurrent state (scratch, carried over grid)
#   w_hh_vmem:  (4, H, H)  bf16  single-buffered resident copy of W_hh
#   dma_sem:    (4,)             per-gate DMA completion semaphores
# ---------------------------------------------------------------------------
def _lstm_rec_kernel(gx_ref, w_hh_hbm, out_ref, h_ref, c_ref, w_hh_vmem,
                     dma_sem, *, hidden, t_unroll):
    t = pl.program_id(0)
    H = hidden
    G4 = 4 * H

    @pl.when(t == 0)
    def _():
        h_ref[...] = jnp.zeros_like(h_ref)
        c_ref[...] = jnp.zeros_like(c_ref)
        # Issue the four per-gate W_hh copies; waits are deferred so the
        # gate-1..3 chunks overlap the gate-0 compute of timestep 0.
        for g in range(4):
            pltpu.make_async_copy(w_hh_hbm.at[g], w_hh_vmem.at[g],
                                  dma_sem.at[g]).start()

    for u in range(t_unroll):
        h_prev_bf = h_ref[...].astype(jnp.bfloat16)
        c_prev = c_ref[...]

        acts = []
        for g in range(4):
            if u == 0:
                # Wait for gate g's weight chunk only right before it is used,
                # and only on the very first grid step (copy-once pattern).
                @pl.when(t == 0)
                def _(g=g):
                    pltpu.make_async_copy(w_hh_hbm.at[g], w_hh_vmem.at[g],
                                          dma_sem.at[g]).wait()

            gx_g = gx_ref[:, u * G4 + g * H:u * G4 + (g + 1) * H].astype(
                jnp.float32)
            pre = gx_g + jnp.dot(h_prev_bf, w_hh_vmem[g],
                                 preferred_element_type=jnp.float32)  # (B, H)
            if g == 2:                       # PyTorch gate order: i, f, g, o
                acts.append(jnp.tanh(pre))
            else:
                acts.append(jax.nn.sigmoid(pre))

        i_g, f_g, g_g, o_g = acts
        c_new = f_g * c_prev + i_g * g_g
        h_new = o_g * jnp.tanh(c_new)

        c_ref[...] = c_new
        h_ref[...] = h_new
        out_ref[:, u * H:(u + 1) * H] = h_new.astype(out_ref.dtype)


def _lstm_recurrence(gates_x_b, w_hh_gates, *, B, T, H, Tu):
    """gates_x_b: (B, T*4H) bf16, w_hh_gates: (4, H, H) bf16 -> (B, T*H) bf16."""
    G4 = 4 * H
    return pl.pallas_call(
        functools.partial(_lstm_rec_kernel, hidden=H, t_unroll=Tu),
        out_shape=jax.ShapeDtypeStruct((B, T * H), jnp.bfloat16),
        grid=(T // Tu,),
        in_specs=[
            pl.BlockSpec((B, Tu * G4), lambda t: (0, t)),
            pl.BlockSpec(memory_space=pl.ANY),          # W_hh stays in HBM
        ],
        out_specs=pl.BlockSpec((B, Tu * H), lambda t: (0, t)),
        scratch_shapes=[
            pltpu.VMEM((B, H), jnp.float32),             # h state
            pltpu.VMEM((B, H), jnp.float32),             # c state
            pltpu.VMEM((4, H, H), jnp.bfloat16),         # resident W_hh (1 buf)
            pltpu.SemaphoreType.DMA((4,)),
        ],
        compiler_params=pltpu.CompilerParams(
            # Must stay sequential: h/c scratch carry + copy-once W_hh DMA.
            dimension_semantics=("arbitrary",),
            vmem_limit_bytes=_REC_VMEM_LIMIT),
    )(gates_x_b, w_hh_gates)


# ---------------------------------------------------------------------------
# Full forward
# ---------------------------------------------------------------------------
def lstm_model_forward(x_btd, params):
    """x_btd: (B, T, in_dim) f32 -> (B*T, 1, out_size) f32 (PyTorch ordering)."""
    w_ih, w_hh, b_ih, b_hh, fc_w, fc_b = (
        params["w_ih"], params["w_hh"], params["b_ih"], params["b_hh"],
        params["fc_w"], params["fc_b"])

    B, T, D = x_btd.shape
    H = w_hh.shape[1]          # w_hh: (4H, H)
    OUT = fc_w.shape[0]        # fc_w: (OUT, H)
    G4 = 4 * H

    # Timesteps per grid step: large H -> per-step dot dominates, keep the
    # unroll short to bound live f32 intermediates; small H -> amortize the
    # ~0.35us per-grid-step overhead with a longer unroll.
    if H >= 1024:
        Tu = next(u for u in (2, 1) if T % u == 0)
    else:
        Tu = next(u for u in (8, 4, 2, 1) if T % u == 0)

    # Weight prep (one-time): transpose + bf16 for MXU operands.
    w_ih_t = jnp.transpose(w_ih).astype(jnp.bfloat16)                # (D, 4H)
    w_hh_t = jnp.transpose(w_hh).astype(jnp.bfloat16)                # (H, 4H)
    w_hh_gates = w_hh_t.reshape(H, 4, H).transpose(1, 0, 2)          # (4, H, H)
    bias = (b_ih + b_hh).astype(jnp.float32).reshape(1, G4)          # (1, 4H)
    fc_w_t = jnp.transpose(fc_w).astype(jnp.bfloat16)                # (H, OUT)
    fc_b2 = fc_b.astype(jnp.float32).reshape(1, OUT)                 # (1, OUT)

    # 1) Input projection: one big matmul over all B*T rows.  f32 x is cast
    #    to bf16 in-kernel; gates_x stored in bf16 to halve its HBM traffic.
    x2 = x_btd.reshape(B * T, D)                                     # free view
    gates_x = _matmul_bias(x2, w_ih_t, bias,
                           out_dtype=jnp.bfloat16)                   # (B*T, 4H)
    gates_x_b = gates_x.reshape(B, T * G4)                           # free view

    # 2) Recurrence (only h @ W_hh + gate math inside the time loop).
    hs = _lstm_recurrence(gates_x_b, w_hh_gates,
                          B=B, T=T, H=H, Tu=Tu)                      # (B, T*H) bf16

    # 3) fc projection: one big matmul.  (B, T*H) -> (B*T, H) is a free
    #    row-major view matching PyTorch's lstm_out.view(-1, H) ordering;
    #    hs is already bf16 so no extra cast pass.
    hs2 = hs.reshape(B * T, H)
    y = _matmul_bias(hs2, fc_w_t, fc_b2, out_dtype=jnp.float32)      # (B*T, OUT)
    return y.reshape(B * T, 1, OUT)


# ---------------------------------------------------------------------------
# Pure-JAX reference with the same bf16-operand / f32-accumulate numerics.
# ---------------------------------------------------------------------------
def _reference_forward(x_btd, params):
    w_ih, w_hh, b_ih, b_hh, fc_w, fc_b = (
        params["w_ih"], params["w_hh"], params["b_ih"], params["b_hh"],
        params["fc_w"], params["fc_b"])
    B, T, D = x_btd.shape
    H = w_hh.shape[1]
    OUT = fc_w.shape[0]

    w_ih_t = jnp.transpose(w_ih).astype(jnp.bfloat16)
    w_hh_t = jnp.transpose(w_hh).astype(jnp.bfloat16)
    fc_w_t = jnp.transpose(fc_w).astype(jnp.bfloat16)
    bias = (b_ih + b_hh).astype(jnp.float32)

    gx = jnp.dot(x_btd.reshape(B * T, D).astype(jnp.bfloat16), w_ih_t,
                 preferred_element_type=jnp.float32) + bias          # (B*T, 4H)
    # gates_x is stored in bf16 in the kernel path; mirror that rounding.
    gx = gx.astype(jnp.bfloat16).astype(jnp.float32).reshape(B, T, 4 * H)

    def step(carry, g_t):
        h, c = carry
        gates = g_t + jnp.dot(h.astype(jnp.bfloat16), w_hh_t,
                              preferred_element_type=jnp.float32)
        i = jax.nn.sigmoid(gates[:, 0 * H:1 * H])
        f = jax.nn.sigmoid(gates[:, 1 * H:2 * H])
        g = jnp.tanh(gates[:, 2 * H:3 * H])
        o = jax.nn.sigmoid(gates[:, 3 * H:4 * H])
        c = f * c + i * g
        h = o * jnp.tanh(c)
        return (h, c), h

    h0 = jnp.zeros((B, H), jnp.float32)
    c0 = jnp.zeros((B, H), jnp.float32)
    _, hs = lax.scan(step, (h0, c0), jnp.transpose(gx, (1, 0, 2)))   # (T, B, H)
    hs = jnp.transpose(hs, (1, 0, 2)).reshape(B * T, H)
    y = jnp.dot(hs.astype(jnp.bfloat16), fc_w_t,
                preferred_element_type=jnp.float32) + fc_b.astype(jnp.float32)
    return y.reshape(B * T, 1, OUT)


def init_params(key, in_dim, hidden_dim, out_size):
    ks = jax.random.split(key, 6)
    scale = 0.1
    return {
        "w_ih": scale * jax.random.normal(ks[0], (4 * hidden_dim, in_dim), jnp.float32),
        "w_hh": scale * jax.random.normal(ks[1], (4 * hidden_dim, hidden_dim), jnp.float32),
        "b_ih": scale * jax.random.normal(ks[2], (4 * hidden_dim,), jnp.float32),
        "b_hh": scale * jax.random.normal(ks[3], (4 * hidden_dim,), jnp.float32),
        "fc_w": scale * jax.random.normal(ks[4], (out_size, hidden_dim), jnp.float32),
        "fc_b": scale * jax.random.normal(ks[5], (out_size,), jnp.float32),
    }


if __name__ == "__main__":
    # Small shapes standing in for in_dim = hidden_dim = out_size = 2048.
    B, T = 8, 16
    IN_DIM = HIDDEN = OUT = 128

    key = jax.random.PRNGKey(0)
    k_x, k_p = jax.random.split(key)
    x = jax.random.normal(k_x, (B, T, IN_DIM), jnp.float32)
    params = init_params(k_p, IN_DIM, HIDDEN, OUT)

    fwd = jax.jit(functools.partial(lstm_model_forward, params=params))
    out = jax.block_until_ready(fwd(x))

    assert out.shape == (B * T, 1, OUT), out.shape

    ref = _reference_forward(x, params)
    if not jnp.allclose(out, ref, atol=1e-2, rtol=1e-2):
        max_err = jnp.max(jnp.abs(out - ref))
        raise AssertionError(f"Pallas LSTM output mismatch, max err {max_err}")

    print("KERNEL_OK")
</pallas_src>

<mosaic_0001>
module attributes {stable_mosaic.version = 11 : i64} {
  func.func @_matmul_bias_kernel(%arg0: i32, %arg1: i32, %arg2: i32, %arg3: memref<128x128xf32, #tpu.memory_space<vmem>>, %arg4: memref<128x512xbf16, #tpu.memory_space<vmem>>, %arg5: memref<1x512xf32, #tpu.memory_space<vmem>>, %arg6: memref<128x512xbf16, #tpu.memory_space<vmem>>, %arg7: memref<128x512xf32, #tpu.memory_space<vmem>>) attributes {dimension_semantics = [#tpu.dimension_semantics<parallel>, #tpu.dimension_semantics<parallel>, #tpu.dimension_semantics<arbitrary>], iteration_bounds = array<i64: 1, 1, 1>, scalar_prefetch = 0 : i64, scratch_operands = 1 : i64, tpu.core_type = #tpu.core_type<tc>, window_params = [{transform_indices = @transform_0, window_bounds = array<i64: 128, 128>}, {transform_indices = @transform_1, window_bounds = array<i64: 128, 512>}, {transform_indices = @transform_2, window_bounds = array<i64: 1, 512>}, {transform_indices = @transform_3, window_bounds = array<i64: 128, 512>}]} {
    %c0_i32 = arith.constant 0 : i32
    %0 = arith.cmpi eq, %arg2, %c0_i32 : i32
    %1 = arith.extui %0 : i1 to i32
    %c0_i32_0 = arith.constant 0 : i32
    %2 = arith.cmpi ne, %1, %c0_i32_0 : i32
    scf.if %2 {
      %cst_10 = arith.constant 0.000000e+00 : f32
      %13 = vector.broadcast %cst_10 : f32 to vector<128x512xf32>
      %c0_11 = arith.constant 0 : index
      %c0_12 = arith.constant 0 : index
      %14 = vector.load %arg7[%c0_11, %c0_12] : memref<128x512xf32, #tpu.memory_space<vmem>>, vector<128x512xf32>
      tpu.vector_store %arg7[%c0_11, %c0_12], %13 {strides = array<i32>} : memref<128x512xf32, #tpu.memory_space<vmem>>, vector<128x512xf32>,
    } else {
    }
    %c0 = arith.constant 0 : index
    %c0_1 = arith.constant 0 : index
    %3 = vector.load %arg7[%c0, %c0_1] : memref<128x512xf32, #tpu.memory_space<vmem>>, vector<128x512xf32>
    %c0_2 = arith.constant 0 : index
    %c0_3 = arith.constant 0 : index
    %4 = vector.load %arg3[%c0_2, %c0_3] : memref<128x128xf32, #tpu.memory_space<vmem>>, vector<128x128xf32>
    %5 = arith.truncf %4 : vector<128x128xf32> to vector<128x128xbf16>
    %c0_4 = arith.constant 0 : index
    %c0_5 = arith.constant 0 : index
    %6 = vector.load %arg4[%c0_4, %c0_5] : memref<128x512xbf16, #tpu.memory_space<vmem>>, vector<128x512xbf16>
    %cst = arith.constant dense<0.000000e+00> : vector<128x512xf32>
    %7 = tpu.matmul %5, %6, %cst {dimension_numbers = #tpu.dot_dimension_numbers<[1], [0], [0], [1], [0, 0, 1, 1], [], []>} : vector<128x128xbf16>, vector<128x512xbf16>, vector<128x512xf32> -> vector<128x512xf32>
    %8 = arith.addf %3, %7 : vector<128x512xf32>
    %c0_6 = arith.constant 0 : index
    %c0_7 = arith.constant 0 : index
    %9 = vector.load %arg7[%c0_6, %c0_7] : memref<128x512xf32, #tpu.memory_space<vmem>>, vector<128x512xf32>
    tpu.vector_store %arg7[%c0_6, %c0_7], %8 {strides = array<i32>} : memref<128x512xf32, #tpu.memory_space<vmem>>, vector<128x512xf32>,
    %c0_i32_8 = arith.constant 0 : i32
    %10 = arith.cmpi eq, %arg2, %c0_i32_8 : i32
    %11 = arith.extui %10 : i1 to i32
    %c0_i32_9 = arith.constant 0 : i32
    %12 = arith.cmpi ne, %11, %c0_i32_9 : i32
    scf.if %12 {
      %c0_10 = arith.constant 0 : index
      %c0_11 = arith.constant 0 : index
      %13 = vector.load %arg7[%c0_10, %c0_11] : memref<128x512xf32, #tpu.memory_space<vmem>>, vector<128x512xf32>
      %c0_12 = arith.constant 0 : index
      %c0_13 = arith.constant 0 : index
      %14 = vector.load %arg5[%c0_12, %c0_13] : memref<1x512xf32, #tpu.memory_space<vmem>>, vector<1x512xf32>
      %15 = vector.broadcast %14 : vector<1x512xf32> to vector<128x512xf32>
      %16 = arith.addf %13, %15 : vector<128x512xf32>
      %17 = arith.truncf %16 : vector<128x512xf32> to vector<128x512xbf16>
      %c0_14 = arith.constant 0 : index
      %c0_15 = arith.constant 0 : index
      %18 = vector.load %arg6[%c0_14, %c0_15] : memref<128x512xbf16, #tpu.memory_space<vmem>>, vector<128x512xbf16>
      tpu.vector_store %arg6[%c0_14, %c0_15], %17 {strides = array<i32>} : memref<128x512xbf16, #tpu.memory_space<vmem>>, vector<128x512xbf16>,
    } else {
    }
    return
  }
  func.func @transform_0(%arg0: i32, %arg1: i32, %arg2: i32) -> (i32, i32) {
    %c0_i32 = arith.constant 0 : i32
    return %arg0, %arg2 : i32, i32
  }
  func.func @transform_1(%arg0: i32, %arg1: i32, %arg2: i32) -> (i32, i32) {
    %c0_i32 = arith.constant 0 : i32
    return %arg2, %arg1 : i32, i32
  }
  func.func @transform_2(%arg0: i32, %arg1: i32, %arg2: i32) -> (i32, i32) {
    %c0_i32 = arith.constant 0 : i32
    %c0_i32_0 = arith.constant 0 : i32
    return %c0_i32, %arg1 : i32, i32
  }
  func.func @transform_3(%arg0: i32, %arg1: i32, %arg2: i32) -> (i32, i32) {
    %c0_i32 = arith.constant 0 : i32
    return %arg0, %arg1 : i32, i32
  }
}

module attributes {stable_mosaic.version = 11 : i64} {
  func.func @_lstm_rec_kernel(%arg0: i32, %arg1: memref<8x4096xbf16, #tpu.memory_space<vmem>>, %arg2: memref<4x128x128xbf16, #tpu.memory_space<any>>, %arg3: memref<8x1024xbf16, #tpu.memory_space<vmem>>, %arg4: memref<8x128xf32, #tpu.memory_space<vmem>>, %arg5: memref<8x128xf32, #tpu.memory_space<vmem>>, %arg6: memref<4x128x128xbf16, #tpu.memory_space<vmem>>, %arg7: memref<4x!tpu.dma_semaphore, #tpu.memory_space<semaphore_mem>>) attributes {dimension_semantics = [#tpu.dimension_semantics<arbitrary>], iteration_bounds = array<i64: 2>, scalar_prefetch = 0 : i64, scratch_operands = 4 : i64, tpu.core_type = #tpu.core_type<tc>, window_params = [{transform_indices = @transform_0, window_bounds = array<i64: 8, 4096>}, {}, {transform_indices = @transform_2, window_bounds = array<i64: 8, 1024>}]} {
    %c0_i32 = arith.constant 0 : i32
    %0 = arith.cmpi eq, %arg0, %c0_i32 : i32
    %1 = arith.extui %0 : i1 to i32
    %c0_i32_0 = arith.constant 0 : i32
    %2 = arith.cmpi ne, %1, %c0_i32_0 : i32
    scf.if %2 {
      %cst_269 = arith.constant 0.000000e+00 : f32
      %431 = vector.broadcast %cst_269 : f32 to vector<8x128xf32>
      %c0_270 = arith.constant 0 : index
      %c0_271 = arith.constant 0 : index
      %432 = vector.load %arg4[%c0_270, %c0_271] : memref<8x128xf32, #tpu.memory_space<vmem>>, vector<8x128xf32>
      tpu.vector_store %arg4[%c0_270, %c0_271], %431 {strides = array<i32>} : memref<8x128xf32, #tpu.memory_space<vmem>>, vector<8x128xf32>,
      %cst_272 = arith.constant 0.000000e+00 : f32
      %433 = vector.broadcast %cst_272 : f32 to vector<8x128xf32>
      %c0_273 = arith.constant 0 : index
      %c0_274 = arith.constant 0 : index
      %434 = vector.load %arg5[%c0_273, %c0_274] : memref<8x128xf32, #tpu.memory_space<vmem>>, vector<8x128xf32>
      tpu.vector_store %arg5[%c0_273, %c0_274], %433 {strides = array<i32>} : memref<8x128xf32, #tpu.memory_space<vmem>>, vector<8x128xf32>,
      %c0_i32_275 = arith.constant 0 : i32
      %c0_i32_276 = arith.constant 0 : i32
      %c0_i32_277 = arith.constant 0 : i32
      %c0_i32_278 = arith.constant 0 : i32
      %c0_i32_279 = arith.constant 0 : i32
      %435 = tpu.memref_slice %arg2[%c0_i32_275, %c0_i32_278, %c0_i32_279] : memref<4x128x128xbf16, #tpu.memory_space<any>> -> memref<1x128x128xbf16, #tpu.memory_space<any>>
      %436 = tpu.memref_squeeze %435 : memref<1x128x128xbf16, #tpu.memory_space<any>> -> memref<128x128xbf16, #tpu.memory_space<any>>
      %c0_i32_280 = arith.constant 0 : i32
      %c0_i32_281 = arith.constant 0 : i32
      %437 = tpu.memref_slice %arg6[%c0_i32_276, %c0_i32_280, %c0_i32_281] : memref<4x128x128xbf16, #tpu.memory_space<vmem>> -> memref<1x128x128xbf16, #tpu.memory_space<vmem>>
      %438 = tpu.memref_squeeze %437 : memref<1x128x128xbf16, #tpu.memory_space<vmem>> -> memref<128x128xbf16, #tpu.memory_space<vmem>>
      %439 = tpu.memref_slice %arg7[%c0_i32_277] : memref<4x!tpu.dma_semaphore, #tpu.memory_space<semaphore_mem>> -> memref<1x!tpu.dma_semaphore, #tpu.memory_space<semaphore_mem>>
      %440 = tpu.memref_squeeze %439 : memref<1x!tpu.dma_semaphore, #tpu.memory_space<semaphore_mem>> -> memref<!tpu.dma_semaphore, #tpu.memory_space<semaphore_mem>>
      tpu.enqueue_dma source(%436 : memref<128x128xbf16, #tpu.memory_space<any>>) target(%438 : memref<128x128xbf16, #tpu.memory_space<vmem>>) target_semaphore(%440 : memref<!tpu.dma_semaphore, #tpu.memory_space<semaphore_mem>>)
      %c1_i32 = arith.constant 1 : i32
      %c1_i32_282 = arith.constant 1 : i32
      %c1_i32_283 = arith.constant 1 : i32
      %c0_i32_284 = arith.constant 0 : i32
      %c0_i32_285 = arith.constant 0 : i32
      %441 = tpu.memref_slice %arg2[%c1_i32, %c0_i32_284, %c0_i32_285] : memref<4x128x128xbf16, #tpu.memory_space<any>> -> memref<1x128x128xbf16, #tpu.memory_space<any>>
      %442 = tpu.memref_squeeze %441 : memref<1x128x128xbf16, #tpu.memory_space<any>> -> memref<128x128xbf16, #tpu.memory_space<any>>
      %c0_i32_286 = arith.constant 0 : i32
      %c0_i32_287 = arith.constant 0 : i32
      %443 = tpu.memref_slice %arg6[%c1_i32_282, %c0_i32_286, %c0_i32_287] : memref<4x128x128xbf16, #tpu.memory_space<vmem>> -> memref<1x128x128xbf16, #tpu.memory_space<vmem>>
      %444 = tpu.memref_squeeze %443 : memref<1x128x128xbf16, #tpu.memory_space<vmem>> -> memref<128x128xbf16, #tpu.memory_space<vmem>>
      %445 = tpu.memref_slice %arg7[%c1_i32_283] : memref<4x!tpu.dma_semaphore, #tpu.memory_space<semaphore_mem>> -> memref<1x!tpu.dma_semaphore, #tpu.memory_space<semaphore_mem>>
      %446 = tpu.memref_squeeze %445 : memref<1x!tpu.dma_semaphore, #tpu.memory_space<semaphore_mem>> -> memref<!tpu.dma_semaphore, #tpu.memory_space<semaphore_mem>>
      tpu.enqueue_dma source(%442 : memref<128x128xbf16, #tpu.memory_space<any>>) target(%444 : memref<128x128xbf16, #tpu.memory_space<vmem>>) target_semaphore(%446 : memref<!tpu.dma_semaphore, #tpu.memory_space<semaphore_mem>>)
      %c2_i32 = arith.constant 2 : i32
      %c2_i32_288 = arith.constant 2 : i32
      %c2_i32_289 = arith.constant 2 : i32
      %c0_i32_290 = arith.constant 0 : i32
      %c0_i32_291 = arith.constant 0 : i32
      %447 = tpu.memref_slice %arg2[%c2_i32, %c0_i32_290, %c0_i32_291] : memref<4x128x128xbf16, #tpu.memory_space<any>> -> memref<1x128x128xbf16, #tpu.memory_space<any>>
      %448 = tpu.memref_squeeze %447 : memref<1x128x128xbf16, #tpu.memory_space<any>> -> memref<128x128xbf16, #tpu.memory_space<any>>
      %c0_i32_292 = arith.constant 0 : i32
      %c0_i32_293 = arith.constant 0 : i32
      %449 = tpu.memref_slice %arg6[%c2_i32_288, %c0_i32_292, %c0_i32_293] : memref<4x128x128xbf16, #tpu.memory_space<vmem>> -> memref<1x128x128xbf16, #tpu.memory_space<vmem>>
      %450 = tpu.memref_squeeze %449 : memref<1x128x128xbf16, #tpu.memory_space<vmem>> -> memref<128x128xbf16, #tpu.memory_space<vmem>>
      %451 = tpu.memref_slice %arg7[%c2_i32_289] : memref<4x!tpu.dma_semaphore, #tpu.memory_space<semaphore_mem>> -> memref<1x!tpu.dma_semaphore, #tpu.memory_space<semaphore_mem>>
      %452 = tpu.memref_squeeze %451 : memref<1x!tpu.dma_semaphore, #tpu.memory_space<semaphore_mem>> -> memref<!tpu.dma_semaphore, #tpu.memory_space<semaphore_mem>>
      tpu.enqueue_dma source(%448 : memref<128x128xbf16, #tpu.memory_space<any>>) target(%450 : memref<128x128xbf16, #tpu.memory_space<vmem>>) target_semaphore(%452 : memref<!tpu.dma_semaphore, #tpu.memory_space<semaphore_mem>>)
      %c3_i32 = arith.constant 3 : i32
      %c3_i32_294 = arith.constant 3 : i32
      %c3_i32_295 = arith.constant 3 : i32
      %c0_i32_296 = arith.constant 0 : i32
      %c0_i32_297 = arith.constant 0 : i32
      %453 = tpu.memref_slice %arg2[%c3_i32, %c0_i32_296, %c0_i32_297] : memref<4x128x128xbf16, #tpu.memory_space<any>> -> memref<1x128x128xbf16, #tpu.memory_space<any>>
      %454 = tpu.memref_squeeze %453 : memref<1x128x128xbf16, #tpu.memory_space<any>> -> memref<128x128xbf16, #tpu.memory_space<any>>
      %c0_i32_298 = arith.constant 0 : i32
      %c0_i32_299 = arith.constant 0 : i32
      %455 = tpu.memref_slice %arg6[%c3_i32_294, %c0_i32_298, %c0_i32_299] : memref<4x128x128xbf16, #tpu.memory_space<vmem>> -> memref<1x128x128xbf16, #tpu.memory_space<vmem>>
      %456 = tpu.memref_squeeze %455 : memref<1x128x128xbf16, #tpu.memory_space<vmem>> -> memref<128x128xbf16, #tpu.memory_space<vmem>>
      %457 = tpu.memref_slice %arg7[%c3_i32_295] : memref<4x!tpu.dma_semaphore, #tpu.memory_space<semaphore_mem>> -> memref<1x!tpu.dma_semaphore, #tpu.memory_space<semaphore_mem>>
      %458 = tpu.memref_squeeze %457 : memref<1x!tpu.dma_semaphore, #tpu.memory_space<semaphore_mem>> -> memref<!tpu.dma_semaphore, #tpu.memory_space<semaphore_mem>>
      tpu.enqueue_dma source(%454 : memref<128x128xbf16, #tpu.memory_space<any>>) target(%456 : memref<128x128xbf16, #tpu.memory_space<vmem>>) target_semaphore(%458 : memref<!tpu.dma_semaphore, #tpu.memory_space<semaphore_mem>>)
    } else {
    }
    %c0 = arith.constant 0 : index
    %c0_1 = arith.constant 0 : index
    %3 = vector.load %arg4[%c0, %c0_1] : memref<8x128xf32, #tpu.memory_space<vmem>>, vector<8x128xf32>
    %4 = arith.truncf %3 : vector<8x128xf32> to vector<8x128xbf16>
    %c0_2 = arith.constant 0 : index
    %c0_3 = arith.constant 0 : index
    %5 = vector.load %arg5[%c0_2, %c0_3] : memref<8x128xf32, #tpu.memory_space<vmem>>, vector<8x128xf32>
    %c0_i32_4 = arith.constant 0 : i32
    %6 = arith.cmpi eq, %arg0, %c0_i32_4 : i32
    %7 = arith.extui %6 : i1 to i32
    %c0_i32_5 = arith.constant 0 : i32
    %8 = arith.cmpi ne, %7, %c0_i32_5 : i32
    scf.if %8 {
      %c0_i32_269 = arith.constant 0 : i32
      %c0_i32_270 = arith.constant 0 : i32
      %c0_i32_271 = arith.constant 0 : i32
      %c0_i32_272 = arith.constant 0 : i32
      %c0_i32_273 = arith.constant 0 : i32
      %431 = tpu.memref_slice %arg2[%c0_i32_269, %c0_i32_272, %c0_i32_273] : memref<4x128x128xbf16, #tpu.memory_space<any>> -> memref<1x128x128xbf16, #tpu.memory_space<any>>
      %432 = tpu.memref_squeeze %431 : memref<1x128x128xbf16, #tpu.memory_space<any>> -> memref<128x128xbf16, #tpu.memory_space<any>>
      %c0_i32_274 = arith.constant 0 : i32
      %c0_i32_275 = arith.constant 0 : i32
      %433 = tpu.memref_slice %arg6[%c0_i32_270, %c0_i32_274, %c0_i32_275] : memref<4x128x128xbf16, #tpu.memory_space<vmem>> -> memref<1x128x128xbf16, #tpu.memory_space<vmem>>
      %434 = tpu.memref_squeeze %433 : memref<1x128x128xbf16, #tpu.memory_space<vmem>> -> memref<128x128xbf16, #tpu.memory_space<vmem>>
      %435 = tpu.memref_slice %arg7[%c0_i32_271] : memref<4x!tpu.dma_semaphore, #tpu.memory_space<semaphore_mem>> -> memref<1x!tpu.dma_semaphore, #tpu.memory_space<semaphore_mem>>
      %436 = tpu.memref_squeeze %435 : memref<1x!tpu.dma_semaphore, #tpu.memory_space<semaphore_mem>> -> memref<!tpu.dma_semaphore, #tpu.memory_space<semaphore_mem>>
      tpu.wait_dma2 semaphore(%436 : memref<!tpu.dma_semaphore, #tpu.memory_space<semaphore_mem>>) src(%432 : memref<128x128xbf16, #tpu.memory_space<any>>) dst(%434 : memref<128x128xbf16, #tpu.memory_space<vmem>>)
    } else {
    }
    %c0_6 = arith.constant 0 : index
    %c0_7 = arith.constant 0 : index
    %9 = vector.load %arg1[%c0_6, %c0_7] : memref<8x4096xbf16, #tpu.memory_space<vmem>>, vector<8x128xbf16>
    %10 = arith.extf %9 : vector<8x128xbf16> to vector<8x128xf32>
    %c0_8 = arith.constant 0 : index
    %c0_9 = arith.constant 0 : index
    %c0_10 = arith.constant 0 : index
    %11 = vector.load %arg6[%c0_8, %c0_9, %c0_10] : memref<4x128x128xbf16, #tpu.memory_space<vmem>>, vector<1x128x128xbf16>
    %12 = vector.shape_cast %11 : vector<1x128x128xbf16> to vector<128x128xbf16>
    %cst = arith.constant dense<0.000000e+00> : vector<8x128xf32>
    %13 = tpu.matmul %4, %12, %cst {dimension_numbers = #tpu.dot_dimension_numbers<[1], [0], [0], [1], [0, 0, 1, 1], [], []>} : vector<8x128xbf16>, vector<128x128xbf16>, vector<8x128xf32> -> vector<8x128xf32>
    %14 = arith.addf %10, %13 : vector<8x128xf32>
    %15 = arith.negf %14 : vector<8x128xf32>
    %16 = math.exp %15 : vector<8x128xf32>
    %cst_11 = arith.constant 1.000000e+00 : f32
    %17 = vector.broadcast %cst_11 : f32 to vector<8x128xf32>
    %18 = arith.addf %17, %16 : vector<8x128xf32>
    %19 = arith.divf %17, %18 : vector<8x128xf32>
    %c0_i32_12 = arith.constant 0 : i32
    %20 = arith.cmpi eq, %arg0, %c0_i32_12 : i32
    %21 = arith.extui %20 : i1 to i32
    %c0_i32_13 = arith.constant 0 : i32
    %22 = arith.cmpi ne, %21, %c0_i32_13 : i32
    scf.if %22 {
      %c1_i32 = arith.constant 1 : i32
      %c1_i32_269 = arith.constant 1 : i32
      %c1_i32_270 = arith.constant 1 : i32
      %c0_i32_271 = arith.constant 0 : i32
      %c0_i32_272 = arith.constant 0 : i32
      %431 = tpu.memref_slice %arg2[%c1_i32, %c0_i32_271, %c0_i32_272] : memref<4x128x128xbf16, #tpu.memory_space<any>> -> memref<1x128x128xbf16, #tpu.memory_space<any>>
      %432 = tpu.memref_squeeze %431 : memref<1x128x128xbf16, #tpu.memory_space<any>> -> memref<128x128xbf16, #tpu.memory_space<any>>
      %c0_i32_273 = arith.constant 0 : i32
      %c0_i32_274 = arith.constant 0 : i32
      %433 = tpu.memref_slice %arg6[%c1_i32_269, %c0_i32_273, %c0_i32_274] : memref<4x128x128xbf16, #tpu.memory_space<vmem>> -> memref<1x128x128xbf16, #tpu.memory_space<vmem>>
      %434 = tpu.memref_squeeze %433 : memref<1x128x128xbf16, #tpu.memory_space<vmem>> -> memref<128x128xbf16, #tpu.memory_space<vmem>>
      %435 = tpu.memref_slice %arg7[%c1_i32_270] : memref<4x!tpu.dma_semaphore, #tpu.memory_space<semaphore_mem>> -> memref<1x!tpu.dma_semaphore, #tpu.memory_space<semaphore_mem>>
      %436 = tpu.memref_squeeze %435 : memref<1x!tpu.dma_semaphore, #tpu.memory_space<semaphore_mem>> -> memref<!tpu.dma_semaphore, #tpu.memory_space<semaphore_mem>>
      tpu.wait_dma2 semaphore(%436 : memref<!tpu.dma_semaphore, #tpu.memory_space<semaphore_mem>>) src(%432 : memref<128x128xbf16, #tpu.memory_space<any>>) dst(%434 : memref<128x128xbf16, #tpu.memory_space<vmem>>)
    } else {
    }
    %c0_14 = arith.constant 0 : index
    %c128 = arith.constant 128 : index
    %23 = vector.load %arg1[%c0_14, %c128] : memref<8x4096xbf16, #tpu.memory_space<vmem>>, vector<8x128xbf16>
    %24 = arith.extf %23 : vector<8x128xbf16> to vector<8x128xf32>
    %c1 = arith.constant 1 : index
    %c0_15 = arith.constant 0 : index
    %c0_16 = arith.constant 0 : index
    %25 = vector.load %arg6[%c1, %c0_15, %c0_16] : memref<4x128x128xbf16, #tpu.memory_space<vmem>>, vector<1x128x128xbf16>
    %26 = vector.shape_cast %25 : vector<1x128x128xbf16> to vector<128x128xbf16>
    %cst_17 = arith.constant dense<0.000000e+00> : vector<8x128xf32>
    %27 = tpu.matmul %4, %26, %cst_17 {dimension_numbers = #tpu.dot_dimension_numbers<[1], [0], [0], [1], [0, 0, 1, 1], [], []>} : vector<8x128xbf16>, vector<128x128xbf16>, vector<8x128xf32> -> vector<8x128xf32>
    %28 = arith.addf %24, %27 : vector<8x128xf32>
    %29 = arith.negf %28 : vector<8x128xf32>
    %30 = math.exp %29 : vector<8x128xf32>
    %cst_18 = arith.constant 1.000000e+00 : f32
    %31 = vector.broadcast %cst_18 : f32 to vector<8x128xf32>
    %32 = arith.addf %31, %30 : vector<8x128xf32>
    %33 = arith.divf %31, %32 : vector<8x128xf32>
    %c0_i32_19 = arith.constant 0 : i32
    %34 = arith.cmpi eq, %arg0, %c0_i32_19 : i32
    %35 = arith.extui %34 : i1 to i32
    %c0_i32_20 = arith.constant 0 : i32
    %36 = arith.cmpi ne, %35, %c0_i32_20 : i32
    scf.if %36 {
      %c2_i32 = arith.constant 2 : i32
      %c2_i32_269 = arith.constant 2 : i32
      %c2_i32_270 = arith.constant 2 : i32
      %c0_i32_271 = arith.constant 0 : i32
      %c0_i32_272 = arith.constant 0 : i32
      %431 = tpu.memref_slice %arg2[%c2_i32, %c0_i32_271, %c0_i32_272] : memref<4x128x128xbf16, #tpu.memory_space<any>> -> memref<1x128x128xbf16, #tpu.memory_space<any>>
      %432 = tpu.memref_squeeze %431 : memref<1x128x128xbf16, #tpu.memory_space<any>> -> memref<128x128xbf16, #tpu.memory_space<any>>
      %c0_i32_273 = arith.constant 0 : i32
      %c0_i32_274 = arith.constant 0 : i32
      %433 = tpu.memref_slice %arg6[%c2_i32_269, %c0_i32_273, %c0_i32_274] : memref<4x128x128xbf16, #tpu.memory_space<vmem>> -> memref<1x128x128xbf16, #tpu.memory_space<vmem>>
      %434 = tpu.memref_squeeze %433 : memref<1x128x128xbf16, #tpu.memory_space<vmem>> -> memref<128x128xbf16, #tpu.memory_space<vmem>>
      %435 = tpu.memref_slice %arg7[%c2_i32_270] : memref<4x!tpu.dma_semaphore, #tpu.memory_space<semaphore_mem>> -> memref<1x!tpu.dma_semaphore, #tpu.memory_space<semaphore_mem>>
      %436 = tpu.memref_squeeze %435 : memref<1x!tpu.dma_semaphore, #tpu.memory_space<semaphore_mem>> -> memref<!tpu.dma_semaphore, #tpu.memory_space<semaphore_mem>>
      tpu.wait_dma2 semaphore(%436 : memref<!tpu.dma_semaphore, #tpu.memory_space<semaphore_mem>>) src(%432 : memref<128x128xbf16, #tpu.memory_space<any>>) dst(%434 : memref<128x128xbf16, #tpu.memory_space<vmem>>)
    } else {
    }
    %c0_21 = arith.constant 0 : index
    %c256 = arith.constant 256 : index
    %37 = vector.load %arg1[%c0_21, %c256] : memref<8x4096xbf16, #tpu.memory_space<vmem>>, vector<8x128xbf16>
    %38 = arith.extf %37 : vector<8x128xbf16> to vector<8x128xf32>
    %c2 = arith.constant 2 : index
    %c0_22 = arith.constant 0 : index
    %c0_23 = arith.constant 0 : index
    %39 = vector.load %arg6[%c2, %c0_22, %c0_23] : memref<4x128x128xbf16, #tpu.memory_space<vmem>>, vector<1x128x128xbf16>
    %40 = vector.shape_cast %39 : vector<1x128x128xbf16> to vector<128x128xbf16>
    %cst_24 = arith.constant dense<0.000000e+00> : vector<8x128xf32>
    %41 = tpu.matmul %4, %40, %cst_24 {dimension_numbers = #tpu.dot_dimension_numbers<[1], [0], [0], [1], [0, 0, 1, 1], [], []>} : vector<8x128xbf16>, vector<128x128xbf16>, vector<8x128xf32> -> vector<8x128xf32>
    %42 = arith.addf %38, %41 : vector<8x128xf32>
    %43 = math.tanh %42 : vector<8x128xf32>
    %c0_i32_25 = arith.constant 0 : i32
    %44 = arith.cmpi eq, %arg0, %c0_i32_25 : i32
    %45 = arith.extui %44 : i1 to i32
    %c0_i32_26 = arith.constant 0 : i32
    %46 = arith.cmpi ne, %45, %c0_i32_26 : i32
    scf.if %46 {
      %c3_i32 = arith.constant 3 : i32
      %c3_i32_269 = arith.constant 3 : i32
      %c3_i32_270 = arith.constant 3 : i32
      %c0_i32_271 = arith.constant 0 : i32
      %c0_i32_272 = arith.constant 0 : i32
      %431 = tpu.memref_slice %arg2[%c3_i32, %c0_i32_271, %c0_i32_272] : memref<4x128x128xbf16, #tpu.memory_space<any>> -> memref<1x128x128xbf16, #tpu.memory_space<any>>
      %432 = tpu.memref_squeeze %431 : memref<1x128x128xbf16, #tpu.memory_space<any>> -> memref<128x128xbf16, #tpu.memory_space<any>>
      %c0_i32_273 = arith.constant 0 : i32
      %c0_i32_274 = arith.constant 0 : i32
      %433 = tpu.memref_slice %arg6[%c3_i32_269, %c0_i32_273, %c0_i32_274] : memref<4x128x128xbf16, #tpu.memory_space<vmem>> -> memref<1x128x128xbf16, #tpu.memory_space<vmem>>
      %434 = tpu.memref_squeeze %433 : memref<1x128x128xbf16, #tpu.memory_space<vmem>> -> memref<128x128xbf16, #tpu.memory_space<vmem>>
      %435 = tpu.memref_slice %arg7[%c3_i32_270] : memref<4x!tpu.dma_semaphore, #tpu.memory_space<semaphore_mem>> -> memref<1x!tpu.dma_semaphore, #tpu.memory_space<semaphore_mem>>
      %436 = tpu.memref_squeeze %435 : memref<1x!tpu.dma_semaphore, #tpu.memory_space<semaphore_mem>> -> memref<!tpu.dma_semaphore, #tpu.memory_space<semaphore_mem>>
      tpu.wait_dma2 semaphore(%436 : memref<!tpu.dma_semaphore, #tpu.memory_space<semaphore_mem>>) src(%432 : memref<128x128xbf16, #tpu.memory_space<any>>) dst(%434 : memref<128x128xbf16, #tpu.memory_space<vmem>>)
    } else {
    }
    %c0_27 = arith.constant 0 : index
    %c384 = arith.constant 384 : index
    %47 = vector.load %arg1[%c0_27, %c384] : memref<8x4096xbf16, #tpu.memory_space<vmem>>, vector<8x128xbf16>
    %48 = arith.extf %47 : vector<8x128xbf16> to vector<8x128xf32>
    %c3 = arith.constant 3 : index
    %c0_28 = arith.constant 0 : index
    %c0_29 = arith.constant 0 : index
    %49 = vector.load %arg6[%c3, %c0_28, %c0_29] : memref<4x128x128xbf16, #tpu.memory_space<vmem>>, vector<1x128x128xbf16>
    %50 = vector.shape_cast %49 : vector<1x128x128xbf16> to vector<128x128xbf16>
    %cst_30 = arith.constant dense<0.000000e+00> : vector<8x128xf32>
    %51 = tpu.matmul %4, %50, %cst_30 {dimension_numbers = #tpu.dot_dimension_numbers<[1], [0], [0], [1], [0, 0, 1, 1], [], []>} : vector<8x128xbf16>, vector<128x128xbf16>, vector<8x128xf32> -> vector<8x128xf32>
    %52 = arith.addf %48, %51 : vector<8x128xf32>
    %53 = arith.negf %52 : vector<8x128xf32>
    %54 = math.exp %53 : vector<8x128xf32>
    %cst_31 = arith.constant 1.000000e+00 : f32
    %55 = vector.broadcast %cst_31 : f32 to vector<8x128xf32>
    %56 = arith.addf %55, %54 : vector<8x128xf32>
    %57 = arith.divf %55, %56 : vector<8x128xf32>
    %58 = arith.mulf %33, %5 : vector<8x128xf32>
    %59 = arith.mulf %19, %43 : vector<8x128xf32>
    %60 = arith.addf %58, %59 : vector<8x128xf32>
    %61 = math.tanh %60 : vector<8x128xf32>
    %62 = arith.mulf %57, %61 : vector<8x128xf32>
    %c0_32 = arith.constant 0 : index
    %c0_33 = arith.constant 0 : index
    %63 = vector.load %arg5[%c0_32, %c0_33] : memref<8x128xf32, #tpu.memory_space<vmem>>, vector<8x128xf32>
    tpu.vector_store %arg5[%c0_32, %c0_33], %60 {strides = array<i32>} : memref<8x128xf32, #tpu.memory_space<vmem>>, vector<8x128xf32>,
    %c0_34 = arith.constant 0 : index
    %c0_35 = arith.constant 0 : index
    %64 = vector.load %arg4[%c0_34, %c0_35] : memref<8x128xf32, #tpu.memory_space<vmem>>, vector<8x128xf32>
    tpu.vector_store %arg4[%c0_34, %c0_35], %62 {strides = array<i32>} : memref<8x128xf32, #tpu.memory_space<vmem>>, vector<8x128xf32>,
    %65 = arith.truncf %62 : vector<8x128xf32> to vector<8x128xbf16>
    %c0_36 = arith.constant 0 : index
    %c0_37 = arith.constant 0 : index
    %66 = vector.load %arg3[%c0_36, %c0_37] : memref<8x1024xbf16, #tpu.memory_space<vmem>>, vector<8x128xbf16>
    tpu.vector_store %arg3[%c0_36, %c0_37], %65 {strides = array<i32>} : memref<8x1024xbf16, #tpu.memory_space<vmem>>, vector<8x128xbf16>,
    %c0_38 = arith.constant 0 : index
    %c0_39 = arith.constant 0 : index
    %67 = vector.load %arg4[%c0_38, %c0_39] : memref<8x128xf32, #tpu.memory_space<vmem>>, vector<8x128xf32>
    %68 = arith.truncf %67 : vector<8x128xf32> to vector<8x128xbf16>
    %c0_40 = arith.constant 0 : index
    %c0_41 = arith.constant 0 : index
    %69 = vector.load %arg5[%c0_40, %c0_41] : memref<8x128xf32, #tpu.memory_space<vmem>>, vector<8x128xf32>
    %c0_42 = arith.constant 0 : index
    %c512 = arith.constant 512 : index
    %70 = vector.load %arg1[%c0_42, %c512] : memref<8x4096xbf16, #tpu.memory_space<vmem>>, vector<8x128xbf16>
    %71 = arith.extf %70 : vector<8x128xbf16> to vector<8x128xf32>
    %c0_43 = arith.constant 0 : index
    %c0_44 = arith.constant 0 : index
    %c0_45 = arith.constant 0 : index
    %72 = vector.load %arg6[%c0_43, %c0_44, %c0_45] : memref<4x128x128xbf16, #tpu.memory_space<vmem>>, vector<1x128x128xbf16>
    %73 = vector.shape_cast %72 : vector<1x128x128xbf16> to vector<128x128xbf16>
    %cst_46 = arith.constant dense<0.000000e+00> : vector<8x128xf32>
    %74 = tpu.matmul %68, %73, %cst_46 {dimension_numbers = #tpu.dot_dimension_numbers<[1], [0], [0], [1], [0, 0, 1, 1], [], []>} : vector<8x128xbf16>, vector<128x128xbf16>, vector<8x128xf32> -> vector<8x128xf32>
    %75 = arith.addf %71, %74 : vector<8x128xf32>
    %76 = arith.negf %75 : vector<8x128xf32>
    %77 = math.exp %76 : vector<8x128xf32>
    %cst_47 = arith.constant 1.000000e+00 : f32
    %78 = vector.broadcast %cst_47 : f32 to vector<8x128xf32>
    %79 = arith.addf %78, %77 : vector<8x128xf32>
    %80 = arith.divf %78, %79 : vector<8x128xf32>
    %c0_48 = arith.constant 0 : index
    %c640 = arith.constant 640 : index
    %81 = vector.load %arg1[%c0_48, %c640] : memref<8x4096xbf16, #tpu.memory_space<vmem>>, vector<8x128xbf16>
    %82 = arith.extf %81 : vector<8x128xbf16> to vector<8x128xf32>
    %c1_49 = arith.constant 1 : index
    %c0_50 = arith.constant 0 : index
    %c0_51 = arith.constant 0 : index
    %83 = vector.load %arg6[%c1_49, %c0_50, %c0_51] : memref<4x128x128xbf16, #tpu.memory_space<vmem>>, vector<1x128x128xbf16>
    %84 = vector.shape_cast %83 : vector<1x128x128xbf16> to vector<128x128xbf16>
    %cst_52 = arith.constant dense<0.000000e+00> : vector<8x128xf32>
    %85 = tpu.matmul %68, %84, %cst_52 {dimension_numbers = #tpu.dot_dimension_numbers<[1], [0], [0], [1], [0, 0, 1, 1], [], []>} : vector<8x128xbf16>, vector<128x128xbf16>, vector<8x128xf32> -> vector<8x128xf32>
    %86 = arith.addf %82, %85 : vector<8x128xf32>
    %87 = arith.negf %86 : vector<8x128xf32>
    %88 = math.exp %87 : vector<8x128xf32>
    %cst_53 = arith.constant 1.000000e+00 : f32
    %89 = vector.broadcast %cst_53 : f32 to vector<8x128xf32>
    %90 = arith.addf %89, %88 : vector<8x128xf32>
    %91 = arith.divf %89, %90 : vector<8x128xf32>
    %c0_54 = arith.constant 0 : index
    %c768 = arith.constant 768 : index
    %92 = vector.load %arg1[%c0_54, %c768] : memref<8x4096xbf16, #tpu.memory_space<vmem>>, vector<8x128xbf16>
    %93 = arith.extf %92 : vector<8x128xbf16> to vector<8x128xf32>
    %c2_55 = arith.constant 2 : index
    %c0_56 = arith.constant 0 : index
    %c0_57 = arith.constant 0 : index
    %94 = vector.load %arg6[%c2_55, %c0_56, %c0_57] : memref<4x128x128xbf16, #tpu.memory_space<vmem>>, vector<1x128x128xbf16>
    %95 = vector.shape_cast %94 : vector<1x128x128xbf16> to vector<128x128xbf16>
    %cst_58 = arith.constant dense<0.000000e+00> : vector<8x128xf32>
    %96 = tpu.matmul %68, %95, %cst_58 {dimension_numbers = #tpu.dot_dimension_numbers<[1], [0], [0], [1], [0, 0, 1, 1], [], []>} : vector<8x128xbf16>, vector<128x128xbf16>, vector<8x128xf32> -> vector<8x128xf32>
    %97 = arith.addf %93, %96 : vector<8x128xf32>
    %98 = math.tanh %97 : vector<8x128xf32>
    %c0_59 = arith.constant 0 : index
    %c896 = arith.constant 896 : index
    %99 = vector.load %arg1[%c0_59, %c896] : memref<8x4096xbf16, #tpu.memory_space<vmem>>, vector<8x128xbf16>
    %100 = arith.extf %99 : vector<8x128xbf16> to vector<8x128xf32>
    %c3_60 = arith.constant 3 : index
    %c0_61 = arith.constant 0 : index
    %c0_62 = arith.constant 0 : index
    %101 = vector.load %arg6[%c3_60, %c0_61, %c0_62] : memref<4x128x128xbf16, #tpu.memory_space<vmem>>, vector<1x128x128xbf16>
    %102 = vector.shape_cast %101 : vector<1x128x128xbf16> to vector<128x128xbf16>
    %cst_63 = arith.constant dense<0.000000e+00> : vector<8x128xf32>
    %103 = tpu.matmul %68, %102, %cst_63 {dimension_numbers = #tpu.dot_dimension_numbers<[1], [0], [0], [1], [0, 0, 1, 1], [], []>} : vector<8x128xbf16>, vector<128x128xbf16>, vector<8x128xf32> -> vector<8x128xf32>
    %104 = arith.addf %100, %103 : vector<8x128xf32>
    %105 = arith.negf %104 : vector<8x128xf32>
    %106 = math.exp %105 : vector<8x128xf32>
    %cst_64 = arith.constant 1.000000e+00 : f32
    %107 = vector.broadcast %cst_64 : f32 to vector<8x128xf32>
    %108 = arith.addf %107, %106 : vector<8x128xf32>
    %109 = arith.divf %107, %108 : vector<8x128xf32>
    %110 = arith.mulf %91, %69 : vector<8x128xf32>
    %111 = arith.mulf %80, %98 : vector<8x128xf32>
    %112 = arith.addf %110, %111 : vector<8x128xf32>
    %113 = math.tanh %112 : vector<8x128xf32>
    %114 = arith.mulf %109, %113 : vector<8x128xf32>
    %c0_65 = arith.constant 0 : index
    %c0_66 = arith.constant 0 : index
    %115 = vector.load %arg5[%c0_65, %c0_66] : memref<8x128xf32, #tpu.memory_space<vmem>>, vector<8x128xf32>
    tpu.vector_store %arg5[%c0_65, %c0_66], %112 {strides = array<i32>} : memref<8x128xf32, #tpu.memory_space<vmem>>, vector<8x128xf32>,
    %c0_67 = arith.constant 0 : index
    %c0_68 = arith.constant 0 : index
    %116 = vector.load %arg4[%c0_67, %c0_68] : memref<8x128xf32, #tpu.memory_space<vmem>>, vector<8x128xf32>
    tpu.vector_store %arg4[%c0_67, %c0_68], %114 {strides = array<i32>} : memref<8x128xf32, #tpu.memory_space<vmem>>, vector<8x128xf32>,
    %117 = arith.truncf %114 : vector<8x128xf32> to vector<8x128xbf16>
    %c0_69 = arith.constant 0 : index
    %c128_70 = arith.constant 128 : index
    %118 = vector.load %arg3[%c0_69, %c128_70] : memref<8x1024xbf16, #tpu.memory_space<vmem>>, vector<8x128xbf16>
    tpu.vector_store %arg3[%c0_69, %c128_70], %117 {strides = array<i32>} : memref<8x1024xbf16, #tpu.memory_space<vmem>>, vector<8x128xbf16>,
    %c0_71 = arith.constant 0 : index
    %c0_72 = arith.constant 0 : index
    %119 = vector.load %arg4[%c0_71, %c0_72] : memref<8x128xf32, #tpu.memory_space<vmem>>, vector<8x128xf32>
    %120 = arith.truncf %119 : vector<8x128xf32> to vector<8x128xbf16>
    %c0_73 = arith.constant 0 : index
    %c0_74 = arith.constant 0 : index
    %121 = vector.load %arg5[%c0_73, %c0_74] : memref<8x128xf32, #tpu.memory_space<vmem>>, vector<8x128xf32>
    %c0_75 = arith.constant 0 : index
    %c1024 = arith.constant 1024 : index
    %122 = vector.load %arg1[%c0_75, %c1024] : memref<8x4096xbf16, #tpu.memory_space<vmem>>, vector<8x128xbf16>
    %123 = arith.extf %122 : vector<8x128xbf16> to vector<8x128xf32>
    %c0_76 = arith.constant 0 : index
    %c0_77 = arith.constant 0 : index
    %c0_78 = arith.constant 0 : index
    %124 = vector.load %arg6[%c0_76, %c0_77, %c0_78] : memref<4x128x128xbf16, #tpu.memory_space<vmem>>, vector<1x128x128xbf16>
    %125 = vector.shape_cast %124 : vector<1x128x128xbf16> to vector<128x128xbf16>
    %cst_79 = arith.constant dense<0.000000e+00> : vector<8x128xf32>
    %126 = tpu.matmul %120, %125, %cst_79 {dimension_numbers = #tpu.dot_dimension_numbers<[1], [0], [0], [1], [0, 0, 1, 1], [], []>} : vector<8x128xbf16>, vector<128x128xbf16>, vector<8x128xf32> -> vector<8x128xf32>
    %127 = arith.addf %123, %126 : vector<8x128xf32>
    %128 = arith.negf %127 : vector<8x128xf32>
    %129 = math.exp %128 : vector<8x128xf32>
    %cst_80 = arith.constant 1.000000e+00 : f32
    %130 = vector.broadcast %cst_80 : f32 to vector<8x128xf32>
    %131 = arith.addf %130, %129 : vector<8x128xf32>
    %132 = arith.divf %130, %131 : vector<8x128xf32>
    %c0_81 = arith.constant 0 : index
    %c1152 = arith.constant 1152 : index
    %133 = vector.load %arg1[%c0_81, %c1152] : memref<8x4096xbf16, #tpu.memory_space<vmem>>, vector<8x128xbf16>
    %134 = arith.extf %133 : vector<8x128xbf16> to vector<8x128xf32>
    %c1_82 = arith.constant 1 : index
    %c0_83 = arith.constant 0 : index
    %c0_84 = arith.constant 0 : index
    %135 = vector.load %arg6[%c1_82, %c0_83, %c0_84] : memref<4x128x128xbf16, #tpu.memory_space<vmem>>, vector<1x128x128xbf16>
    %136 = vector.shape_cast %135 : vector<1x128x128xbf16> to vector<128x128xbf16>
    %cst_85 = arith.constant dense<0.000000e+00> : vector<8x128xf32>
    %137 = tpu.matmul %120, %136, %cst_85 {dimension_numbers = #tpu.dot_dimension_numbers<[1], [0], [0], [1], [0, 0, 1, 1], [], []>} : vector<8x128xbf16>, vector<128x128xbf16>, vector<8x128xf32> -> vector<8x128xf32>
    %138 = arith.addf %134, %137 : vector<8x128xf32>
    %139 = arith.negf %138 : vector<8x128xf32>
    %140 = math.exp %139 : vector<8x128xf32>
    %cst_86 = arith.constant 1.000000e+00 : f32
    %141 = vector.broadcast %cst_86 : f32 to vector<8x128xf32>
    %142 = arith.addf %141, %140 : vector<8x128xf32>
    %143 = arith.divf %141, %142 : vector<8x128xf32>
    %c0_87 = arith.constant 0 : index
    %c1280 = arith.constant 1280 : index
    %144 = vector.load %arg1[%c0_87, %c1280] : memref<8x4096xbf16, #tpu.memory_space<vmem>>, vector<8x128xbf16>
    %145 = arith.extf %144 : vector<8x128xbf16> to vector<8x128xf32>
    %c2_88 = arith.constant 2 : index
    %c0_89 = arith.constant 0 : index
    %c0_90 = arith.constant 0 : index
    %146 = vector.load %arg6[%c2_88, %c0_89, %c0_90] : memref<4x128x128xbf16, #tpu.memory_space<vmem>>, vector<1x128x128xbf16>
    %147 = vector.shape_cast %146 : vector<1x128x128xbf16> to vector<128x128xbf16>
    %cst_91 = arith.constant dense<0.000000e+00> : vector<8x128xf32>
    %148 = tpu.matmul %120, %147, %cst_91 {dimension_numbers = #tpu.dot_dimension_numbers<[1], [0], [0], [1], [0, 0, 1, 1], [], []>} : vector<8x128xbf16>, vector<128x128xbf16>, vector<8x128xf32> -> vector<8x128xf32>
    %149 = arith.addf %145, %148 : vector<8x128xf32>
    %150 = math.tanh %149 : vector<8x128xf32>
    %c0_92 = arith.constant 0 : index
    %c1408 = arith.constant 1408 : index
    %151 = vector.load %arg1[%c0_92, %c1408] : memref<8x4096xbf16, #tpu.memory_space<vmem>>, vector<8x128xbf16>
    %152 = arith.extf %151 : vector<8x128xbf16> to vector<8x128xf32>
    %c3_93 = arith.constant 3 : index
    %c0_94 = arith.constant 0 : index
    %c0_95 = arith.constant 0 : index
    %153 = vector.load %arg6[%c3_93, %c0_94, %c0_95] : memref<4x128x128xbf16, #tpu.memory_space<vmem>>, vector<1x128x128xbf16>
    %154 = vector.shape_cast %153 : vector<1x128x128xbf16> to vector<128x128xbf16>
    %cst_96 = arith.constant dense<0.000000e+00> : vector<8x128xf32>
    %155 = tpu.matmul %120, %154, %cst_96 {dimension_numbers = #tpu.dot_dimension_numbers<[1], [0], [0], [1], [0, 0, 1, 1], [], []>} : vector<8x128xbf16>, vector<128x128xbf16>, vector<8x128xf32> -> vector<8x128xf32>
    %156 = arith.addf %152, %155 : vector<8x128xf32>
    %157 = arith.negf %156 : vector<8x128xf32>
    %158 = math.exp %157 : vector<8x128xf32>
    %cst_97 = arith.constant 1.000000e+00 : f32
    %159 = vector.broadcast %cst_97 : f32 to vector<8x128xf32>
    %160 = arith.addf %159, %158 : vector<8x128xf32>
    %161 = arith.divf %159, %160 : vector<8x128xf32>
    %162 = arith.mulf %143, %121 : vector<8x128xf32>
    %163 = arith.mulf %132, %150 : vector<8x128xf32>
    %164 = arith.addf %162, %163 : vector<8x128xf32>
    %165 = math.tanh %164 : vector<8x128xf32>
    %166 = arith.mulf %161, %165 : vector<8x128xf32>
    %c0_98 = arith.constant 0 : index
    %c0_99 = arith.constant 0 : index
    %167 = vector.load %arg5[%c0_98, %c0_99] : memref<8x128xf32, #tpu.memory_space<vmem>>, vector<8x128xf32>
    tpu.vector_store %arg5[%c0_98, %c0_99], %164 {strides = array<i32>} : memref<8x128xf32, #tpu.memory_space<vmem>>, vector<8x128xf32>,
    %c0_100 = arith.constant 0 : index
    %c0_101 = arith.constant 0 : index
    %168 = vector.load %arg4[%c0_100, %c0_101] : memref<8x128xf32, #tpu.memory_space<vmem>>, vector<8x128xf32>
    tpu.vector_store %arg4[%c0_100, %c0_101], %166 {strides = array<i32>} : memref<8x128xf32, #tpu.memory_space<vmem>>, vector<8x128xf32>,
    %169 = arith.truncf %166 : vector<8x128xf32> to vector<8x128xbf16>
    %c0_102 = arith.constant 0 : index
    %c256_103 = arith.constant 256 : index
    %170 = vector.load %arg3[%c0_102, %c256_103] : memref<8x1024xbf16, #tpu.memory_space<vmem>>, vector<8x128xbf16>
    tpu.vector_store %arg3[%c0_102, %c256_103], %169 {strides = array<i32>} : memref<8x1024xbf16, #tpu.memory_space<vmem>>, vector<8x128xbf16>,
    %c0_104 = arith.constant 0 : index
    %c0_105 = arith.constant 0 : index
    %171 = vector.load %arg4[%c0_104, %c0_105] : memref<8x128xf32, #tpu.memory_space<vmem>>, vector<8x128xf32>
    %172 = arith.truncf %171 : vector<8x128xf32> to vector<8x128xbf16>
    %c0_106 = arith.constant 0 : index
    %c0_107 = arith.constant 0 : index
    %173 = vector.load %arg5[%c0_106, %c0_107] : memref<8x128xf32, #tpu.memory_space<vmem>>, vector<8x128xf32>
    %c0_108 = arith.constant 0 : index
    %c1536 = arith.constant 1536 : index
    %174 = vector.load %arg1[%c0_108, %c1536] : memref<8x4096xbf16, #tpu.memory_space<vmem>>, vector<8x128xbf16>
    %175 = arith.extf %174 : vector<8x128xbf16> to vector<8x128xf32>
    %c0_109 = arith.constant 0 : index
    %c0_110 = arith.constant 0 : index
    %c0_111 = arith.constant 0 : index
    %176 = vector.load %arg6[%c0_109, %c0_110, %c0_111] : memref<4x128x128xbf16, #tpu.memory_space<vmem>>, vector<1x128x128xbf16>
    %177 = vector.shape_cast %176 : vector<1x128x128xbf16> to vector<128x128xbf16>
    %cst_112 = arith.constant dense<0.000000e+00> : vector<8x128xf32>
    %178 = tpu.matmul %172, %177, %cst_112 {dimension_numbers = #tpu.dot_dimension_numbers<[1], [0], [0], [1], [0, 0, 1, 1], [], []>} : vector<8x128xbf16>, vector<128x128xbf16>, vector<8x128xf32> -> vector<8x128xf32>
    %179 = arith.addf %175, %178 : vector<8x128xf32>
    %180 = arith.negf %179 : vector<8x128xf32>
    %181 = math.exp %180 : vector<8x128xf32>
    %cst_113 = arith.constant 1.000000e+00 : f32
    %182 = vector.broadcast %cst_113 : f32 to vector<8x128xf32>
    %183 = arith.addf %182, %181 : vector<8x128xf32>
    %184 = arith.divf %182, %183 : vector<8x128xf32>
    %c0_114 = arith.constant 0 : index
    %c1664 = arith.constant 1664 : index
    %185 = vector.load %arg1[%c0_114, %c1664] : memref<8x4096xbf16, #tpu.memory_space<vmem>>, vector<8x128xbf16>
    %186 = arith.extf %185 : vector<8x128xbf16> to vector<8x128xf32>
    %c1_115 = arith.constant 1 : index
    %c0_116 = arith.constant 0 : index
    %c0_117 = arith.constant 0 : index
    %187 = vector.load %arg6[%c1_115, %c0_116, %c0_117] : memref<4x128x128xbf16, #tpu.memory_space<vmem>>, vector<1x128x128xbf16>
    %188 = vector.shape_cast %187 : vector<1x128x128xbf16> to vector<128x128xbf16>
    %cst_118 = arith.constant dense<0.000000e+00> : vector<8x128xf32>
    %189 = tpu.matmul %172, %188, %cst_118 {dimension_numbers = #tpu.dot_dimension_numbers<[1], [0], [0], [1], [0, 0, 1, 1], [], []>} : vector<8x128xbf16>, vector<128x128xbf16>, vector<8x128xf32> -> vector<8x128xf32>
    %190 = arith.addf %186, %189 : vector<8x128xf32>
    %191 = arith.negf %190 : vector<8x128xf32>
    %192 = math.exp %191 : vector<8x128xf32>
    %cst_119 = arith.constant 1.000000e+00 : f32
    %193 = vector.broadcast %cst_119 : f32 to vector<8x128xf32>
    %194 = arith.addf %193, %192 : vector<8x128xf32>
    %195 = arith.divf %193, %194 : vector<8x128xf32>
    %c0_120 = arith.constant 0 : index
    %c1792 = arith.constant 1792 : index
    %196 = vector.load %arg1[%c0_120, %c1792] : memref<8x4096xbf16, #tpu.memory_space<vmem>>, vector<8x128xbf16>
    %197 = arith.extf %196 : vector<8x128xbf16> to vector<8x128xf32>
    %c2_121 = arith.constant 2 : index
    %c0_122 = arith.constant 0 : index
    %c0_123 = arith.constant 0 : index
    %198 = vector.load %arg6[%c2_121, %c0_122, %c0_123] : memref<4x128x128xbf16, #tpu.memory_space<vmem>>, vector<1x128x128xbf16>
    %199 = vector.shape_cast %198 : vector<1x128x128xbf16> to vector<128x128xbf16>
    %cst_124 = arith.constant dense<0.000000e+00> : vector<8x128xf32>
    %200 = tpu.matmul %172, %199, %cst_124 {dimension_numbers = #tpu.dot_dimension_numbers<[1], [0], [0], [1], [0, 0, 1, 1], [], []>} : vector<8x128xbf16>, vector<128x128xbf16>, vector<8x128xf32> -> vector<8x128xf32>
    %201 = arith.addf %197, %200 : vector<8x128xf32>
    %202 = math.tanh %201 : vector<8x128xf32>
    %c0_125 = arith.constant 0 : index
    %c1920 = arith.constant 1920 : index
    %203 = vector.load %arg1[%c0_125, %c1920] : memref<8x4096xbf16, #tpu.memory_space<vmem>>, vector<8x128xbf16>
    %204 = arith.extf %203 : vector<8x128xbf16> to vector<8x128xf32>
    %c3_126 = arith.constant 3 : index
    %c0_127 = arith.constant 0 : index
    %c0_128 = arith.constant 0 : index
    %205 = vector.load %arg6[%c3_126, %c0_127, %c0_128] : memref<4x128x128xbf16, #tpu.memory_space<vmem>>, vector<1x128x128xbf16>
    %206 = vector.shape_cast %205 : vector<1x128x128xbf16> to vector<128x128xbf16>
    %cst_129 = arith.constant dense<0.000000e+00> : vector<8x128xf32>
    %207 = tpu.matmul %172, %206, %cst_129 {dimension_numbers = #tpu.dot_dimension_numbers<[1], [0], [0], [1], [0, 0, 1, 1], [], []>} : vector<8x128xbf16>, vector<128x128xbf16>, vector<8x128xf32> -> vector<8x128xf32>
    %208 = arith.addf %204, %207 : vector<8x128xf32>
    %209 = arith.negf %208 : vector<8x128xf32>
    %210 = math.exp %209 : vector<8x128xf32>
    %cst_130 = arith.constant 1.000000e+00 : f32
    %211 = vector.broadcast %cst_130 : f32 to vector<8x128xf32>
    %212 = arith.addf %211, %210 : vector<8x128xf32>
    %213 = arith.divf %211, %212 : vector<8x128xf32>
    %214 = arith.mulf %195, %173 : vector<8x128xf32>
    %215 = arith.mulf %184, %202 : vector<8x128xf32>
    %216 = arith.addf %214, %215 : vector<8x128xf32>
    %217 = math.tanh %216 : vector<8x128xf32>
    %218 = arith.mulf %213, %217 : vector<8x128xf32>
    %c0_131 = arith.constant 0 : index
    %c0_132 = arith.constant 0 : index
    %219 = vector.load %arg5[%c0_131, %c0_132] : memref<8x128xf32, #tpu.memory_space<vmem>>, vector<8x128xf32>
    tpu.vector_store %arg5[%c0_131, %c0_132], %216 {strides = array<i32>} : memref<8x128xf32, #tpu.memory_space<vmem>>, vector<8x128xf32>,
    %c0_133 = arith.constant 0 : index
    %c0_134 = arith.constant 0 : index
    %220 = vector.load %arg4[%c0_133, %c0_134] : memref<8x128xf32, #tpu.memory_space<vmem>>, vector<8x128xf32>
    tpu.vector_store %arg4[%c0_133, %c0_134], %218 {strides = array<i32>} : memref<8x128xf32, #tpu.memory_space<vmem>>, vector<8x128xf32>,
    %221 = arith.truncf %218 : vector<8x128xf32> to vector<8x128xbf16>
    %c0_135 = arith.constant 0 : index
    %c384_136 = arith.constant 384 : index
    %222 = vector.load %arg3[%c0_135, %c384_136] : memref<8x1024xbf16, #tpu.memory_space<vmem>>, vector<8x128xbf16>
    tpu.vector_store %arg3[%c0_135, %c384_136], %221 {strides = array<i32>} : memref<8x1024xbf16, #tpu.memory_space<vmem>>, vector<8x128xbf16>,
    %c0_137 = arith.constant 0 : index
    %c0_138 = arith.constant 0 : index
    %223 = vector.load %arg4[%c0_137, %c0_138] : memref<8x128xf32, #tpu.memory_space<vmem>>, vector<8x128xf32>
    %224 = arith.truncf %223 : vector<8x128xf32> to vector<8x128xbf16>
    %c0_139 = arith.constant 0 : index
    %c0_140 = arith.constant 0 : index
    %225 = vector.load %arg5[%c0_139, %c0_140] : memref<8x128xf32, #tpu.memory_space<vmem>>, vector<8x128xf32>
    %c0_141 = arith.constant 0 : index
    %c2048 = arith.constant 2048 : index
    %226 = vector.load %arg1[%c0_141, %c2048] : memref<8x4096xbf16, #tpu.memory_space<vmem>>, vector<8x128xbf16>
    %227 = arith.extf %226 : vector<8x128xbf16> to vector<8x128xf32>
    %c0_142 = arith.constant 0 : index
    %c0_143 = arith.constant 0 : index
    %c0_144 = arith.constant 0 : index
    %228 = vector.load %arg6[%c0_142, %c0_143, %c0_144] : memref<4x128x128xbf16, #tpu.memory_space<vmem>>, vector<1x128x128xbf16>
    %229 = vector.shape_cast %228 : vector<1x128x128xbf16> to vector<128x128xbf16>
    %cst_145 = arith.constant dense<0.000000e+00> : vector<8x128xf32>
    %230 = tpu.matmul %224, %229, %cst_145 {dimension_numbers = #tpu.dot_dimension_numbers<[1], [0], [0], [1], [0, 0, 1, 1], [], []>} : vector<8x128xbf16>, vector<128x128xbf16>, vector<8x128xf32> -> vector<8x128xf32>
    %231 = arith.addf %227, %230 : vector<8x128xf32>
    %232 = arith.negf %231 : vector<8x128xf32>
    %233 = math.exp %232 : vector<8x128xf32>
    %cst_146 = arith.constant 1.000000e+00 : f32
    %234 = vector.broadcast %cst_146 : f32 to vector<8x128xf32>
    %235 = arith.addf %234, %233 : vector<8x128xf32>
    %236 = arith.divf %234, %235 : vector<8x128xf32>
    %c0_147 = arith.constant 0 : index
    %c2176 = arith.constant 2176 : index
    %237 = vector.load %arg1[%c0_147, %c2176] : memref<8x4096xbf16, #tpu.memory_space<vmem>>, vector<8x128xbf16>
    %238 = arith.extf %237 : vector<8x128xbf16> to vector<8x128xf32>
    %c1_148 = arith.constant 1 : index
    %c0_149 = arith.constant 0 : index
    %c0_150 = arith.constant 0 : index
    %239 = vector.load %arg6[%c1_148, %c0_149, %c0_150] : memref<4x128x128xbf16, #tpu.memory_space<vmem>>, vector<1x128x128xbf16>
    %240 = vector.shape_cast %239 : vector<1x128x128xbf16> to vector<128x128xbf16>
    %cst_151 = arith.constant dense<0.000000e+00> : vector<8x128xf32>
    %241 = tpu.matmul %224, %240, %cst_151 {dimension_numbers = #tpu.dot_dimension_numbers<[1], [0], [0], [1], [0, 0, 1, 1], [], []>} : vector<8x128xbf16>, vector<128x128xbf16>, vector<8x128xf32> -> vector<8x128xf32>
    %242 = arith.addf %238, %241 : vector<8x128xf32>
    %243 = arith.negf %242 : vector<8x128xf32>
    %244 = math.exp %243 : vector<8x128xf32>
    %cst_152 = arith.constant 1.000000e+00 : f32
    %245 = vector.broadcast %cst_152 : f32 to vector<8x128xf32>
    %246 = arith.addf %245, %244 : vector<8x128xf32>
    %247 = arith.divf %245, %246 : vector<8x128xf32>
    %c0_153 = arith.constant 0 : index
    %c2304 = arith.constant 2304 : index
    %248 = vector.load %arg1[%c0_153, %c2304] : memref<8x4096xbf16, #tpu.memory_space<vmem>>, vector<8x128xbf16>
    %249 = arith.extf %248 : vector<8x128xbf16> to vector<8x128xf32>
    %c2_154 = arith.constant 2 : index
    %c0_155 = arith.constant 0 : index
    %c0_156 = arith.constant 0 : index
    %250 = vector.load %arg6[%c2_154, %c0_155, %c0_156] : memref<4x128x128xbf16, #tpu.memory_space<vmem>>, vector<1x128x128xbf16>
    %251 = vector.shape_cast %250 : vector<1x128x128xbf16> to vector<128x128xbf16>
    %cst_157 = arith.constant dense<0.000000e+00> : vector<8x128xf32>
    %252 = tpu.matmul %224, %251, %cst_157 {dimension_numbers = #tpu.dot_dimension_numbers<[1], [0], [0], [1], [0, 0, 1, 1], [], []>} : vector<8x128xbf16>, vector<128x128xbf16>, vector<8x128xf32> -> vector<8x128xf32>
    %253 = arith.addf %249, %252 : vector<8x128xf32>
    %254 = math.tanh %253 : vector<8x128xf32>
    %c0_158 = arith.constant 0 : index
    %c2432 = arith.constant 2432 : index
    %255 = vector.load %arg1[%c0_158, %c2432] : memref<8x4096xbf16, #tpu.memory_space<vmem>>, vector<8x128xbf16>
    %256 = arith.extf %255 : vector<8x128xbf16> to vector<8x128xf32>
    %c3_159 = arith.constant 3 : index
    %c0_160 = arith.constant 0 : index
    %c0_161 = arith.constant 0 : index
    %257 = vector.load %arg6[%c3_159, %c0_160, %c0_161] : memref<4x128x128xbf16, #tpu.memory_space<vmem>>, vector<1x128x128xbf16>
    %258 = vector.shape_cast %257 : vector<1x128x128xbf16> to vector<128x128xbf16>
    %cst_162 = arith.constant dense<0.000000e+00> : vector<8x128xf32>
    %259 = tpu.matmul %224, %258, %cst_162 {dimension_numbers = #tpu.dot_dimension_numbers<[1], [0], [0], [1], [0, 0, 1, 1], [], []>} : vector<8x128xbf16>, vector<128x128xbf16>, vector<8x128xf32> -> vector<8x128xf32>
    %260 = arith.addf %256, %259 : vector<8x128xf32>
    %261 = arith.negf %260 : vector<8x128xf32>
    %262 = math.exp %261 : vector<8x128xf32>
    %cst_163 = arith.constant 1.000000e+00 : f32
    %263 = vector.broadcast %cst_163 : f32 to vector<8x128xf32>
    %264 = arith.addf %263, %262 : vector<8x128xf32>
    %265 = arith.divf %263, %264 : vector<8x128xf32>
    %266 = arith.mulf %247, %225 : vector<8x128xf32>
    %267 = arith.mulf %236, %254 : vector<8x128xf32>
    %268 = arith.addf %266, %267 : vector<8x128xf32>
    %269 = math.tanh %268 : vector<8x128xf32>
    %270 = arith.mulf %265, %269 : vector<8x128xf32>
    %c0_164 = arith.constant 0 : index
    %c0_165 = arith.constant 0 : index
    %271 = vector.load %arg5[%c0_164, %c0_165] : memref<8x128xf32, #tpu.memory_space<vmem>>, vector<8x128xf32>
    tpu.vector_store %arg5[%c0_164, %c0_165], %268 {strides = array<i32>} : memref<8x128xf32, #tpu.memory_space<vmem>>, vector<8x128xf32>,
    %c0_166 = arith.constant 0 : index
    %c0_167 = arith.constant 0 : index
    %272 = vector.load %arg4[%c0_166, %c0_167] : memref<8x128xf32, #tpu.memory_space<vmem>>, vector<8x128xf32>
    tpu.vector_store %arg4[%c0_166, %c0_167], %270 {strides = array<i32>} : memref<8x128xf32, #tpu.memory_space<vmem>>, vector<8x128xf32>,
    %273 = arith.truncf %270 : vector<8x128xf32> to vector<8x128xbf16>
    %c0_168 = arith.constant 0 : index
    %c512_169 = arith.constant 512 : index
    %274 = vector.load %arg3[%c0_168, %c512_169] : memref<8x1024xbf16, #tpu.memory_space<vmem>>, vector<8x128xbf16>
    tpu.vector_store %arg3[%c0_168, %c512_169], %273 {strides = array<i32>} : memref<8x1024xbf16, #tpu.memory_space<vmem>>, vector<8x128xbf16>,
    %c0_170 = arith.constant 0 : index
    %c0_171 = arith.constant 0 : index
    %275 = vector.load %arg4[%c0_170, %c0_171] : memref<8x128xf32, #tpu.memory_space<vmem>>, vector<8x128xf32>
    %276 = arith.truncf %275 : vector<8x128xf32> to vector<8x128xbf16>
    %c0_172 = arith.constant 0 : index
    %c0_173 = arith.constant 0 : index
    %277 = vector.load %arg5[%c0_172, %c0_173] : memref<8x128xf32, #tpu.memory_space<vmem>>, vector<8x128xf32>
    %c0_174 = arith.constant 0 : index
    %c2560 = arith.constant 2560 : index
    %278 = vector.load %arg1[%c0_174, %c2560] : memref<8x4096xbf16, #tpu.memory_space<vmem>>, vector<8x128xbf16>
    %279 = arith.extf %278 : vector<8x128xbf16> to vector<8x128xf32>
    %c0_175 = arith.constant 0 : index
    %c0_176 = arith.constant 0 : index
    %c0_177 = arith.constant 0 : index
    %280 = vector.load %arg6[%c0_175, %c0_176, %c0_177] : memref<4x128x128xbf16, #tpu.memory_space<vmem>>, vector<1x128x128xbf16>
    %281 = vector.shape_cast %280 : vector<1x128x128xbf16> to vector<128x128xbf16>
    %cst_178 = arith.constant dense<0.000000e+00> : vector<8x128xf32>
    %282 = tpu.matmul %276, %281, %cst_178 {dimension_numbers = #tpu.dot_dimension_numbers<[1], [0], [0], [1], [0, 0, 1, 1], [], []>} : vector<8x128xbf16>, vector<128x128xbf16>, vector<8x128xf32> -> vector<8x128xf32>
    %283 = arith.addf %279, %282 : vector<8x128xf32>
    %284 = arith.negf %283 : vector<8x128xf32>
    %285 = math.exp %284 : vector<8x128xf32>
    %cst_179 = arith.constant 1.000000e+00 : f32
    %286 = vector.broadcast %cst_179 : f32 to vector<8x128xf32>
    %287 = arith.addf %286, %285 : vector<8x128xf32>
    %288 = arith.divf %286, %287 : vector<8x128xf32>
    %c0_180 = arith.constant 0 : index
    %c2688 = arith.constant 2688 : index
    %289 = vector.load %arg1[%c0_180, %c2688] : memref<8x4096xbf16, #tpu.memory_space<vmem>>, vector<8x128xbf16>
    %290 = arith.extf %289 : vector<8x128xbf16> to vector<8x128xf32>
    %c1_181 = arith.constant 1 : index
    %c0_182 = arith.constant 0 : index
    %c0_183 = arith.constant 0 : index
    %291 = vector.load %arg6[%c1_181, %c0_182, %c0_183] : memref<4x128x128xbf16, #tpu.memory_space<vmem>>, vector<1x128x128xbf16>
    %292 = vector.shape_cast %291 : vector<1x128x128xbf16> to vector<128x128xbf16>
    %cst_184 = arith.constant dense<0.000000e+00> : vector<8x128xf32>
    %293 = tpu.matmul %276, %292, %cst_184 {dimension_numbers = #tpu.dot_dimension_numbers<[1], [0], [0], [1], [0, 0, 1, 1], [], []>} : vector<8x128xbf16>, vector<128x128xbf16>, vector<8x128xf32> -> vector<8x128xf32>
    %294 = arith.addf %290, %293 : vector<8x128xf32>
    %295 = arith.negf %294 : vector<8x128xf32>
    %296 = math.exp %295 : vector<8x128xf32>
    %cst_185 = arith.constant 1.000000e+00 : f32
    %297 = vector.broadcast %cst_185 : f32 to vector<8x128xf32>
    %298 = arith.addf %297, %296 : vector<8x128xf32>
    %299 = arith.divf %297, %298 : vector<8x128xf32>
    %c0_186 = arith.constant 0 : index
    %c2816 = arith.constant 2816 : index
    %300 = vector.load %arg1[%c0_186, %c2816] : memref<8x4096xbf16, #tpu.memory_space<vmem>>, vector<8x128xbf16>
    %301 = arith.extf %300 : vector<8x128xbf16> to vector<8x128xf32>
    %c2_187 = arith.constant 2 : index
    %c0_188 = arith.constant 0 : index
    %c0_189 = arith.constant 0 : index
    %302 = vector.load %arg6[%c2_187, %c0_188, %c0_189] : memref<4x128x128xbf16, #tpu.memory_space<vmem>>, vector<1x128x128xbf16>
    %303 = vector.shape_cast %302 : vector<1x128x128xbf16> to vector<128x128xbf16>
    %cst_190 = arith.constant dense<0.000000e+00> : vector<8x128xf32>
    %304 = tpu.matmul %276, %303, %cst_190 {dimension_numbers = #tpu.dot_dimension_numbers<[1], [0], [0], [1], [0, 0, 1, 1], [], []>} : vector<8x128xbf16>, vector<128x128xbf16>, vector<8x128xf32> -> vector<8x128xf32>
    %305 = arith.addf %301, %304 : vector<8x128xf32>
    %306 = math.tanh %305 : vector<8x128xf32>
    %c0_191 = arith.constant 0 : index
    %c2944 = arith.constant 2944 : index
    %307 = vector.load %arg1[%c0_191, %c2944] : memref<8x4096xbf16, #tpu.memory_space<vmem>>, vector<8x128xbf16>
    %308 = arith.extf %307 : vector<8x128xbf16> to vector<8x128xf32>
    %c3_192 = arith.constant 3 : index
    %c0_193 = arith.constant 0 : index
    %c0_194 = arith.constant 0 : index
    %309 = vector.load %arg6[%c3_192, %c0_193, %c0_194] : memref<4x128x128xbf16, #tpu.memory_space<vmem>>, vector<1x128x128xbf16>
    %310 = vector.shape_cast %309 : vector<1x128x128xbf16> to vector<128x128xbf16>
    %cst_195 = arith.constant dense<0.000000e+00> : vector<8x128xf32>
    %311 = tpu.matmul %276, %310, %cst_195 {dimension_numbers = #tpu.dot_dimension_numbers<[1], [0], [0], [1], [0, 0, 1, 1], [], []>} : vector<8x128xbf16>, vector<128x128xbf16>, vector<8x128xf32> -> vector<8x128xf32>
    %312 = arith.addf %308, %311 : vector<8x128xf32>
    %313 = arith.negf %312 : vector<8x128xf32>
    %314 = math.exp %313 : vector<8x128xf32>
    %cst_196 = arith.constant 1.000000e+00 : f32
    %315 = vector.broadcast %cst_196 : f32 to vector<8x128xf32>
    %316 = arith.addf %315, %314 : vector<8x128xf32>
    %317 = arith.divf %315, %316 : vector<8x128xf32>
    %318 = arith.mulf %299, %277 : vector<8x128xf32>
    %319 = arith.mulf %288, %306 : vector<8x128xf32>
    %320 = arith.addf %318, %319 : vector<8x128xf32>
    %321 = math.tanh %320 : vector<8x128xf32>
    %322 = arith.mulf %317, %321 : vector<8x128xf32>
    %c0_197 = arith.constant 0 : index
    %c0_198 = arith.constant 0 : index
    %323 = vector.load %arg5[%c0_197, %c0_198] : memref<8x128xf32, #tpu.memory_space<vmem>>, vector<8x128xf32>
    tpu.vector_store %arg5[%c0_197, %c0_198], %320 {strides = array<i32>} : memref<8x128xf32, #tpu.memory_space<vmem>>, vector<8x128xf32>,
    %c0_199 = arith.constant 0 : index
    %c0_200 = arith.constant 0 : index
    %324 = vector.load %arg4[%c0_199, %c0_200] : memref<8x128xf32, #tpu.memory_space<vmem>>, vector<8x128xf32>
    tpu.vector_store %arg4[%c0_199, %c0_200], %322 {strides = array<i32>} : memref<8x128xf32, #tpu.memory_space<vmem>>, vector<8x128xf32>,
    %325 = arith.truncf %322 : vector<8x128xf32> to vector<8x128xbf16>
    %c0_201 = arith.constant 0 : index
    %c640_202 = arith.constant 640 : index
    %326 = vector.load %arg3[%c0_201, %c640_202] : memref<8x1024xbf16, #tpu.memory_space<vmem>>, vector<8x128xbf16>
    tpu.vector_store %arg3[%c0_201, %c640_202], %325 {strides = array<i32>} : memref<8x1024xbf16, #tpu.memory_space<vmem>>, vector<8x128xbf16>,
    %c0_203 = arith.constant 0 : index
    %c0_204 = arith.constant 0 : index
    %327 = vector.load %arg4[%c0_203, %c0_204] : memref<8x128xf32, #tpu.memory_space<vmem>>, vector<8x128xf32>
    %328 = arith.truncf %327 : vector<8x128xf32> to vector<8x128xbf16>
    %c0_205 = arith.constant 0 : index
    %c0_206 = arith.constant 0 : index
    %329 = vector.load %arg5[%c0_205, %c0_206] : memref<8x128xf32, #tpu.memory_space<vmem>>, vector<8x128xf32>
    %c0_207 = arith.constant 0 : index
    %c3072 = arith.constant 3072 : index
    %330 = vector.load %arg1[%c0_207, %c3072] : memref<8x4096xbf16, #tpu.memory_space<vmem>>, vector<8x128xbf16>
    %331 = arith.extf %330 : vector<8x128xbf16> to vector<8x128xf32>
    %c0_208 = arith.constant 0 : index
    %c0_209 = arith.constant 0 : index
    %c0_210 = arith.constant 0 : index
    %332 = vector.load %arg6[%c0_208, %c0_209, %c0_210] : memref<4x128x128xbf16, #tpu.memory_space<vmem>>, vector<1x128x128xbf16>
    %333 = vector.shape_cast %332 : vector<1x128x128xbf16> to vector<128x128xbf16>
    %cst_211 = arith.constant dense<0.000000e+00> : vector<8x128xf32>
    %334 = tpu.matmul %328, %333, %cst_211 {dimension_numbers = #tpu.dot_dimension_numbers<[1], [0], [0], [1], [0, 0, 1, 1], [], []>} : vector<8x128xbf16>, vector<128x128xbf16>, vector<8x128xf32> -> vector<8x128xf32>
    %335 = arith.addf %331, %334 : vector<8x128xf32>
    %336 = arith.negf %335 : vector<8x128xf32>
    %337 = math.exp %336 : vector<8x128xf32>
    %cst_212 = arith.constant 1.000000e+00 : f32
    %338 = vector.broadcast %cst_212 : f32 to vector<8x128xf32>
    %339 = arith.addf %338, %337 : vector<8x128xf32>
    %340 = arith.divf %338, %339 : vector<8x128xf32>
    %c0_213 = arith.constant 0 : index
    %c3200 = arith.constant 3200 : index
    %341 = vector.load %arg1[%c0_213, %c3200] : memref<8x4096xbf16, #tpu.memory_space<vmem>>, vector<8x128xbf16>
    %342 = arith.extf %341 : vector<8x128xbf16> to vector<8x128xf32>
    %c1_214 = arith.constant 1 : index
    %c0_215 = arith.constant 0 : index
    %c0_216 = arith.constant 0 : index
    %343 = vector.load %arg6[%c1_214, %c0_215, %c0_216] : memref<4x128x128xbf16, #tpu.memory_space<vmem>>, vector<1x128x128xbf16>
    %344 = vector.shape_cast %343 : vector<1x128x128xbf16> to vector<128x128xbf16>
    %cst_217 = arith.constant dense<0.000000e+00> : vector<8x128xf32>
    %345 = tpu.matmul %328, %344, %cst_217 {dimension_numbers = #tpu.dot_dimension_numbers<[1], [0], [0], [1], [0, 0, 1, 1], [], []>} : vector<8x128xbf16>, vector<128x128xbf16>, vector<8x128xf32> -> vector<8x128xf32>
    %346 = arith.addf %342, %345 : vector<8x128xf32>
    %347 = arith.negf %346 : vector<8x128xf32>
    %348 = math.exp %347 : vector<8x128xf32>
    %cst_218 = arith.constant 1.000000e+00 : f32
    %349 = vector.broadcast %cst_218 : f32 to vector<8x128xf32>
    %350 = arith.addf %349, %348 : vector<8x128xf32>
    %351 = arith.divf %349, %350 : vector<8x128xf32>
    %c0_219 = arith.constant 0 : index
    %c3328 = arith.constant 3328 : index
    %352 = vector.load %arg1[%c0_219, %c3328] : memref<8x4096xbf16, #tpu.memory_space<vmem>>, vector<8x128xbf16>
    %353 = arith.extf %352 : vector<8x128xbf16> to vector<8x128xf32>
    %c2_220 = arith.constant 2 : index
    %c0_221 = arith.constant 0 : index
    %c0_222 = arith.constant 0 : index
    %354 = vector.load %arg6[%c2_220, %c0_221, %c0_222] : memref<4x128x128xbf16, #tpu.memory_space<vmem>>, vector<1x128x128xbf16>
    %355 = vector.shape_cast %354 : vector<1x128x128xbf16> to vector<128x128xbf16>
    %cst_223 = arith.constant dense<0.000000e+00> : vector<8x128xf32>
    %356 = tpu.matmul %328, %355, %cst_223 {dimension_numbers = #tpu.dot_dimension_numbers<[1], [0], [0], [1], [0, 0, 1, 1], [], []>} : vector<8x128xbf16>, vector<128x128xbf16>, vector<8x128xf32> -> vector<8x128xf32>
    %357 = arith.addf %353, %356 : vector<8x128xf32>
    %358 = math.tanh %357 : vector<8x128xf32>
    %c0_224 = arith.constant 0 : index
    %c3456 = arith.constant 3456 : index
    %359 = vector.load %arg1[%c0_224, %c3456] : memref<8x4096xbf16, #tpu.memory_space<vmem>>, vector<8x128xbf16>
    %360 = arith.extf %359 : vector<8x128xbf16> to vector<8x128xf32>
    %c3_225 = arith.constant 3 : index
    %c0_226 = arith.constant 0 : index
    %c0_227 = arith.constant 0 : index
    %361 = vector.load %arg6[%c3_225, %c0_226, %c0_227] : memref<4x128x128xbf16, #tpu.memory_space<vmem>>, vector<1x128x128xbf16>
    %362 = vector.shape_cast %361 : vector<1x128x128xbf16> to vector<128x128xbf16>
    %cst_228 = arith.constant dense<0.000000e+00> : vector<8x128xf32>
    %363 = tpu.matmul %328, %362, %cst_228 {dimension_numbers = #tpu.dot_dimension_numbers<[1], [0], [0], [1], [0, 0, 1, 1], [], []>} : vector<8x128xbf16>, vector<128x128xbf16>, vector<8x128xf32> -> vector<8x128xf32>
    %364 = arith.addf %360, %363 : vector<8x128xf32>
    %365 = arith.negf %364 : vector<8x128xf32>
    %366 = math.exp %365 : vector<8x128xf32>
    %cst_229 = arith.constant 1.000000e+00 : f32
    %367 = vector.broadcast %cst_229 : f32 to vector<8x128xf32>
    %368 = arith.addf %367, %366 : vector<8x128xf32>
    %369 = arith.divf %367, %368 : vector<8x128xf32>
    %370 = arith.mulf %351, %329 : vector<8x128xf32>
    %371 = arith.mulf %340, %358 : vector<8x128xf32>
    %372 = arith.addf %370, %371 : vector<8x128xf32>
    %373 = math.tanh %372 : vector<8x128xf32>
    %374 = arith.mulf %369, %373 : vector<8x128xf32>
    %c0_230 = arith.constant 0 : index
    %c0_231 = arith.constant 0 : index
    %375 = vector.load %arg5[%c0_230, %c0_231] : memref<8x128xf32, #tpu.memory_space<vmem>>, vector<8x128xf32>
    tpu.vector_store %arg5[%c0_230, %c0_231], %372 {strides = array<i32>} : memref<8x128xf32, #tpu.memory_space<vmem>>, vector<8x128xf32>,
    %c0_232 = arith.constant 0 : index
    %c0_233 = arith.constant 0 : index
    %376 = vector.load %arg4[%c0_232, %c0_233] : memref<8x128xf32, #tpu.memory_space<vmem>>, vector<8x128xf32>
    tpu.vector_store %arg4[%c0_232, %c0_233], %374 {strides = array<i32>} : memref<8x128xf32, #tpu.memory_space<vmem>>, vector<8x128xf32>,
    %377 = arith.truncf %374 : vector<8x128xf32> to vector<8x128xbf16>
    %c0_234 = arith.constant 0 : index
    %c768_235 = arith.constant 768 : index
    %378 = vector.load %arg3[%c0_234, %c768_235] : memref<8x1024xbf16, #tpu.memory_space<vmem>>, vector<8x128xbf16>
    tpu.vector_store %arg3[%c0_234, %c768_235], %377 {strides = array<i32>} : memref<8x1024xbf16, #tpu.memory_space<vmem>>, vector<8x128xbf16>,
    %c0_236 = arith.constant 0 : index
    %c0_237 = arith.constant 0 : index
    %379 = vector.load %arg4[%c0_236, %c0_237] : memref<8x128xf32, #tpu.memory_space<vmem>>, vector<8x128xf32>
    %380 = arith.truncf %379 : vector<8x128xf32> to vector<8x128xbf16>
    %c0_238 = arith.constant 0 : index
    %c0_239 = arith.constant 0 : index
    %381 = vector.load %arg5[%c0_238, %c0_239] : memref<8x128xf32, #tpu.memory_space<vmem>>, vector<8x128xf32>
    %c0_240 = arith.constant 0 : index
    %c3584 = arith.constant 3584 : index
    %382 = vector.load %arg1[%c0_240, %c3584] : memref<8x4096xbf16, #tpu.memory_space<vmem>>, vector<8x128xbf16>
    %383 = arith.extf %382 : vector<8x128xbf16> to vector<8x128xf32>
    %c0_241 = arith.constant 0 : index
    %c0_242 = arith.constant 0 : index
    %c0_243 = arith.constant 0 : index
    %384 = vector.load %arg6[%c0_241, %c0_242, %c0_243] : memref<4x128x128xbf16, #tpu.memory_space<vmem>>, vector<1x128x128xbf16>
    %385 = vector.shape_cast %384 : vector<1x128x128xbf16> to vector<128x128xbf16>
    %cst_244 = arith.constant dense<0.000000e+00> : vector<8x128xf32>
    %386 = tpu.matmul %380, %385, %cst_244 {dimension_numbers = #tpu.dot_dimension_numbers<[1], [0], [0], [1], [0, 0, 1, 1], [], []>} : vector<8x128xbf16>, vector<128x128xbf16>, vector<8x128xf32> -> vector<8x128xf32>
    %387 = arith.addf %383, %386 : vector<8x128xf32>
    %388 = arith.negf %387 : vector<8x128xf32>
    %389 = math.exp %388 : vector<8x128xf32>
    %cst_245 = arith.constant 1.000000e+00 : f32
    %390 = vector.broadcast %cst_245 : f32 to vector<8x128xf32>
    %391 = arith.addf %390, %389 : vector<8x128xf32>
    %392 = arith.divf %390, %391 : vector<8x128xf32>
    %c0_246 = arith.constant 0 : index
    %c3712 = arith.constant 3712 : index
    %393 = vector.load %arg1[%c0_246, %c3712] : memref<8x4096xbf16, #tpu.memory_space<vmem>>, vector<8x128xbf16>
    %394 = arith.extf %393 : vector<8x128xbf16> to vector<8x128xf32>
    %c1_247 = arith.constant 1 : index
    %c0_248 = arith.constant 0 : index
    %c0_249 = arith.constant 0 : index
    %395 = vector.load %arg6[%c1_247, %c0_248, %c0_249] : memref<4x128x128xbf16, #tpu.memory_space<vmem>>, vector<1x128x128xbf16>
    %396 = vector.shape_cast %395 : vector<1x128x128xbf16> to vector<128x128xbf16>
    %cst_250 = arith.constant dense<0.000000e+00> : vector<8x128xf32>
    %397 = tpu.matmul %380, %396, %cst_250 {dimension_numbers = #tpu.dot_dimension_numbers<[1], [0], [0], [1], [0, 0, 1, 1], [], []>} : vector<8x128xbf16>, vector<128x128xbf16>, vector<8x128xf32> -> vector<8x128xf32>
    %398 = arith.addf %394, %397 : vector<8x128xf32>
    %399 = arith.negf %398 : vector<8x128xf32>
    %400 = math.exp %399 : vector<8x128xf32>
    %cst_251 = arith.constant 1.000000e+00 : f32
    %401 = vector.broadcast %cst_251 : f32 to vector<8x128xf32>
    %402 = arith.addf %401, %400 : vector<8x128xf32>
    %403 = arith.divf %401, %402 : vector<8x128xf32>
    %c0_252 = arith.constant 0 : index
    %c3840 = arith.constant 3840 : index
    %404 = vector.load %arg1[%c0_252, %c3840] : memref<8x4096xbf16, #tpu.memory_space<vmem>>, vector<8x128xbf16>
    %405 = arith.extf %404 : vector<8x128xbf16> to vector<8x128xf32>
    %c2_253 = arith.constant 2 : index
    %c0_254 = arith.constant 0 : index
    %c0_255 = arith.constant 0 : index
    %406 = vector.load %arg6[%c2_253, %c0_254, %c0_255] : memref<4x128x128xbf16, #tpu.memory_space<vmem>>, vector<1x128x128xbf16>
    %407 = vector.shape_cast %406 : vector<1x128x128xbf16> to vector<128x128xbf16>
    %cst_256 = arith.constant dense<0.000000e+00> : vector<8x128xf32>
    %408 = tpu.matmul %380, %407, %cst_256 {dimension_numbers = #tpu.dot_dimension_numbers<[1], [0], [0], [1], [0, 0, 1, 1], [], []>} : vector<8x128xbf16>, vector<128x128xbf16>, vector<8x128xf32> -> vector<8x128xf32>
    %409 = arith.addf %405, %408 : vector<8x128xf32>
    %410 = math.tanh %409 : vector<8x128xf32>
    %c0_257 = arith.constant 0 : index
    %c3968 = arith.constant 3968 : index
    %411 = vector.load %arg1[%c0_257, %c3968] : memref<8x4096xbf16, #tpu.memory_space<vmem>>, vector<8x128xbf16>
    %412 = arith.extf %411 : vector<8x128xbf16> to vector<8x128xf32>
    %c3_258 = arith.constant 3 : index
    %c0_259 = arith.constant 0 : index
    %c0_260 = arith.constant 0 : index
    %413 = vector.load %arg6[%c3_258, %c0_259, %c0_260] : memref<4x128x128xbf16, #tpu.memory_space<vmem>>, vector<1x128x128xbf16>
    %414 = vector.shape_cast %413 : vector<1x128x128xbf16> to vector<128x128xbf16>
    %cst_261 = arith.constant dense<0.000000e+00> : vector<8x128xf32>
    %415 = tpu.matmul %380, %414, %cst_261 {dimension_numbers = #tpu.dot_dimension_numbers<[1], [0], [0], [1], [0, 0, 1, 1], [], []>} : vector<8x128xbf16>, vector<128x128xbf16>, vector<8x128xf32> -> vector<8x128xf32>
    %416 = arith.addf %412, %415 : vector<8x128xf32>
    %417 = arith.negf %416 : vector<8x128xf32>
    %418 = math.exp %417 : vector<8x128xf32>
    %cst_262 = arith.constant 1.000000e+00 : f32
    %419 = vector.broadcast %cst_262 : f32 to vector<8x128xf32>
    %420 = arith.addf %419, %418 : vector<8x128xf32>
    %421 = arith.divf %419, %420 : vector<8x128xf32>
    %422 = arith.mulf %403, %381 : vector<8x128xf32>
    %423 = arith.mulf %392, %410 : vector<8x128xf32>
    %424 = arith.addf %422, %423 : vector<8x128xf32>
    %425 = math.tanh %424 : vector<8x128xf32>
    %426 = arith.mulf %421, %425 : vector<8x128xf32>
    %c0_263 = arith.constant 0 : index
    %c0_264 = arith.constant 0 : index
    %427 = vector.load %arg5[%c0_263, %c0_264] : memref<8x128xf32, #tpu.memory_space<vmem>>, vector<8x128xf32>
    tpu.vector_store %arg5[%c0_263, %c0_264], %424 {strides = array<i32>} : memref<8x128xf32, #tpu.memory_space<vmem>>, vector<8x128xf32>,
    %c0_265 = arith.constant 0 : index
    %c0_266 = arith.constant 0 : index
    %428 = vector.load %arg4[%c0_265, %c0_266] : memref<8x128xf32, #tpu.memory_space<vmem>>, vector<8x128xf32>
    tpu.vector_store %arg4[%c0_265, %c0_266], %426 {strides = array<i32>} : memref<8x128xf32, #tpu.memory_space<vmem>>, vector<8x128xf32>,
    %429 = arith.truncf %426 : vector<8x128xf32> to vector<8x128xbf16>
    %c0_267 = arith.constant 0 : index
    %c896_268 = arith.constant 896 : index
    %430 = vector.load %arg3[%c0_267, %c896_268] : memref<8x1024xbf16, #tpu.memory_space<vmem>>, vector<8x128xbf16>
    tpu.vector_store %arg3[%c0_267, %c896_268], %429 {strides = array<i32>} : memref<8x1024xbf16, #tpu.memory_space<vmem>>, vector<8x128xbf16>,
    return
  }
  func.func @transform_0(%arg0: i32) -> (i32, i32) {
    %c0_i32 = arith.constant 0 : i32
    %c0_i32_0 = arith.constant 0 : i32
    return %c0_i32, %arg0 : i32, i32
  }
  func.func @transform_2(%arg0: i32) -> (i32, i32) {
    %c0_i32 = arith.constant 0 : i32
    %c0_i32_0 = arith.constant 0 : i32
    return %c0_i32, %arg0 : i32, i32
  }
}

module attributes {stable_mosaic.version = 11 : i64} {
  func.func @_matmul_bias_kernel(%arg0: i32, %arg1: i32, %arg2: i32, %arg3: memref<128x128xbf16, #tpu.memory_space<vmem>>, %arg4: memref<128x128xbf16, #tpu.memory_space<vmem>>, %arg5: memref<1x128xf32, #tpu.memory_space<vmem>>, %arg6: memref<128x128xf32, #tpu.memory_space<vmem>>, %arg7: memref<128x128xf32, #tpu.memory_space<vmem>>) attributes {dimension_semantics = [#tpu.dimension_semantics<parallel>, #tpu.dimension_semantics<parallel>, #tpu.dimension_semantics<arbitrary>], iteration_bounds = array<i64: 1, 1, 1>, scalar_prefetch = 0 : i64, scratch_operands = 1 : i64, tpu.core_type = #tpu.core_type<tc>, window_params = [{transform_indices = @transform_0, window_bounds = array<i64: 128, 128>}, {transform_indices = @transform_1, window_bounds = array<i64: 128, 128>}, {transform_indices = @transform_2, window_bounds = array<i64: 1, 128>}, {transform_indices = @transform_3, window_bounds = array<i64: 128, 128>}]} {
    %c0_i32 = arith.constant 0 : i32
    %0 = arith.cmpi eq, %arg2, %c0_i32 : i32
    %1 = arith.extui %0 : i1 to i32
    %c0_i32_0 = arith.constant 0 : i32
    %2 = arith.cmpi ne, %1, %c0_i32_0 : i32
    scf.if %2 {
      %cst_10 = arith.constant 0.000000e+00 : f32
      %12 = vector.broadcast %cst_10 : f32 to vector<128x128xf32>
      %c0_11 = arith.constant 0 : index
      %c0_12 = arith.constant 0 : index
      %13 = vector.load %arg7[%c0_11, %c0_12] : memref<128x128xf32, #tpu.memory_space<vmem>>, vector<128x128xf32>
      tpu.vector_store %arg7[%c0_11, %c0_12], %12 {strides = array<i32>} : memref<128x128xf32, #tpu.memory_space<vmem>>, vector<128x128xf32>,
    } else {
    }
    %c0 = arith.constant 0 : index
    %c0_1 = arith.constant 0 : index
    %3 = vector.load %arg7[%c0, %c0_1] : memref<128x128xf32, #tpu.memory_space<vmem>>, vector<128x128xf32>
    %c0_2 = arith.constant 0 : index
    %c0_3 = arith.constant 0 : index
    %4 = vector.load %arg3[%c0_2, %c0_3] : memref<128x128xbf16, #tpu.memory_space<vmem>>, vector<128x128xbf16>
    %c0_4 = arith.constant 0 : index
    %c0_5 = arith.constant 0 : index
    %5 = vector.load %arg4[%c0_4, %c0_5] : memref<128x128xbf16, #tpu.memory_space<vmem>>, vector<128x128xbf16>
    %cst = arith.constant dense<0.000000e+00> : vector<128x128xf32>
    %6 = tpu.matmul %4, %5, %cst {dimension_numbers = #tpu.dot_dimension_numbers<[1], [0], [0], [1], [0, 0, 1, 1], [], []>} : vector<128x128xbf16>, vector<128x128xbf16>, vector<128x128xf32> -> vector<128x128xf32>
    %7 = arith.addf %3, %6 : vector<128x128xf32>
    %c0_6 = arith.constant 0 : index
    %c0_7 = arith.constant 0 : index
    %8 = vector.load %arg7[%c0_6, %c0_7] : memref<128x128xf32, #tpu.memory_space<vmem>>, vector<128x128xf32>
    tpu.vector_store %arg7[%c0_6, %c0_7], %7 {strides = array<i32>} : memref<128x128xf32, #tpu.memory_space<vmem>>, vector<128x128xf32>,
    %c0_i32_8 = arith.constant 0 : i32
    %9 = arith.cmpi eq, %arg2, %c0_i32_8 : i32
    %10 = arith.extui %9 : i1 to i32
    %c0_i32_9 = arith.constant 0 : i32
    %11 = arith.cmpi ne, %10, %c0_i32_9 : i32
    scf.if %11 {
      %c0_10 = arith.constant 0 : index
      %c0_11 = arith.constant 0 : index
      %12 = vector.load %arg7[%c0_10, %c0_11] : memref<128x128xf32, #tpu.memory_space<vmem>>, vector<128x128xf32>
      %c0_12 = arith.constant 0 : index
      %c0_13 = arith.constant 0 : index
      %13 = vector.load %arg5[%c0_12, %c0_13] : memref<1x128xf32, #tpu.memory_space<vmem>>, vector<1x128xf32>
      %14 = vector.broadcast %13 : vector<1x128xf32> to vector<128x128xf32>
      %15 = arith.addf %12, %14 : vector<128x128xf32>
      %c0_14 = arith.constant 0 : index
      %c0_15 = arith.constant 0 : index
      %16 = vector.load %arg6[%c0_14, %c0_15] : memref<128x128xf32, #tpu.memory_space<vmem>>, vector<128x128xf32>
      tpu.vector_store %arg6[%c0_14, %c0_15], %15 {strides = array<i32>} : memref<128x128xf32, #tpu.memory_space<vmem>>, vector<128x128xf32>,
    } else {
    }
    return
  }
  func.func @transform_0(%arg0: i32, %arg1: i32, %arg2: i32) -> (i32, i32) {
    %c0_i32 = arith.constant 0 : i32
    return %arg0, %arg2 : i32, i32
  }
  func.func @transform_1(%arg0: i32, %arg1: i32, %arg2: i32) -> (i32, i32) {
    %c0_i32 = arith.constant 0 : i32
    return %arg2, %arg1 : i32, i32
  }
  func.func @transform_2(%arg0: i32, %arg1: i32, %arg2: i32) -> (i32, i32) {
    %c0_i32 = arith.constant 0 : i32
    %c0_i32_0 = arith.constant 0 : i32
    return %c0_i32, %arg1 : i32, i32
  }
  func.func @transform_3(%arg0: i32, %arg1: i32, %arg2: i32) -> (i32, i32) {
    %c0_i32 = arith.constant 0 : i32
    return %arg0, %arg1 : i32, i32
  }
}

</mosaic_0001>

<llo_original>
// kernel: lstm_model_forward.5
$region0: #{lstm_model_forward.5}
  #allocation0 [shape = 'u32[]', space=smem, size = 0x4, offset = 0x4, fixed_abs, tag = 'smem constant byte address 0x4 - core index']
  #allocation1 [shape = 'u32[144,128]{1,0:T(1,128)}', space=vmem, size = 0x12000, scoped, tag = 'internal scratch']
  #allocation2 [shape = 'f32[128,128]{1,0:T(8,128)}', space=vmem, size = 0x10000, scoped, tag = 'scratch operand']
  %s0 = inlined_call_operand.vmem [shape: bf16[128,128], index: 0, kind: input, shape index: {}]
  %s1 = inlined_call_operand.vmem [shape: bf16[128,128], index: 1, kind: input, shape index: {}]
  %s2 = inlined_call_operand.vmem [shape: f32[1,128], index: 2, kind: input, shape index: {}]
  %s3 = inlined_call_operand.hbm [shape: f32[128,128], index: 3, kind: output, shape index: {}]
  %s4 = sld [smem:[#allocation0]]
  $region30: #{lstm_model_forward.5} parent=0
    _
  %s6 = ssub.s32 1, %s4
  %s7 = scalar_select 0, %s6, %s4
  $region1: #{lstm_model_forward.5} parent=0
    #allocation3 [shape = 'u8[65536]{0}', space=vmem, size = 0x10000, scoped, tag = 'output window, operand 0, single buffered']
    #allocation4 [shape = 's32[1]{0}', space=sflag, size = 0x4, scoped, tag = 'scoped memory for lstm_model_forward.5']
    %8 = vsyncpa [#allocation4], 0
    // Predicated region
    $region2: #{lstm_model_forward.5} parent=1 // pred_check
      _
    $region3: #{lstm_model_forward.5} parent=1 // pred_check_branch
      %10 = sbr.rel (0) target = $region5
    $region4: #{lstm_model_forward.5} parent=1 // pred_region
      _
    $region5: #{lstm_model_forward.5} parent=1 // pred_fallthru
      _
    // Predicated region
    $region6: #{lstm_model_forward.5} parent=1 // pred_check
      _
    $region7: #{lstm_model_forward.5} parent=1 // pred_check_branch
      %12 = sbr.rel (0) target = $region9
    $region8: #{lstm_model_forward.5} parent=1 // pred_region
      _
    $region9: #{lstm_model_forward.5} parent=1 // pred_fallthru
      _
    // Predicated region
    $region10: #{lstm_model_forward.5} parent=1 // pred_check
      _
    $region11: #{lstm_model_forward.5} parent=1 // pred_check_branch
      %14 = sbr.rel (0) target = $region13
    $region12: #{lstm_model_forward.5} parent=1 // pred_region
      _
    $region13: #{lstm_model_forward.5} parent=1 // pred_fallthru
      _
    %p16 = scmp.eq.s32.totalorder 0, 0
    // Predicated region
    $region14: #{lstm_model_forward.5} parent=1 // pred_check
      %p17 = pneg %p16
    $region15: #{lstm_model_forward.5} parent=1 // pred_check_branch
      %19 = sbr.rel (%p17) target = $region17
    $region16: #{lstm_model_forward.5} parent=1 // pred_region
      %20 = vst [vmem:[#allocation2] sm:$0xff] 0.0
      %21 = vst [vmem:[#allocation2 + $0x8] sm:$0xff] 0.0
      %22 = vst [vmem:[#allocation2 + $0x10] sm:$0xff] 0.0
      %23 = vst [vmem:[#allocation2 + $0x18] sm:$0xff] 0.0
      %24 = vst [vmem:[#allocation2 + $0x20] sm:$0xff] 0.0
      %25 = vst [vmem:[#allocation2 + $0x28] sm:$0xff] 0.0
      %26 = vst [vmem:[#allocation2 + $0x30] sm:$0xff] 0.0
      %27 = vst [vmem:[#allocation2 + $0x38] sm:$0xff] 0.0
      %28 = vst [vmem:[#allocation2 + $0x40] sm:$0xff] 0.0
      %29 = vst [vmem:[#allocation2 + $0x48] sm:$0xff] 0.0
      %30 = vst [vmem:[#allocation2 + $0x50] sm:$0xff] 0.0
      %31 = vst [vmem:[#allocation2 + $0x58] sm:$0xff] 0.0
      %32 = vst [vmem:[#allocation2 + $0x60] sm:$0xff] 0.0
      %33 = vst [vmem:[#allocation2 + $0x68] sm:$0xff] 0.0
      %34 = vst [vmem:[#allocation2 + $0x70] sm:$0xff] 0.0
      %35 = vst [vmem:[#allocation2 + $0x78] sm:$0xff] 0.0
    $region17: #{lstm_model_forward.5} parent=1 // pred_fallthru
      _
    %v36 = vld [vmem:[#allocation2] sm:$0xff]
    %v37 = vld [vmem:[#allocation2 + $0x8] sm:$0xff]
    %v38 = vld [vmem:[#allocation2 + $0x10] sm:$0xff]
    %v39 = vld [vmem:[#allocation2 + $0x18] sm:$0xff]
    %v40 = vld [vmem:[#allocation2 + $0x20] sm:$0xff]
    %v41 = vld [vmem:[#allocation2 + $0x28] sm:$0xff]
    %v42 = vld [vmem:[#allocation2 + $0x30] sm:$0xff]
    %v43 = vld [vmem:[#allocation2 + $0x38] sm:$0xff]
    %v44 = vld [vmem:[#allocation2 + $0x40] sm:$0xff]
    %v45 = vld [vmem:[#allocation2 + $0x48] sm:$0xff]
    %v46 = vld [vmem:[#allocation2 + $0x50] sm:$0xff]
    %v47 = vld [vmem:[#allocation2 + $0x58] sm:$0xff]
    %v48 = vld [vmem:[#allocation2 + $0x60] sm:$0xff]
    %v49 = vld [vmem:[#allocation2 + $0x68] sm:$0xff]
    %v50 = vld [vmem:[#allocation2 + $0x70] sm:$0xff]
    %v51 = vld [vmem:[#allocation2 + $0x78] sm:$0xff]
    %v52 = vld [vmem:[%s0] sm:$0xf]
    %v53 = vld [vmem:[%s0 + $0x4] sm:$0xf]
    %v54 = vld [vmem:[%s0 + $0x8] sm:$0xf]
    %v55 = vld [vmem:[%s0 + $0xc] sm:$0xf]
    %v56 = vld [vmem:[%s0 + $0x10] sm:$0xf]
    %v57 = vld [vmem:[%s0 + $0x14] sm:$0xf]
    %v58 = vld [vmem:[%s0 + $0x18] sm:$0xf]
    %v59 = vld [vmem:[%s0 + $0x1c] sm:$0xf]
    %v60 = vld [vmem:[%s0 + $0x20] sm:$0xf]
    %v61 = vld [vmem:[%s0 + $0x24] sm:$0xf]
    %v62 = vld [vmem:[%s0 + $0x28] sm:$0xf]
    %v63 = vld [vmem:[%s0 + $0x2c] sm:$0xf]
    %v64 = vld [vmem:[%s0 + $0x30] sm:$0xf]
    %v65 = vld [vmem:[%s0 + $0x34] sm:$0xf]
    %v66 = vld [vmem:[%s0 + $0x38] sm:$0xf]
    %v67 = vld [vmem:[%s0 + $0x3c] sm:$0xf]
    %v68 = vld [vmem:[%s1] sm:$0xf]
    %v69 = vld [vmem:[%s1 + $0x4] sm:$0xf]
    %v70 = vld [vmem:[%s1 + $0x8] sm:$0xf]
    %v71 = vld [vmem:[%s1 + $0xc] sm:$0xf]
    %v72 = vld [vmem:[%s1 + $0x10] sm:$0xf]
    %v73 = vld [vmem:[%s1 + $0x14] sm:$0xf]
    %v74 = vld [vmem:[%s1 + $0x18] sm:$0xf]
    %v75 = vld [vmem:[%s1 + $0x1c] sm:$0xf]
    %v76 = vld [vmem:[%s1 + $0x20] sm:$0xf]
    %v77 = vld [vmem:[%s1 + $0x24] sm:$0xf]
    %v78 = vld [vmem:[%s1 + $0x28] sm:$0xf]
    %v79 = vld [vmem:[%s1 + $0x2c] sm:$0xf]
    %v80 = vld [vmem:[%s1 + $0x30] sm:$0xf]
    %v81 = vld [vmem:[%s1 + $0x34] sm:$0xf]
    %v82 = vld [vmem:[%s1 + $0x38] sm:$0xf]
    %v83 = vld [vmem:[%s1 + $0x3c] sm:$0xf]
    %v100 = vunpack.c.l.b16 %v52
    %v101 = vunpack.c.l.b16 %v53
    %v102 = vunpack.c.l.b16 %v54
    %v103 = vunpack.c.l.b16 %v55
    %v104 = vunpack.c.l.b16 %v56
    %v105 = vunpack.c.l.b16 %v57
    %v106 = vunpack.c.l.b16 %v58
    %v107 = vunpack.c.l.b16 %v59
    %v108 = vunpack.c.l.b16 %v60
    %v109 = vunpack.c.l.b16 %v61
    %v110 = vunpack.c.l.b16 %v62
    %v111 = vunpack.c.l.b16 %v63
    %v112 = vunpack.c.l.b16 %v64
    %v113 = vunpack.c.l.b16 %v65
    %v114 = vunpack.c.l.b16 %v66
    %v115 = vunpack.c.l.b16 %v67
    %v116 = vpack.c.b16 %v101, %v100
    %v117 = vpack.c.b16 %v103, %v102
    %v118 = vpack.c.b16 %v105, %v104
    %v119 = vpack.c.b16 %v107, %v106
    %v120 = vpack.c.b16 %v109, %v108
    %v121 = vpack.c.b16 %v111, %v110
    %v122 = vpack.c.b16 %v113, %v112
    %v123 = vpack.c.b16 %v115, %v114
    %v148 = vunpack.c.l.b16 %v68
    %v149 = vunpack.c.l.b16 %v69
    %v150 = vunpack.c.l.b16 %v70
    %v151 = vunpack.c.l.b16 %v71
    %v152 = vunpack.c.l.b16 %v72
    %v153 = vunpack.c.l.b16 %v73
    %v154 = vunpack.c.l.b16 %v74
    %v155 = vunpack.c.l.b16 %v75
    %v156 = vunpack.c.l.b16 %v76
    %v157 = vunpack.c.l.b16 %v77
    %v158 = vunpack.c.l.b16 %v78
    %v159 = vunpack.c.l.b16 %v79
    %v160 = vunpack.c.l.b16 %v80
    %v161 = vunpack.c.l.b16 %v81
    %v162 = vunpack.c.l.b16 %v82
    %v163 = vunpack.c.l.b16 %v83
    %v164 = vpack.c.b16 %v149, %v148
    %v165 = vpack.c.b16 %v151, %v150
    %v166 = vpack.c.b16 %v153, %v152
    %v167 = vpack.c.b16 %v155, %v154
    %v168 = vpack.c.b16 %v157, %v156
    %v169 = vpack.c.b16 %v159, %v158
    %v170 = vpack.c.b16 %v161, %v160
    %v171 = vpack.c.b16 %v163, %v162
    %180 = vmatprep.subr.bf16.mxu0 0
    %181 = vmatpush1.bf16.msra.mxu0 %v164
    %182 = vmatprep.subr.bf16.mxu0 0
    %183 = vmatpush1.bf16.msra.mxu0 %v165
    %184 = vmatprep.subr.bf16.mxu0 0
    %185 = vmatpush1.bf16.msra.mxu0 %v166
    %186 = vmatprep.subr.bf16.mxu0 0
    %187 = vmatpush1.bf16.msra.mxu0 %v167
    %188 = vmatprep.subr.bf16.mxu0 0
    %189 = vmatpush1.bf16.msra.mxu0 %v168
    %190 = vmatprep.subr.bf16.mxu0 0
    %191 = vmatpush1.bf16.msra.mxu0 %v169
    %192 = vmatprep.subr.bf16.mxu0 0
    %193 = vmatpush1.bf16.msra.mxu0 %v170
    %194 = vmatprep.subr.bf16.mxu0 0
    %195 = vmatpush1.bf16.msra.mxu0 %v171
    %196 = vmatprep.subr.bf16.mxu0 0
    %197 = vmatpush1.bf16.msra.mxu0 0
    %198 = vmatprep.subr.bf16.mxu0 0
    %199 = vmatpush1.bf16.msra.mxu0 0
    %200 = vmatprep.subr.bf16.mxu0 0
    %201 = vmatpush1.bf16.msra.mxu0 0
    %202 = vmatprep.subr.bf16.mxu0 0
    %203 = vmatpush1.bf16.msra.mxu0 0
    %204 = vmatprep.subr.bf16.mxu0 0
    %205 = vmatpush1.bf16.msra.mxu0 0
    %206 = vmatprep.subr.bf16.mxu0 0
    %207 = vmatpush1.bf16.msra.mxu0 0
    %208 = vmatprep.subr.bf16.mxu0 0
    %209 = vmatpush1.bf16.msra.mxu0 0
    %210 = vmatprep.subr.bf16.mxu0 0
    %211 = vmatpush1.bf16.msra.mxu0 0
    %212 = vmatprep.mubr.bf16.mxu0 0
    %213 = vmatmul.mubr.bf16.gmra.mrb[0].mxu0 %v116
    %v214 = vpop.f32.mrb[0].mxu0
    %v215 = vadd.f32 0.0, %v214
    %v216 = vpop.f32.mrb[0].mxu0
    %v217 = vpop.f32.mrb[0].mxu0
    %v218 = vadd.f32 0.0, %v217
    %v219 = vpop.f32.mrb[0].mxu0
    %220 = vmatprep.mubr.bf16.mxu0 0
    %221 = vmatmul.mubr.bf16.gmra.mrb[0].mxu0 %v117
    %v222 = vpop.f32.mrb[0].mxu0
    %v223 = vadd.f32 0.0, %v222
    %v224 = vpop.f32.mrb[0].mxu0
    %v225 = vpop.f32.mrb[0].mxu0
    %v226 = vadd.f32 0.0, %v225
    %v227 = vpop.f32.mrb[0].mxu0
    %228 = vmatprep.mubr.bf16.mxu0 0
    %229 = vmatmul.mubr.bf16.gmra.mrb[0].mxu0 %v118
    %v230 = vpop.f32.mrb[0].mxu0
    %v231 = vadd.f32 0.0, %v230
    %v232 = vpop.f32.mrb[0].mxu0
    %v233 = vpop.f32.mrb[0].mxu0
    %v234 = vadd.f32 0.0, %v233
    %v235 = vpop.f32.mrb[0].mxu0
    %236 = vmatprep.mubr.bf16.mxu0 0
    %237 = vmatmul.mubr.bf16.gmra.mrb[0].mxu0 %v119
    %v238 = vpop.f32.mrb[0].mxu0
    %v239 = vadd.f32 0.0, %v238
    %v240 = vpop.f32.mrb[0].mxu0
    %v241 = vpop.f32.mrb[0].mxu0
    %v242 = vadd.f32 0.0, %v241
    %v243 = vpop.f32.mrb[0].mxu0
    %244 = vmatprep.mubr.bf16.mxu0 0
    %245 = vmatmul.mubr.bf16.gmra.mrb[0].mxu0 %v120
    %v246 = vpop.f32.mrb[0].mxu0
    %v247 = vadd.f32 0.0, %v246
    %v248 = vpop.f32.mrb[0].mxu0
    %v249 = vpop.f32.mrb[0].mxu0
    %v250 = vadd.f32 0.0, %v249
    %v251 = vpop.f32.mrb[0].mxu0
    %252 = vmatprep.mubr.bf16.mxu0 0
    %253 = vmatmul.mubr.bf16.gmra.mrb[0].mxu0 %v121
    %v254 = vpop.f32.mrb[0].mxu0
    %v255 = vadd.f32 0.0, %v254
    %v256 = vpop.f32.mrb[0].mxu0
    %v257 = vpop.f32.mrb[0].mxu0
    %v258 = vadd.f32 0.0, %v257
    %v259 = vpop.f32.mrb[0].mxu0
    %260 = vmatprep.mubr.bf16.mxu0 0
    %261 = vmatmul.mubr.bf16.gmra.mrb[0].mxu0 %v122
    %v262 = vpop.f32.mrb[0].mxu0
    %v263 = vadd.f32 0.0, %v262
    %v264 = vpop.f32.mrb[0].mxu0
    %v265 = vpop.f32.mrb[0].mxu0
    %v266 = vadd.f32 0.0, %v265
    %v267 = vpop.f32.mrb[0].mxu0
    %268 = vmatprep.mubr.bf16.mxu0 0
    %269 = vmatmul.mubr.bf16.gmra.mrb[0].mxu0 %v123
    %v270 = vpop.f32.mrb[0].mxu0
    %v271 = vadd.f32 0.0, %v270
    %v272 = vpop.f32.mrb[0].mxu0
    %v273 = vpop.f32.mrb[0].mxu0
    %v274 = vadd.f32 0.0, %v273
    %v275 = vpop.f32.mrb[0].mxu0
    %276 = vdwg.mxu0
    %v277 = vadd.f32 %v36, %v215
    %v278 = vadd.f32 %v37, %v218
    %v279 = vadd.f32 %v38, %v223
    %v280 = vadd.f32 %v39, %v226
    %v281 = vadd.f32 %v40, %v231
    %v282 = vadd.f32 %v41, %v234
    %v283 = vadd.f32 %v42, %v239
    %v284 = vadd.f32 %v43, %v242
    %v285 = vadd.f32 %v44, %v247
    %v286 = vadd.f32 %v45, %v250
    %v287 = vadd.f32 %v46, %v255
    %v288 = vadd.f32 %v47, %v258
    %v289 = vadd.f32 %v48, %v263
    %v290 = vadd.f32 %v49, %v266
    %v291 = vadd.f32 %v50, %v271
    %v292 = vadd.f32 %v51, %v274
    %293 = vst [vmem:[#allocation2] sm:$0xff] %v277
    %294 = vst [vmem:[#allocation2 + $0x8] sm:$0xff] %v278
    %295 = vst [vmem:[#allocation2 + $0x10] sm:$0xff] %v279
    %296 = vst [vmem:[#allocation2 + $0x18] sm:$0xff] %v280
    %297 = vst [vmem:[#allocation2 + $0x20] sm:$0xff] %v281
    %298 = vst [vmem:[#allocation2 + $0x28] sm:$0xff] %v282
    %299 = vst [vmem:[#allocation2 + $0x30] sm:$0xff] %v283
    %300 = vst [vmem:[#allocation2 + $0x38] sm:$0xff] %v284
    %301 = vst [vmem:[#allocation2 + $0x40] sm:$0xff] %v285
    %302 = vst [vmem:[#allocation2 + $0x48] sm:$0xff] %v286
    %303 = vst [vmem:[#allocation2 + $0x50] sm:$0xff] %v287
    %304 = vst [vmem:[#allocation2 + $0x58] sm:$0xff] %v288
    %305 = vst [vmem:[#allocation2 + $0x60] sm:$0xff] %v289
    %306 = vst [vmem:[#allocation2 + $0x68] sm:$0xff] %v290
    %307 = vst [vmem:[#allocation2 + $0x70] sm:$0xff] %v291
    %308 = vst [vmem:[#allocation2 + $0x78] sm:$0xff] %v292
    // Predicated region
    $region18: #{lstm_model_forward.5} parent=1 // pred_check
      %p309 = pneg %p16
    $region19: #{lstm_model_forward.5} parent=1 // pred_check_branch
      %311 = sbr.rel (%p309) target = $region21
    $region20: #{lstm_model_forward.5} parent=1 // pred_region
      %v312 = vld [vmem:[#allocation2] sm:$0xff]
      %v313 = vld [vmem:[#allocation2 + $0x8] sm:$0xff]
      %v314 = vld [vmem:[#allocation2 + $0x10] sm:$0xff]
      %v315 = vld [vmem:[#allocation2 + $0x18] sm:$0xff]
      %v316 = vld [vmem:[#allocation2 + $0x20] sm:$0xff]
      %v317 = vld [vmem:[#allocation2 + $0x28] sm:$0xff]
      %v318 = vld [vmem:[#allocation2 + $0x30] sm:$0xff]
      %v319 = vld [vmem:[#allocation2 + $0x38] sm:$0xff]
      %v320 = vld [vmem:[#allocation2 + $0x40] sm:$0xff]
      %v321 = vld [vmem:[#allocation2 + $0x48] sm:$0xff]
      %v322 = vld [vmem:[#allocation2 + $0x50] sm:$0xff]
      %v323 = vld [vmem:[#allocation2 + $0x58] sm:$0xff]
      %v324 = vld [vmem:[#allocation2 + $0x60] sm:$0xff]
      %v325 = vld [vmem:[#allocation2 + $0x68] sm:$0xff]
      %v326 = vld [vmem:[#allocation2 + $0x70] sm:$0xff]
      %v327 = vld [vmem:[#allocation2 + $0x78] sm:$0xff]
      %v328 = vld [vmem:[%s2] sm:$0x1]
      %v330 = vlaneseq
      %v331 = vshrl.u32 %v330, 7
      %v332 = vsub.s32 0, %v331
      %v333 = vrot.slane %v328, %v332
      %v335 = vadd.f32 %v312, %v333
      %v336 = vadd.f32 %v313, %v333
      %v337 = vadd.f32 %v314, %v333
      %v338 = vadd.f32 %v315, %v333
      %v339 = vadd.f32 %v316, %v333
      %v340 = vadd.f32 %v317, %v333
      %v341 = vadd.f32 %v318, %v333
      %v342 = vadd.f32 %v319, %v333
      %v343 = vadd.f32 %v320, %v333
      %v344 = vadd.f32 %v321, %v333
      %v345 = vadd.f32 %v322, %v333
      %v346 = vadd.f32 %v323, %v333
      %v347 = vadd.f32 %v324, %v333
      %v348 = vadd.f32 %v325, %v333
      %v349 = vadd.f32 %v326, %v333
      %v350 = vadd.f32 %v327, %v333
      %351 = vst [vmem:[#allocation3] sm:$0xff] %v335
      %352 = vst [vmem:[#allocation3 + $0x8] sm:$0xff] %v336
      %353 = vst [vmem:[#allocation3 + $0x10] sm:$0xff] %v337
      %354 = vst [vmem:[#allocation3 + $0x18] sm:$0xff] %v338
      %355 = vst [vmem:[#allocation3 + $0x20] sm:$0xff] %v339
      %356 = vst [vmem:[#allocation3 + $0x28] sm:$0xff] %v340
      %357 = vst [vmem:[#allocation3 + $0x30] sm:$0xff] %v341
      %358 = vst [vmem:[#allocation3 + $0x38] sm:$0xff] %v342
      %359 = vst [vmem:[#allocation3 + $0x40] sm:$0xff] %v343
      %360 = vst [vmem:[#allocation3 + $0x48] sm:$0xff] %v344
      %361 = vst [vmem:[#allocation3 + $0x50] sm:$0xff] %v345
      %362 = vst [vmem:[#allocation3 + $0x58] sm:$0xff] %v346
      %363 = vst [vmem:[#allocation3 + $0x60] sm:$0xff] %v347
      %364 = vst [vmem:[#allocation3 + $0x68] sm:$0xff] %v348
      %365 = vst [vmem:[#allocation3 + $0x70] sm:$0xff] %v349
      %366 = vst [vmem:[#allocation3 + $0x78] sm:$0xff] %v350
    $region21: #{lstm_model_forward.5} parent=1 // pred_fallthru
      _
    // Predicated region
    $region22: #{lstm_model_forward.5} parent=1 // pred_check
      _
    $region23: #{lstm_model_forward.5} parent=1 // pred_check_branch
      %368 = sbr.rel (0) target = $region25
    $region24: #{lstm_model_forward.5} parent=1 // pred_region
      %s370 = ssub.s32 2048, 2048
      %371 = vsyncadd [#allocation4], %s370
      %s372 = sshll.u32 [#allocation3], 4
      %s373 = int_to_ptr.vmem [resolvable:$true] %s372
      %378 = dma.vmem_to_hbm [thread:$0]  %s373, 2048, %s3, [#allocation4], 128, 128, 8
    $region25: #{lstm_model_forward.5} parent=1 // pred_fallthru
      _
    // Predicated region
    $region26: #{lstm_model_forward.5} parent=1 // pred_check
      _
    $region27: #{lstm_model_forward.5} parent=1 // pred_check_branch
      %380 = sbr.rel (0) target = $region29
    $region28: #{lstm_model_forward.5} parent=1 // pred_region
      %381 = dma.done [#allocation4], 2048
    $region29: #{lstm_model_forward.5} parent=1 // pred_fallthru
      _
    %382 = vsyncpa [#allocation4], 1

// kernel: lstm_model_forward.3
$region0: #{lstm_model_forward.3}
  #allocation0 [shape = 'u32[]', space=smem, size = 0x4, offset = 0x4, fixed_abs, tag = 'smem constant byte address 0x4 - core index']
  #allocation1 [shape = 'u32[144,128]{1,0:T(1,128)}', space=vmem, size = 0x12000, scoped, tag = 'internal scratch']
  #allocation2 [shape = 'f32[128,512]{1,0:T(8,128)}', space=vmem, size = 0x40000, scoped, tag = 'scratch operand']
  %s0 = inlined_call_operand.vmem [shape: f32[128,128], index: 0, kind: input, shape index: {}]
  %s1 = inlined_call_operand.vmem [shape: bf16[128,512], index: 1, kind: input, shape index: {}]
  %s2 = inlined_call_operand.vmem [shape: f32[1,512], index: 2, kind: input, shape index: {}]
  %s3 = inlined_call_operand.vmem [shape: bf16[128,512], index: 3, kind: output, shape index: {}]
  %s4 = sld [smem:[#allocation0]]
  $region30: #{lstm_model_forward.3} parent=0
    _
  %s6 = ssub.s32 1, %s4
  %s7 = scalar_select 0, %s6, %s4
  // Predicated region
  $region2: #{lstm_model_forward.3} parent=0 // pred_check
    _
  $region3: #{lstm_model_forward.3} parent=0 // pred_check_branch
    %9 = sbr.rel (0) target = $region5
  $region4: #{lstm_model_forward.3} parent=0 // pred_region
    _
  $region5: #{lstm_model_forward.3} parent=0 // pred_fallthru
    _
  // Predicated region
  $region6: #{lstm_model_forward.3} parent=0 // pred_check
    _
  $region7: #{lstm_model_forward.3} parent=0 // pred_check_branch
    %11 = sbr.rel (0) target = $region9
  $region8: #{lstm_model_forward.3} parent=0 // pred_region
    _
  $region9: #{lstm_model_forward.3} parent=0 // pred_fallthru
    _
  // Predicated region
  $region10: #{lstm_model_forward.3} parent=0 // pred_check
    _
  $region11: #{lstm_model_forward.3} parent=0 // pred_check_branch
    %13 = sbr.rel (0) target = $region13
  $region12: #{lstm_model_forward.3} parent=0 // pred_region
    _
  $region13: #{lstm_model_forward.3} parent=0 // pred_fallthru
    _
  %p15 = scmp.eq.s32.totalorder 0, 0
  // Predicated region
  $region14: #{lstm_model_forward.3} parent=0 // pred_check
    %p16 = pneg %p15
  $region15: #{lstm_model_forward.3} parent=0 // pred_check_branch
    %18 = sbr.rel (%p16) target = $region17
  $region16: #{lstm_model_forward.3} parent=0 // pred_region
    %19 = vst [vmem:[#allocation2] sm:$0xff] 0.0
    %20 = vst [vmem:[#allocation2 + $0x8] sm:$0xff] 0.0
    %21 = vst [vmem:[#allocation2 + $0x10] sm:$0xff] 0.0
    %22 = vst [vmem:[#allocation2 + $0x18] sm:$0xff] 0.0
    %23 = vst [vmem:[#allocation2 + $0x20] sm:$0xff] 0.0
    %24 = vst [vmem:[#allocation2 + $0x28] sm:$0xff] 0.0
    %25 = vst [vmem:[#allocation2 + $0x30] sm:$0xff] 0.0
    %26 = vst [vmem:[#allocation2 + $0x38] sm:$0xff] 0.0
    %27 = vst [vmem:[#allocation2 + $0x40] sm:$0xff] 0.0
    %28 = vst [vmem:[#allocation2 + $0x48] sm:$0xff] 0.0
    %29 = vst [vmem:[#allocation2 + $0x50] sm:$0xff] 0.0
    %30 = vst [vmem:[#allocation2 + $0x58] sm:$0xff] 0.0
    %31 = vst [vmem:[#allocation2 + $0x60] sm:$0xff] 0.0
    %32 = vst [vmem:[#allocation2 + $0x68] sm:$0xff] 0.0
    %33 = vst [vmem:[#allocation2 + $0x70] sm:$0xff] 0.0
    %34 = vst [vmem:[#allocation2 + $0x78] sm:$0xff] 0.0
    %35 = vst [vmem:[#allocation2 + $0x80] sm:$0xff] 0.0
    %36 = vst [vmem:[#allocation2 + $0x88] sm:$0xff] 0.0
    %37 = vst [vmem:[#allocation2 + $0x90] sm:$0xff] 0.0
    %38 = vst [vmem:[#allocation2 + $0x98] sm:$0xff] 0.0
    %39 = vst [vmem:[#allocation2 + $0xa0] sm:$0xff] 0.0
    %40 = vst [vmem:[#allocation2 + $0xa8] sm:$0xff] 0.0
    %41 = vst [vmem:[#allocation2 + $0xb0] sm:$0xff] 0.0
    %42 = vst [vmem:[#allocation2 + $0xb8] sm:$0xff] 0.0
    %43 = vst [vmem:[#allocation2 + $0xc0] sm:$0xff] 0.0
    %44 = vst [vmem:[#allocation2 + $0xc8] sm:$0xff] 0.0
    %45 = vst [vmem:[#allocation2 + $0xd0] sm:$0xff] 0.0
    %46 = vst [vmem:[#allocation2 + $0xd8] sm:$0xff] 0.0
    %47 = vst [vmem:[#allocation2 + $0xe0] sm:$0xff] 0.0
    %48 = vst [vmem:[#allocation2 + $0xe8] sm:$0xff] 0.0
    %49 = vst [vmem:[#allocation2 + $0xf0] sm:$0xff] 0.0
    %50 = vst [vmem:[#allocation2 + $0xf8] sm:$0xff] 0.0
    %51 = vst [vmem:[#allocation2 + $0x100] sm:$0xff] 0.0
    %52 = vst [vmem:[#allocation2 + $0x108] sm:$0xff] 0.0
    %53 = vst [vmem:[#allocation2 + $0x110] sm:$0xff] 0.0
    %54 = vst [vmem:[#allocation2 + $0x118] sm:$0xff] 0.0
    %55 = vst [vmem:[#allocation2 + $0x120] sm:$0xff] 0.0
    %56 = vst [vmem:[#allocation2 + $0x128] sm:$0xff] 0.0
    %57 = vst [vmem:[#allocation2 + $0x130] sm:$0xff] 0.0
    %58 = vst [vmem:[#allocation2 + $0x138] sm:$0xff] 0.0
    %59 = vst [vmem:[#allocation2 + $0x140] sm:$0xff] 0.0
    %60 = vst [vmem:[#allocation2 + $0x148] sm:$0xff] 0.0
    %61 = vst [vmem:[#allocation2 + $0x150] sm:$0xff] 0.0
    %62 = vst [vmem:[#allocation2 + $0x158] sm:$0xff] 0.0
    %63 = vst [vmem:[#allocation2 + $0x160] sm:$0xff] 0.0
    %64 = vst [vmem:[#allocation2 + $0x168] sm:$0xff] 0.0
    %65 = vst [vmem:[#allocation2 + $0x170] sm:$0xff] 0.0
    %66 = vst [vmem:[#allocation2 + $0x178] sm:$0xff] 0.0
    %67 = vst [vmem:[#allocation2 + $0x180] sm:$0xff] 0.0
    %68 = vst [vmem:[#allocation2 + $0x188] sm:$0xff] 0.0
    %69 = vst [vmem:[#allocation2 + $0x190] sm:$0xff] 0.0
    %70 = vst [vmem:[#allocation2 + $0x198] sm:$0xff] 0.0
    %71 = vst [vmem:[#allocation2 + $0x1a0] sm:$0xff] 0.0
    %72 = vst [vmem:[#allocation2 + $0x1a8] sm:$0xff] 0.0
    %73 = vst [vmem:[#allocation2 + $0x1b0] sm:$0xff] 0.0
    %74 = vst [vmem:[#allocation2 + $0x1b8] sm:$0xff] 0.0
    %75 = vst [vmem:[#allocation2 + $0x1c0] sm:$0xff] 0.0
    %76 = vst [vmem:[#allocation2 + $0x1c8] sm:$0xff] 0.0
    %77 = vst [vmem:[#allocation2 + $0x1d0] sm:$0xff] 0.0
    %78 = vst [vmem:[#allocation2 + $0x1d8] sm:$0xff] 0.0
    %79 = vst [vmem:[#allocation2 + $0x1e0] sm:$0xff] 0.0
    %80 = vst [vmem:[#allocation2 + $0x1e8] sm:$0xff] 0.0
    %81 = vst [vmem:[#allocation2 + $0x1f0] sm:$0xff] 0.0
    %82 = vst [vmem:[#allocation2 + $0x1f8] sm:$0xff] 0.0
  $region17: #{lstm_model_forward.3} parent=0 // pred_fallthru
    _
  %v83 = vld [vmem:[#allocation2] sm:$0xff]
  %v84 = vld [vmem:[#allocation2 + $0x8] sm:$0xff]
  %v85 = vld [vmem:[#allocation2 + $0x10] sm:$0xff]
  %v86 = vld [vmem:[#allocation2 + $0x18] sm:$0xff]
  %v87 = vld [vmem:[#allocation2 + $0x20] sm:$0xff]
  %v88 = vld [vmem:[#allocation2 + $0x28] sm:$0xff]
  %v89 = vld [vmem:[#allocation2 + $0x30] sm:$0xff]
  %v90 = vld [vmem:[#allocation2 + $0x38] sm:$0xff]
  %v91 = vld [vmem:[#allocation2 + $0x40] sm:$0xff]
  %v92 = vld [vmem:[#allocation2 + $0x48] sm:$0xff]
  %v93 = vld [vmem:[#allocation2 + $0x50] sm:$0xff]
  %v94 = vld [vmem:[#allocation2 + $0x58] sm:$0xff]
  %v95 = vld [vmem:[#allocation2 + $0x60] sm:$0xff]
  %v96 = vld [vmem:[#allocation2 + $0x68] sm:$0xff]
  %v97 = vld [vmem:[#allocation2 + $0x70] sm:$0xff]
  %v98 = vld [vmem:[#allocation2 + $0x78] sm:$0xff]
  %v99 = vld [vmem:[#allocation2 + $0x80] sm:$0xff]
  %v100 = vld [vmem:[#allocation2 + $0x88] sm:$0xff]
  %v101 = vld [vmem:[#allocation2 + $0x90] sm:$0xff]
  %v102 = vld [vmem:[#allocation2 + $0x98] sm:$0xff]
  %v103 = vld [vmem:[#allocation2 + $0xa0] sm:$0xff]
  %v104 = vld [vmem:[#allocation2 + $0xa8] sm:$0xff]
  %v105 = vld [vmem:[#allocation2 + $0xb0] sm:$0xff]
  %v106 = vld [vmem:[#allocation2 + $0xb8] sm:$0xff]
  %v107 = vld [vmem:[#allocation2 + $0xc0] sm:$0xff]
  %v108 = vld [vmem:[#allocation2 + $0xc8] sm:$0xff]
  %v109 = vld [vmem:[#allocation2 + $0xd0] sm:$0xff]
  %v110 = vld [vmem:[#allocation2 + $0xd8] sm:$0xff]
  %v111 = vld [vmem:[#allocation2 + $0xe0] sm:$0xff]
  %v112 = vld [vmem:[#allocation2 + $0xe8] sm:$0xff]
  %v113 = vld [vmem:[#allocation2 + $0xf0] sm:$0xff]
  %v114 = vld [vmem:[#allocation2 + $0xf8] sm:$0xff]
  %v115 = vld [vmem:[#allocation2 + $0x100] sm:$0xff]
  %v116 = vld [vmem:[#allocation2 + $0x108] sm:$0xff]
  %v117 = vld [vmem:[#allocation2 + $0x110] sm:$0xff]
  %v118 = vld [vmem:[#allocation2 + $0x118] sm:$0xff]
  %v119 = vld [vmem:[#allocation2 + $0x120] sm:$0xff]
  %v120 = vld [vmem:[#allocation2 + $0x128] sm:$0xff]
  %v121 = vld [vmem:[#allocation2 + $0x130] sm:$0xff]
  %v122 = vld [vmem:[#allocation2 + $0x138] sm:$0xff]
  %v123 = vld [vmem:[#allocation2 + $0x140] sm:$0xff]
  %v124 = vld [vmem:[#allocation2 + $0x148] sm:$0xff]
  %v125 = vld [vmem:[#allocation2 + $0x150] sm:$0xff]
  %v126 = vld [vmem:[#allocation2 + $0x158] sm:$0xff]
  %v127 = vld [vmem:[#allocation2 + $0x160] sm:$0xff]
  %v128 = vld [vmem:[#allocation2 + $0x168] sm:$0xff]
  %v129 = vld [vmem:[#allocation2 + $0x170] sm:$0xff]
  %v130 = vld [vmem:[#allocation2 + $0x178] sm:$0xff]
  %v131 = vld [vmem:[#allocation2 + $0x180] sm:$0xff]
  %v132 = vld [vmem:[#allocation2 + $0x188] sm:$0xff]
  %v133 = vld [vmem:[#allocation2 + $0x190] sm:$0xff]
  %v134 = vld [vmem:[#allocation2 + $0x198] sm:$0xff]
  %v135 = vld [vmem:[#allocation2 + $0x1a0] sm:$0xff]
  %v136 = vld [vmem:[#allocation2 + $0x1a8] sm:$0xff]
  %v137 = vld [vmem:[#allocation2 + $0x1b0] sm:$0xff]
  %v138 = vld [vmem:[#allocation2 + $0x1b8] sm:$0xff]
  %v139 = vld [vmem:[#allocation2 + $0x1c0] sm:$0xff]
  %v140 = vld [vmem:[#allocation2 + $0x1c8] sm:$0xff]
  %v141 = vld [vmem:[#allocation2 + $0x1d0] sm:$0xff]
  %v142 = vld [vmem:[#allocation2 + $0x1d8] sm:$0xff]
  %v143 = vld [vmem:[#allocation2 + $0x1e0] sm:$0xff]
  %v144 = vld [vmem:[#allocation2 + $0x1e8] sm:$0xff]
  %v145 = vld [vmem:[#allocation2 + $0x1f0] sm:$0xff]
  %v146 = vld [vmem:[#allocation2 + $0x1f8] sm:$0xff]
  %v147 = vld [vmem:[%s0] sm:$0xff]
  %v148 = vld [vmem:[%s0 + $0x8] sm:$0xff]
  %v149 = vld [vmem:[%s0 + $0x10] sm:$0xff]
  %v150 = vld [vmem:[%s0 + $0x18] sm:$0xff]
  %v151 = vld [vmem:[%s0 + $0x20] sm:$0xff]
  %v152 = vld [vmem:[%s0 + $0x28] sm:$0xff]
  %v153 = vld [vmem:[%s0 + $0x30] sm:$0xff]
  %v154 = vld [vmem:[%s0 + $0x38] sm:$0xff]
  %v155 = vld [vmem:[%s0 + $0x40] sm:$0xff]
  %v156 = vld [vmem:[%s0 + $0x48] sm:$0xff]
  %v157 = vld [vmem:[%s0 + $0x50] sm:$0xff]
  %v158 = vld [vmem:[%s0 + $0x58] sm:$0xff]
  %v159 = vld [vmem:[%s0 + $0x60] sm:$0xff]
  %v160 = vld [vmem:[%s0 + $0x68] sm:$0xff]
  %v161 = vld [vmem:[%s0 + $0x70] sm:$0xff]
  %v162 = vld [vmem:[%s0 + $0x78] sm:$0xff]
  %v163 = vpack.c.bf16 %v148, %v147
  %v164 = vpack.c.bf16 %v150, %v149
  %v165 = vpack.c.bf16 %v152, %v151
  %v166 = vpack.c.bf16 %v154, %v153
  %v167 = vpack.c.bf16 %v156, %v155
  %v168 = vpack.c.bf16 %v158, %v157
  %v169 = vpack.c.bf16 %v160, %v159
  %v170 = vpack.c.bf16 %v162, %v161
  %v171 = vld [vmem:[%s1] sm:$0xff]
  %v172 = vld [vmem:[%s1 + $0x8] sm:$0xff]
  %v173 = vld [vmem:[%s1 + $0x10] sm:$0xff]
  %v174 = vld [vmem:[%s1 + $0x18] sm:$0xff]
  %v175 = vld [vmem:[%s1 + $0x20] sm:$0xff]
  %v176 = vld [vmem:[%s1 + $0x28] sm:$0xff]
  %v177 = vld [vmem:[%s1 + $0x30] sm:$0xff]
  %v178 = vld [vmem:[%s1 + $0x38] sm:$0xff]
  %v179 = vld [vmem:[%s1 + $0x40] sm:$0xff]
  %v180 = vld [vmem:[%s1 + $0x48] sm:$0xff]
  %v181 = vld [vmem:[%s1 + $0x50] sm:$0xff]
  %v182 = vld [vmem:[%s1 + $0x58] sm:$0xff]
  %v183 = vld [vmem:[%s1 + $0x60] sm:$0xff]
  %v184 = vld [vmem:[%s1 + $0x68] sm:$0xff]
  %v185 = vld [vmem:[%s1 + $0x70] sm:$0xff]
  %v186 = vld [vmem:[%s1 + $0x78] sm:$0xff]
  %v187 = vld [vmem:[%s1 + $0x80] sm:$0xff]
  %v188 = vld [vmem:[%s1 + $0x88] sm:$0xff]
  %v189 = vld [vmem:[%s1 + $0x90] sm:$0xff]
  %v190 = vld [vmem:[%s1 + $0x98] sm:$0xff]
  %v191 = vld [vmem:[%s1 + $0xa0] sm:$0xff]
  %v192 = vld [vmem:[%s1 + $0xa8] sm:$0xff]
  %v193 = vld [vmem:[%s1 + $0xb0] sm:$0xff]
  %v194 = vld [vmem:[%s1 + $0xb8] sm:$0xff]
  %v195 = vld [vmem:[%s1 + $0xc0] sm:$0xff]
  %v196 = vld [vmem:[%s1 + $0xc8] sm:$0xff]
  %v197 = vld [vmem:[%s1 + $0xd0] sm:$0xff]
  %v198 = vld [vmem:[%s1 + $0xd8] sm:$0xff]
  %v199 = vld [vmem:[%s1 + $0xe0] sm:$0xff]
  %v200 = vld [vmem:[%s1 + $0xe8] sm:$0xff]
  %v201 = vld [vmem:[%s1 + $0xf0] sm:$0xff]
  %v202 = vld [vmem:[%s1 + $0xf8] sm:$0xff]
  %v235 = vunpack.c.l.b16 %v171
  %v236 = vunpack.c.h.b16 %v171
  %v237 = vunpack.c.l.b16 %v172
  %v238 = vunpack.c.h.b16 %v172
  %v239 = vunpack.c.l.b16 %v173
  %v240 = vunpack.c.h.b16 %v173
  %v241 = vunpack.c.l.b16 %v174
  %v242 = vunpack.c.h.b16 %v174
  %v243 = vunpack.c.l.b16 %v175
  %v244 = vunpack.c.h.b16 %v175
  %v245 = vunpack.c.l.b16 %v176
  %v246 = vunpack.c.h.b16 %v176
  %v247 = vunpack.c.l.b16 %v177
  %v248 = vunpack.c.h.b16 %v177
  %v249 = vunpack.c.l.b16 %v178
  %v250 = vunpack.c.h.b16 %v178
  %v251 = vunpack.c.l.b16 %v179
  %v252 = vunpack.c.h.b16 %v179
  %v253 = vunpack.c.l.b16 %v180
  %v254 = vunpack.c.h.b16 %v180
  %v255 = vunpack.c.l.b16 %v181
  %v256 = vunpack.c.h.b16 %v181
  %v257 = vunpack.c.l.b16 %v182
  %v258 = vunpack.c.h.b16 %v182
  %v259 = vunpack.c.l.b16 %v183
  %v260 = vunpack.c.h.b16 %v183
  %v261 = vunpack.c.l.b16 %v184
  %v262 = vunpack.c.h.b16 %v184
  %v263 = vunpack.c.l.b16 %v185
  %v264 = vunpack.c.h.b16 %v185
  %v265 = vunpack.c.l.b16 %v186
  %v266 = vunpack.c.h.b16 %v186
  %v267 = vunpack.c.l.b16 %v187
  %v268 = vunpack.c.h.b16 %v187
  %v269 = vunpack.c.l.b16 %v188
  %v270 = vunpack.c.h.b16 %v188
  %v271 = vunpack.c.l.b16 %v189
  %v272 = vunpack.c.h.b16 %v189
  %v273 = vunpack.c.l.b16 %v190
  %v274 = vunpack.c.h.b16 %v190
  %v275 = vunpack.c.l.b16 %v191
  %v276 = vunpack.c.h.b16 %v191
  %v277 = vunpack.c.l.b16 %v192
  %v278 = vunpack.c.h.b16 %v192
  %v279 = vunpack.c.l.b16 %v193
  %v280 = vunpack.c.h.b16 %v193
  %v281 = vunpack.c.l.b16 %v194
  %v282 = vunpack.c.h.b16 %v194
  %v283 = vunpack.c.l.b16 %v195
  %v284 = vunpack.c.h.b16 %v195
  %v285 = vunpack.c.l.b16 %v196
  %v286 = vunpack.c.h.b16 %v196
  %v287 = vunpack.c.l.b16 %v197
  %v288 = vunpack.c.h.b16 %v197
  %v289 = vunpack.c.l.b16 %v198
  %v290 = vunpack.c.h.b16 %v198
  %v291 = vunpack.c.l.b16 %v199
  %v292 = vunpack.c.h.b16 %v199
  %v293 = vunpack.c.l.b16 %v200
  %v294 = vunpack.c.h.b16 %v200
  %v295 = vunpack.c.l.b16 %v201
  %v296 = vunpack.c.h.b16 %v201
  %v297 = vunpack.c.l.b16 %v202
  %v298 = vunpack.c.h.b16 %v202
  %v299 = vpack.c.b16 %v239, %v235
  %v300 = vpack.c.b16 %v240, %v236
  %v301 = vpack.c.b16 %v241, %v237
  %v302 = vpack.c.b16 %v242, %v238
  %v303 = vpack.c.b16 %v247, %v243
  %v304 = vpack.c.b16 %v248, %v244
  %v305 = vpack.c.b16 %v249, %v245
  %v306 = vpack.c.b16 %v250, %v246
  %v307 = vpack.c.b16 %v255, %v251
  %v308 = vpack.c.b16 %v256, %v252
  %v309 = vpack.c.b16 %v257, %v253
  %v310 = vpack.c.b16 %v258, %v254
  %v311 = vpack.c.b16 %v263, %v259
  %v312 = vpack.c.b16 %v264, %v260
  %v313 = vpack.c.b16 %v265, %v261
  %v314 = vpack.c.b16 %v266, %v262
  %v315 = vpack.c.b16 %v271, %v267
  %v316 = vpack.c.b16 %v272, %v268
  %v317 = vpack.c.b16 %v273, %v269
  %v318 = vpack.c.b16 %v274, %v270
  %v319 = vpack.c.b16 %v279, %v275
  %v320 = vpack.c.b16 %v280, %v276
  %v321 = vpack.c.b16 %v281, %v277
  %v322 = vpack.c.b16 %v282, %v278
  %v323 = vpack.c.b16 %v287, %v283
  %v324 = vpack.c.b16 %v288, %v284
  %v325 = vpack.c.b16 %v289, %v285
  %v326 = vpack.c.b16 %v290, %v286
  %v327 = vpack.c.b16 %v295, %v291
  %v328 = vpack.c.b16 %v296, %v292
  %v329 = vpack.c.b16 %v297, %v293
  %v330 = vpack.c.b16 %v298, %v294
  %363 = vmatprep.subr.bf16.mxu0 %v300
  %364 = vmatpush1.bf16.msra.mxu0 %v299
  %365 = vmatprep.subr.bf16.mxu0 %v304
  %366 = vmatpush1.bf16.msra.mxu0 %v303
  %367 = vmatprep.subr.bf16.mxu0 %v308
  %368 = vmatpush1.bf16.msra.mxu0 %v307
  %369 = vmatprep.subr.bf16.mxu0 %v312
  %370 = vmatpush1.bf16.msra.mxu0 %v311
  %371 = vmatprep.subr.bf16.mxu0 %v316
  %372 = vmatpush1.bf16.msra.mxu0 %v315
  %373 = vmatprep.subr.bf16.mxu0 %v320
  %374 = vmatpush1.bf16.msra.mxu0 %v319
  %375 = vmatprep.subr.bf16.mxu0 %v324
  %376 = vmatpush1.bf16.msra.mxu0 %v323
  %377 = vmatprep.subr.bf16.mxu0 %v328
  %378 = vmatpush1.bf16.msra.mxu0 %v327
  %379 = vmatprep.subr.bf16.mxu0 0
  %380 = vmatpush1.bf16.msra.mxu0 0
  %381 = vmatprep.subr.bf16.mxu0 0
  %382 = vmatpush1.bf16.msra.mxu0 0
  %383 = vmatprep.subr.bf16.mxu0 0
  %384 = vmatpush1.bf16.msra.mxu0 0
  %385 = vmatprep.subr.bf16.mxu0 0
  %386 = vmatpush1.bf16.msra.mxu0 0
  %387 = vmatprep.subr.bf16.mxu0 0
  %388 = vmatpush1.bf16.msra.mxu0 0
  %389 = vmatprep.subr.bf16.mxu0 0
  %390 = vmatpush1.bf16.msra.mxu0 0
  %391 = vmatprep.subr.bf16.mxu0 0
  %392 = vmatpush1.bf16.msra.mxu0 0
  %393 = vmatprep.subr.bf16.mxu0 0
  %394 = vmatpush1.bf16.msra.mxu0 0
  %395 = vmatprep.mubr.bf16.mxu0 0
  %396 = vmatmul.mubr.bf16.gmra.mrb[0].mxu0 %v163
  %v397 = vpop.f32.mrb[0].mxu0
  %v398 = vadd.f32 0.0, %v397
  %v399 = vpop.f32.mrb[0].mxu0
  %v400 = vadd.f32 0.0, %v399
  %v401 = vpop.f32.mrb[0].mxu0
  %v402 = vadd.f32 0.0, %v401
  %v403 = vpop.f32.mrb[0].mxu0
  %v404 = vadd.f32 0.0, %v403
  %405 = vmatprep.mubr.bf16.mxu0 0
  %406 = vmatmul.mubr.bf16.gmra.mrb[0].mxu0 %v164
  %v407 = vpop.f32.mrb[0].mxu0
  %v408 = vadd.f32 0.0, %v407
  %v409 = vpop.f32.mrb[0].mxu0
  %v410 = vadd.f32 0.0, %v409
  %v411 = vpop.f32.mrb[0].mxu0
  %v412 = vadd.f32 0.0, %v411
  %v413 = vpop.f32.mrb[0].mxu0
  %v414 = vadd.f32 0.0, %v413
  %415 = vmatprep.mubr.bf16.mxu0 0
  %416 = vmatmul.mubr.bf16.gmra.mrb[0].mxu0 %v165
  %v417 = vpop.f32.mrb[0].mxu0
  %v418 = vadd.f32 0.0, %v417
  %v419 = vpop.f32.mrb[0].mxu0
  %v420 = vadd.f32 0.0, %v419
  %v421 = vpop.f32.mrb[0].mxu0
  %v422 = vadd.f32 0.0, %v421
  %v423 = vpop.f32.mrb[0].mxu0
  %v424 = vadd.f32 0.0, %v423
  %425 = vmatprep.mubr.bf16.mxu0 0
  %426 = vmatmul.mubr.bf16.gmra.mrb[0].mxu0 %v166
  %v427 = vpop.f32.mrb[0].mxu0
  %v428 = vadd.f32 0.0, %v427
  %v429 = vpop.f32.mrb[0].mxu0
  %v430 = vadd.f32 0.0, %v429
  %v431 = vpop.f32.mrb[0].mxu0
  %v432 = vadd.f32 0.0, %v431
  %v433 = vpop.f32.mrb[0].mxu0
  %v434 = vadd.f32 0.0, %v433
  %435 = vmatprep.mubr.bf16.mxu0 0
  %436 = vmatmul.mubr.bf16.gmra.mrb[0].mxu0 %v167
  %v437 = vpop.f32.mrb[0].mxu0
  %v438 = vadd.f32 0.0, %v437
  %v439 = vpop.f32.mrb[0].mxu0
  %v440 = vadd.f32 0.0, %v439
  %v441 = vpop.f32.mrb[0].mxu0
  %v442 = vadd.f32 0.0, %v441
  %v443 = vpop.f32.mrb[0].mxu0
  %v444 = vadd.f32 0.0, %v443
  %445 = vmatprep.mubr.bf16.mxu0 0
  %446 = vmatmul.mubr.bf16.gmra.mrb[0].mxu0 %v168
  %v447 = vpop.f32.mrb[0].mxu0
  %v448 = vadd.f32 0.0, %v447
  %v449 = vpop.f32.mrb[0].mxu0
  %v450 = vadd.f32 0.0, %v449
  %v451 = vpop.f32.mrb[0].mxu0
  %v452 = vadd.f32 0.0, %v451
  %v453 = vpop.f32.mrb[0].mxu0
  %v454 = vadd.f32 0.0, %v453
  %455 = vmatprep.mubr.bf16.mxu0 0
  %456 = vmatmul.mubr.bf16.gmra.mrb[0].mxu0 %v169
  %v457 = vpop.f32.mrb[0].mxu0
  %v458 = vadd.f32 0.0, %v457
  %v459 = vpop.f32.mrb[0].mxu0
  %v460 = vadd.f32 0.0, %v459
  %v461 = vpop.f32.mrb[0].mxu0
  %v462 = vadd.f32 0.0, %v461
  %v463 = vpop.f32.mrb[0].mxu0
  %v464 = vadd.f32 0.0, %v463
  %465 = vmatprep.mubr.bf16.mxu0 0
  %466 = vmatmul.mubr.bf16.gmra.mrb[0].mxu0 %v170
  %v467 = vpop.f32.mrb[0].mxu0
  %v468 = vadd.f32 0.0, %v467
  %v469 = vpop.f32.mrb[0].mxu0
  %v470 = vadd.f32 0.0, %v469
  %v471 = vpop.f32.mrb[0].mxu0
  %v472 = vadd.f32 0.0, %v471
  %v473 = vpop.f32.mrb[0].mxu0
  %v474 = vadd.f32 0.0, %v473
  %475 = vdwg.mxu0
  %476 = vmatprep.subr.bf16.mxu0 %v302
  %477 = vmatpush1.bf16.msra.mxu0 %v301
  %478 = vmatprep.subr.bf16.mxu0 %v306
  %479 = vmatpush1.bf16.msra.mxu0 %v305
  %480 = vmatprep.subr.bf16.mxu0 %v310
  %481 = vmatpush1.bf16.msra.mxu0 %v309
  %482 = vmatprep.subr.bf16.mxu0 %v314
  %483 = vmatpush1.bf16.msra.mxu0 %v313
  %484 = vmatprep.subr.bf16.mxu0 %v318
  %485 = vmatpush1.bf16.msra.mxu0 %v317
  %486 = vmatprep.subr.bf16.mxu0 %v322
  %487 = vmatpush1.bf16.msra.mxu0 %v321
  %488 = vmatprep.subr.bf16.mxu0 %v326
  %489 = vmatpush1.bf16.msra.mxu0 %v325
  %490 = vmatprep.subr.bf16.mxu0 %v330
  %491 = vmatpush1.bf16.msra.mxu0 %v329
  %492 = vmatprep.subr.bf16.mxu0 0
  %493 = vmatpush1.bf16.msra.mxu0 0
  %494 = vmatprep.subr.bf16.mxu0 0
  %495 = vmatpush1.bf16.msra.mxu0 0
  %496 = vmatprep.subr.bf16.mxu0 0
  %497 = vmatpush1.bf16.msra.mxu0 0
  %498 = vmatprep.subr.bf16.mxu0 0
  %499 = vmatpush1.bf16.msra.mxu0 0
  %500 = vmatprep.subr.bf16.mxu0 0
  %501 = vmatpush1.bf16.msra.mxu0 0
  %502 = vmatprep.subr.bf16.mxu0 0
  %503 = vmatpush1.bf16.msra.mxu0 0
  %504 = vmatprep.subr.bf16.mxu0 0
  %505 = vmatpush1.bf16.msra.mxu0 0
  %506 = vmatprep.subr.bf16.mxu0 0
  %507 = vmatpush1.bf16.msra.mxu0 0
  %508 = vmatprep.mubr.bf16.mxu0 0
  %509 = vmatmul.mubr.bf16.gmra.mrb[0].mxu0 %v163
  %v510 = vpop.f32.mrb[0].mxu0
  %v511 = vadd.f32 0.0, %v510
  %v512 = vpop.f32.mrb[0].mxu0
  %v513 = vadd.f32 0.0, %v512
  %v514 = vpop.f32.mrb[0].mxu0
  %v515 = vadd.f32 0.0, %v514
  %v516 = vpop.f32.mrb[0].mxu0
  %v517 = vadd.f32 0.0, %v516
  %518 = vmatprep.mubr.bf16.mxu0 0
  %519 = vmatmul.mubr.bf16.gmra.mrb[0].mxu0 %v164
  %v520 = vpop.f32.mrb[0].mxu0
  %v521 = vadd.f32 0.0, %v520
  %v522 = vpop.f32.mrb[0].mxu0
  %v523 = vadd.f32 0.0, %v522
  %v524 = vpop.f32.mrb[0].mxu0
  %v525 = vadd.f32 0.0, %v524
  %v526 = vpop.f32.mrb[0].mxu0
  %v527 = vadd.f32 0.0, %v526
  %528 = vmatprep.mubr.bf16.mxu0 0
  %529 = vmatmul.mubr.bf16.gmra.mrb[0].mxu0 %v165
  %v530 = vpop.f32.mrb[0].mxu0
  %v531 = vadd.f32 0.0, %v530
  %v532 = vpop.f32.mrb[0].mxu0
  %v533 = vadd.f32 0.0, %v532
  %v534 = vpop.f32.mrb[0].mxu0
  %v535 = vadd.f32 0.0, %v534
  %v536 = vpop.f32.mrb[0].mxu0
  %v537 = vadd.f32 0.0, %v536
  %538 = vmatprep.mubr.bf16.mxu0 0
  %539 = vmatmul.mubr.bf16.gmra.mrb[0].mxu0 %v166
  %v540 = vpop.f32.mrb[0].mxu0
  %v541 = vadd.f32 0.0, %v540
  %v542 = vpop.f32.mrb[0].mxu0
  %v543 = vadd.f32 0.0, %v542
  %v544 = vpop.f32.mrb[0].mxu0
  %v545 = vadd.f32 0.0, %v544
  %v546 = vpop.f32.mrb[0].mxu0
  %v547 = vadd.f32 0.0, %v546
  %548 = vmatprep.mubr.bf16.mxu0 0
  %549 = vmatmul.mubr.bf16.gmra.mrb[0].mxu0 %v167
  %v550 = vpop.f32.mrb[0].mxu0
  %v551 = vadd.f32 0.0, %v550
  %v552 = vpop.f32.mrb[0].mxu0
  %v553 = vadd.f32 0.0, %v552
  %v554 = vpop.f32.mrb[0].mxu0
  %v555 = vadd.f32 0.0, %v554
  %v556 = vpop.f32.mrb[0].mxu0
  %v557 = vadd.f32 0.0, %v556
  %558 = vmatprep.mubr.bf16.mxu0 0
  %559 = vmatmul.mubr.bf16.gmra.mrb[0].mxu0 %v168
  %v560 = vpop.f32.mrb[0].mxu0
  %v561 = vadd.f32 0.0, %v560
  %v562 = vpop.f32.mrb[0].mxu0
  %v563 = vadd.f32 0.0, %v562
  %v564 = vpop.f32.mrb[0].mxu0
  %v565 = vadd.f32 0.0, %v564
  %v566 = vpop.f32.mrb[0].mxu0
  %v567 = vadd.f32 0.0, %v566
  %568 = vmatprep.mubr.bf16.mxu0 0
  %569 = vmatmul.mubr.bf16.gmra.mrb[0].mxu0 %v169
  %v570 = vpop.f32.mrb[0].mxu0
  %v571 = vadd.f32 0.0, %v570
  %v572 = vpop.f32.mrb[0].mxu0
  %v573 = vadd.f32 0.0, %v572
  %v574 = vpop.f32.mrb[0].mxu0
  %v575 = vadd.f32 0.0, %v574
  %v576 = vpop.f32.mrb[0].mxu0
  %v577 = vadd.f32 0.0, %v576
  %578 = vmatprep.mubr.bf16.mxu0 0
  %579 = vmatmul.mubr.bf16.gmra.mrb[0].mxu0 %v170
  %v580 = vpop.f32.mrb[0].mxu0
  %v581 = vadd.f32 0.0, %v580
  %v582 = vpop.f32.mrb[0].mxu0
  %v583 = vadd.f32 0.0, %v582
  %v584 = vpop.f32.mrb[0].mxu0
  %v585 = vadd.f32 0.0, %v584
  %v586 = vpop.f32.mrb[0].mxu0
  %v587 = vadd.f32 0.0, %v586
  %588 = vdwg.mxu0
  %v589 = vadd.f32 %v83, %v398
  %v590 = vadd.f32 %v84, %v400
  %v591 = vadd.f32 %v85, %v511
  %v592 = vadd.f32 %v86, %v513
  %v593 = vadd.f32 %v87, %v402
  %v594 = vadd.f32 %v88, %v404
  %v595 = vadd.f32 %v89, %v515
  %v596 = vadd.f32 %v90, %v517
  %v597 = vadd.f32 %v91, %v408
  %v598 = vadd.f32 %v92, %v410
  %v599 = vadd.f32 %v93, %v521
  %v600 = vadd.f32 %v94, %v523
  %v601 = vadd.f32 %v95, %v412
  %v602 = vadd.f32 %v96, %v414
  %v603 = vadd.f32 %v97, %v525
  %v604 = vadd.f32 %v98, %v527
  %v605 = vadd.f32 %v99, %v418
  %v606 = vadd.f32 %v100, %v420
  %v607 = vadd.f32 %v101, %v531
  %v608 = vadd.f32 %v102, %v533
  %v609 = vadd.f32 %v103, %v422
  %v610 = vadd.f32 %v104, %v424
  %v611 = vadd.f32 %v105, %v535
  %v612 = vadd.f32 %v106, %v537
  %v613 = vadd.f32 %v107, %v428
  %v614 = vadd.f32 %v108, %v430
  %v615 = vadd.f32 %v109, %v541
  %v616 = vadd.f32 %v110, %v543
  %v617 = vadd.f32 %v111, %v432
  %v618 = vadd.f32 %v112, %v434
  %v619 = vadd.f32 %v113, %v545
  %v620 = vadd.f32 %v114, %v547
  %v621 = vadd.f32 %v115, %v438
  %v622 = vadd.f32 %v116, %v440
  %v623 = vadd.f32 %v117, %v551
  %v624 = vadd.f32 %v118, %v553
  %v625 = vadd.f32 %v119, %v442
  %v626 = vadd.f32 %v120, %v444
  %v627 = vadd.f32 %v121, %v555
  %v628 = vadd.f32 %v122, %v557
  %v629 = vadd.f32 %v123, %v448
  %v630 = vadd.f32 %v124, %v450
  %v631 = vadd.f32 %v125, %v561
  %v632 = vadd.f32 %v126, %v563
  %v633 = vadd.f32 %v127, %v452
  %v634 = vadd.f32 %v128, %v454
  %v635 = vadd.f32 %v129, %v565
  %v636 = vadd.f32 %v130, %v567
  %v637 = vadd.f32 %v131, %v458
  %v638 = vadd.f32 %v132, %v460
  %v639 = vadd.f32 %v133, %v571
  %v640 = vadd.f32 %v134, %v573
  %v641 = vadd.f32 %v135, %v462
  %v642 = vadd.f32 %v136, %v464
  %v643 = vadd.f32 %v137, %v575
  %v644 = vadd.f32 %v138, %v577
  %v645 = vadd.f32 %v139, %v468
  %v646 = vadd.f32 %v140, %v470
  %v647 = vadd.f32 %v141, %v581
  %v648 = vadd.f32 %v142, %v583
  %v649 = vadd.f32 %v143, %v472
  %v650 = vadd.f32 %v144, %v474
  %v651 = vadd.f32 %v145, %v585
  %v652 = vadd.f32 %v146, %v587
  %653 = vst [vmem:[#allocation2] sm:$0xff] %v589
  %654 = vst [vmem:[#allocation2 + $0x8] sm:$0xff] %v590
  %655 = vst [vmem:[#allocation2 + $0x10] sm:$0xff] %v591
  %656 = vst [vmem:[#allocation2 + $0x18] sm:$0xff] %v592
  %657 = vst [vmem:[#allocation2 + $0x20] sm:$0xff] %v593
  %658 = vst [vmem:[#allocation2 + $0x28] sm:$0xff] %v594
  %659 = vst [vmem:[#allocation2 + $0x30] sm:$0xff] %v595
  %660 = vst [vmem:[#allocation2 + $0x38] sm:$0xff] %v596
  %661 = vst [vmem:[#allocation2 + $0x40] sm:$0xff] %v597
  %662 = vst [vmem:[#allocation2 + $0x48] sm:$0xff] %v598
  %663 = vst [vmem:[#allocation2 + $0x50] sm:$0xff] %v599
  %664 = vst [vmem:[#allocation2 + $0x58] sm:$0xff] %v600
  %665 = vst [vmem:[#allocation2 + $0x60] sm:$0xff] %v601
  %666 = vst [vmem:[#allocation2 + $0x68] sm:$0xff] %v602
  %667 = vst [vmem:[#allocation2 + $0x70] sm:$0xff] %v603
  %668 = vst [vmem:[#allocation2 + $0x78] sm:$0xff] %v604
  %669 = vst [vmem:[#allocation2 + $0x80] sm:$0xff] %v605
  %670 = vst [vmem:[#allocation2 + $0x88] sm:$0xff] %v606
  %671 = vst [vmem:[#allocation2 + $0x90] sm:$0xff] %v607
  %672 = vst [vmem:[#allocation2 + $0x98] sm:$0xff] %v608
  %673 = vst [vmem:[#allocation2 + $0xa0] sm:$0xff] %v609
  %674 = vst [vmem:[#allocation2 + $0xa8] sm:$0xff] %v610
  %675 = vst [vmem:[#allocation2 + $0xb0] sm:$0xff] %v611
  %676 = vst [vmem:[#allocation2 + $0xb8] sm:$0xff] %v612
  %677 = vst [vmem:[#allocation2 + $0xc0] sm:$0xff] %v613
  %678 = vst [vmem:[#allocation2 + $0xc8] sm:$0xff] %v614
  %679 = vst [vmem:[#allocation2 + $0xd0] sm:$0xff] %v615
  %680 = vst [vmem:[#allocation2 + $0xd8] sm:$0xff] %v616
  %681 = vst [vmem:[#allocation2 + $0xe0] sm:$0xff] %v617
  %682 = vst [vmem:[#allocation2 + $0xe8] sm:$0xff] %v618
  %683 = vst [vmem:[#allocation2 + $0xf0] sm:$0xff] %v619
  %684 = vst [vmem:[#allocation2 + $0xf8] sm:$0xff] %v620
  %685 = vst [vmem:[#allocation2 + $0x100] sm:$0xff] %v621
  %686 = vst [vmem:[#allocation2 + $0x108] sm:$0xff] %v622
  %687 = vst [vmem:[#allocation2 + $0x110] sm:$0xff] %v623
  %688 = vst [vmem:[#allocation2 + $0x118] sm:$0xff] %v624
  %689 = vst [vmem:[#allocation2 + $0x120] sm:$0xff] %v625
  %690 = vst [vmem:[#allocation2 + $0x128] sm:$0xff] %v626
  %691 = vst [vmem:[#allocation2 + $0x130] sm:$0xff] %v627
  %692 = vst [vmem:[#allocation2 + $0x138] sm:$0xff] %v628
  %693 = vst [vmem:[#allocation2 + $0x140] sm:$0xff] %v629
  %694 = vst [vmem:[#allocation2 + $0x148] sm:$0xff] %v630
  %695 = vst [vmem:[#allocation2 + $0x150] sm:$0xff] %v631
  %696 = vst [vmem:[#allocation2 + $0x158] sm:$0xff] %v632
  %697 = vst [vmem:[#allocation2 + $0x160] sm:$0xff] %v633
  %698 = vst [vmem:[#allocation2 + $0x168] sm:$0xff] %v634
  %699 = vst [vmem:[#allocation2 + $0x170] sm:$0xff] %v635
  %700 = vst [vmem:[#allocation2 + $0x178] sm:$0xff] %v636
  %701 = vst [vmem:[#allocation2 + $0x180] sm:$0xff] %v637
  %702 = vst [vmem:[#allocation2 + $0x188] sm:$0xff] %v638
  %703 = vst [vmem:[#allocation2 + $0x190] sm:$0xff] %v639
  %704 = vst [vmem:[#allocation2 + $0x198] sm:$0xff] %v640
  %705 = vst [vmem:[#allocation2 + $0x1a0] sm:$0xff] %v641
  %706 = vst [vmem:[#allocation2 + $0x1a8] sm:$0xff] %v642
  %707 = vst [vmem:[#allocation2 + $0x1b0] sm:$0xff] %v643
  %708 = vst [vmem:[#allocation2 + $0x1b8] sm:$0xff] %v644
  %709 = vst [vmem:[#allocation2 + $0x1c0] sm:$0xff] %v645
  %710 = vst [vmem:[#allocation2 + $0x1c8] sm:$0xff] %v646
  %711 = vst [vmem:[#allocation2 + $0x1d0] sm:$0xff] %v647
  %712 = vst [vmem:[#allocation2 + $0x1d8] sm:$0xff] %v648
  %713 = vst [vmem:[#allocation2 + $0x1e0] sm:$0xff] %v649
  %714 = vst [vmem:[#allocation2 + $0x1e8] sm:$0xff] %v650
  %715 = vst [vmem:[#allocation2 + $0x1f0] sm:$0xff] %v651
  %716 = vst [vmem:[#allocation2 + $0x1f8] sm:$0xff] %v652
  // Predicated region
  $region18: #{lstm_model_forward.3} parent=0 // pred_check
    %p717 = pneg %p15
  $region19: #{lstm_model_forward.3} parent=0 // pred_check_branch
    %719 = sbr.rel (%p717) target = $region21
  $region20: #{lstm_model_forward.3} parent=0 // pred_region
    %v720 = vld [vmem:[#allocation2] sm:$0xff]
    %v721 = vld [vmem:[#allocation2 + $0x8] sm:$0xff]
    %v722 = vld [vmem:[#allocation2 + $0x10] sm:$0xff]
    %v723 = vld [vmem:[#allocation2 + $0x18] sm:$0xff]
    %v724 = vld [vmem:[#allocation2 + $0x20] sm:$0xff]
    %v725 = vld [vmem:[#allocation2 + $0x28] sm:$0xff]
    %v726 = vld [vmem:[#allocation2 + $0x30] sm:$0xff]
    %v727 = vld [vmem:[#allocation2 + $0x38] sm:$0xff]
    %v728 = vld [vmem:[#allocation2 + $0x40] sm:$0xff]
    %v729 = vld [vmem:[#allocation2 + $0x48] sm:$0xff]
    %v730 = vld [vmem:[#allocation2 + $0x50] sm:$0xff]
    %v731 = vld [vmem:[#allocation2 + $0x58] sm:$0xff]
    %v732 = vld [vmem:[#allocation2 + $0x60] sm:$0xff]
    %v733 = vld [vmem:[#allocation2 + $0x68] sm:$0xff]
    %v734 = vld [vmem:[#allocation2 + $0x70] sm:$0xff]
    %v735 = vld [vmem:[#allocation2 + $0x78] sm:$0xff]
    %v736 = vld [vmem:[#allocation2 + $0x80] sm:$0xff]
    %v737 = vld [vmem:[#allocation2 + $0x88] sm:$0xff]
    %v738 = vld [vmem:[#allocation2 + $0x90] sm:$0xff]
    %v739 = vld [vmem:[#allocation2 + $0x98] sm:$0xff]
    %v740 = vld [vmem:[#allocation2 + $0xa0] sm:$0xff]
    %v741 = vld [vmem:[#allocation2 + $0xa8] sm:$0xff]
    %v742 = vld [vmem:[#allocation2 + $0xb0] sm:$0xff]
    %v743 = vld [vmem:[#allocation2 + $0xb8] sm:$0xff]
    %v744 = vld [vmem:[#allocation2 + $0xc0] sm:$0xff]
    %v745 = vld [vmem:[#allocation2 + $0xc8] sm:$0xff]
    %v746 = vld [vmem:[#allocation2 + $0xd0] sm:$0xff]
    %v747 = vld [vmem:[#allocation2 + $0xd8] sm:$0xff]
    %v748 = vld [vmem:[#allocation2 + $0xe0] sm:$0xff]
    %v749 = vld [vmem:[#allocation2 + $0xe8] sm:$0xff]
    %v750 = vld [vmem:[#allocation2 + $0xf0] sm:$0xff]
    %v751 = vld [vmem:[#allocation2 + $0xf8] sm:$0xff]
    %v752 = vld [vmem:[#allocation2 + $0x100] sm:$0xff]
    %v753 = vld [vmem:[#allocation2 + $0x108] sm:$0xff]
    %v754 = vld [vmem:[#allocation2 + $0x110] sm:$0xff]
    %v755 = vld [vmem:[#allocation2 + $0x118] sm:$0xff]
    %v756 = vld [vmem:[#allocation2 + $0x120] sm:$0xff]
    %v757 = vld [vmem:[#allocation2 + $0x128] sm:$0xff]
    %v758 = vld [vmem:[#allocation2 + $0x130] sm:$0xff]
    %v759 = vld [vmem:[#allocation2 + $0x138] sm:$0xff]
    %v760 = vld [vmem:[#allocation2 + $0x140] sm:$0xff]
    %v761 = vld [vmem:[#allocation2 + $0x148] sm:$0xff]
    %v762 = vld [vmem:[#allocation2 + $0x150] sm:$0xff]
    %v763 = vld [vmem:[#allocation2 + $0x158] sm:$0xff]
    %v764 = vld [vmem:[#allocation2 + $0x160] sm:$0xff]
    %v765 = vld [vmem:[#allocation2 + $0x168] sm:$0xff]
    %v766 = vld [vmem:[#allocation2 + $0x170] sm:$0xff]
    %v767 = vld [vmem:[#allocation2 + $0x178] sm:$0xff]
    %v768 = vld [vmem:[#allocation2 + $0x180] sm:$0xff]
    %v769 = vld [vmem:[#allocation2 + $0x188] sm:$0xff]
    %v770 = vld [vmem:[#allocation2 + $0x190] sm:$0xff]
    %v771 = vld [vmem:[#allocation2 + $0x198] sm:$0xff]
    %v772 = vld [vmem:[#allocation2 + $0x1a0] sm:$0xff]
    %v773 = vld [vmem:[#allocation2 + $0x1a8] sm:$0xff]
    %v774 = vld [vmem:[#allocation2 + $0x1b0] sm:$0xff]
    %v775 = vld [vmem:[#allocation2 + $0x1b8] sm:$0xff]
    %v776 = vld [vmem:[#allocation2 + $0x1c0] sm:$0xff]
    %v777 = vld [vmem:[#allocation2 + $0x1c8] sm:$0xff]
    %v778 = vld [vmem:[#allocation2 + $0x1d0] sm:$0xff]
    %v779 = vld [vmem:[#allocation2 + $0x1d8] sm:$0xff]
    %v780 = vld [vmem:[#allocation2 + $0x1e0] sm:$0xff]
    %v781 = vld [vmem:[#allocation2 + $0x1e8] sm:$0xff]
    %v782 = vld [vmem:[#allocation2 + $0x1f0] sm:$0xff]
    %v783 = vld [vmem:[#allocation2 + $0x1f8] sm:$0xff]
    %v784 = vld [vmem:[%s2] sm:$0xf]
    %v786 = vlaneseq
    %v787 = vshrl.u32 %v786, 7
    %v788 = vsub.s32 0, %v787
    %v789 = vrot.slane %v784, %v788
    %v790 = vlaneseq
    %v791 = vshrl.u32 %v790, 7
    %v792 = vsub.s32 1, %v791
    %v793 = vrot.slane %v784, %v792
    %v794 = vlaneseq
    %v795 = vshrl.u32 %v794, 7
    %v796 = vsub.s32 2, %v795
    %v797 = vrot.slane %v784, %v796
    %v798 = vlaneseq
    %v799 = vshrl.u32 %v798, 7
    %v800 = vsub.s32 3, %v799
    %v801 = vrot.slane %v784, %v800
    %v806 = vadd.f32 %v720, %v789
    %v807 = vadd.f32 %v721, %v793
    %v808 = vadd.f32 %v722, %v797
    %v809 = vadd.f32 %v723, %v801
    %v810 = vadd.f32 %v724, %v789
    %v811 = vadd.f32 %v725, %v793
    %v812 = vadd.f32 %v726, %v797
    %v813 = vadd.f32 %v727, %v801
    %v814 = vadd.f32 %v728, %v789
    %v815 = vadd.f32 %v729, %v793
    %v816 = vadd.f32 %v730, %v797
    %v817 = vadd.f32 %v731, %v801
    %v818 = vadd.f32 %v732, %v789
    %v819 = vadd.f32 %v733, %v793
    %v820 = vadd.f32 %v734, %v797
    %v821 = vadd.f32 %v735, %v801
    %v822 = vadd.f32 %v736, %v789
    %v823 = vadd.f32 %v737, %v793
    %v824 = vadd.f32 %v738, %v797
    %v825 = vadd.f32 %v739, %v801
    %v826 = vadd.f32 %v740, %v789
    %v827 = vadd.f32 %v741, %v793
    %v828 = vadd.f32 %v742, %v797
    %v829 = vadd.f32 %v743, %v801
    %v830 = vadd.f32 %v744, %v789
    %v831 = vadd.f32 %v745, %v793
    %v832 = vadd.f32 %v746, %v797
    %v833 = vadd.f32 %v747, %v801
    %v834 = vadd.f32 %v748, %v789
    %v835 = vadd.f32 %v749, %v793
    %v836 = vadd.f32 %v750, %v797
    %v837 = vadd.f32 %v751, %v801
    %v838 = vadd.f32 %v752, %v789
    %v839 = vadd.f32 %v753, %v793
    %v840 = vadd.f32 %v754, %v797
    %v841 = vadd.f32 %v755, %v801
    %v842 = vadd.f32 %v756, %v789
    %v843 = vadd.f32 %v757, %v793
    %v844 = vadd.f32 %v758, %v797
    %v845 = vadd.f32 %v759, %v801
    %v846 = vadd.f32 %v760, %v789
    %v847 = vadd.f32 %v761, %v793
    %v848 = vadd.f32 %v762, %v797
    %v849 = vadd.f32 %v763, %v801
    %v850 = vadd.f32 %v764, %v789
    %v851 = vadd.f32 %v765, %v793
    %v852 = vadd.f32 %v766, %v797
    %v853 = vadd.f32 %v767, %v801
    %v854 = vadd.f32 %v768, %v789
    %v855 = vadd.f32 %v769, %v793
    %v856 = vadd.f32 %v770, %v797
    %v857 = vadd.f32 %v771, %v801
    %v858 = vadd.f32 %v772, %v789
    %v859 = vadd.f32 %v773, %v793
    %v860 = vadd.f32 %v774, %v797
    %v861 = vadd.f32 %v775, %v801
    %v862 = vadd.f32 %v776, %v789
    %v863 = vadd.f32 %v777, %v793
    %v864 = vadd.f32 %v778, %v797
    %v865 = vadd.f32 %v779, %v801
    %v866 = vadd.f32 %v780, %v789
    %v867 = vadd.f32 %v781, %v793
    %v868 = vadd.f32 %v782, %v797
    %v869 = vadd.f32 %v783, %v801
    %v870 = vpack.c.bf16 %v810, %v806
    %v871 = vpack.c.bf16 %v811, %v807
    %v872 = vpack.c.bf16 %v812, %v808
    %v873 = vpack.c.bf16 %v813, %v809
    %v874 = vpack.c.bf16 %v818, %v814
    %v875 = vpack.c.bf16 %v819, %v815
    %v876 = vpack.c.bf16 %v820, %v816
    %v877 = vpack.c.bf16 %v821, %v817
    %v878 = vpack.c.bf16 %v826, %v822
    %v879 = vpack.c.bf16 %v827, %v823
    %v880 = vpack.c.bf16 %v828, %v824
    %v881 = vpack.c.bf16 %v829, %v825
    %v882 = vpack.c.bf16 %v834, %v830
    %v883 = vpack.c.bf16 %v835, %v831
    %v884 = vpack.c.bf16 %v836, %v832
    %v885 = vpack.c.bf16 %v837, %v833
    %v886 = vpack.c.bf16 %v842, %v838
    %v887 = vpack.c.bf16 %v843, %v839
    %v888 = vpack.c.bf16 %v844, %v840
    %v889 = vpack.c.bf16 %v845, %v841
    %v890 = vpack.c.bf16 %v850, %v846
    %v891 = vpack.c.bf16 %v851, %v847
    %v892 = vpack.c.bf16 %v852, %v848
    %v893 = vpack.c.bf16 %v853, %v849
    %v894 = vpack.c.bf16 %v858, %v854
    %v895 = vpack.c.bf16 %v859, %v855
    %v896 = vpack.c.bf16 %v860, %v856
    %v897 = vpack.c.bf16 %v861, %v857
    %v898 = vpack.c.bf16 %v866, %v862
    %v899 = vpack.c.bf16 %v867, %v863
    %v900 = vpack.c.bf16 %v868, %v864
    %v901 = vpack.c.bf16 %v869, %v865
    %v934 = vunpack.c.l.b16 %v870
    %v935 = vunpack.c.l.b16 %v871
    %v936 = vunpack.c.l.b16 %v872
    %v937 = vunpack.c.l.b16 %v873
    %v938 = vunpack.c.h.b16 %v870
    %v939 = vunpack.c.h.b16 %v871
    %v940 = vunpack.c.h.b16 %v872
    %v941 = vunpack.c.h.b16 %v873
    %v942 = vunpack.c.l.b16 %v874
    %v943 = vunpack.c.l.b16 %v875
    %v944 = vunpack.c.l.b16 %v876
    %v945 = vunpack.c.l.b16 %v877
    %v946 = vunpack.c.h.b16 %v874
    %v947 = vunpack.c.h.b16 %v875
    %v948 = vunpack.c.h.b16 %v876
    %v949 = vunpack.c.h.b16 %v877
    %v950 = vunpack.c.l.b16 %v878
    %v951 = vunpack.c.l.b16 %v879
    %v952 = vunpack.c.l.b16 %v880
    %v953 = vunpack.c.l.b16 %v881
    %v954 = vunpack.c.h.b16 %v878
    %v955 = vunpack.c.h.b16 %v879
    %v956 = vunpack.c.h.b16 %v880
    %v957 = vunpack.c.h.b16 %v881
    %v958 = vunpack.c.l.b16 %v882
    %v959 = vunpack.c.l.b16 %v883
    %v960 = vunpack.c.l.b16 %v884
    %v961 = vunpack.c.l.b16 %v885
    %v962 = vunpack.c.h.b16 %v882
    %v963 = vunpack.c.h.b16 %v883
    %v964 = vunpack.c.h.b16 %v884
    %v965 = vunpack.c.h.b16 %v885
    %v966 = vunpack.c.l.b16 %v886
    %v967 = vunpack.c.l.b16 %v887
    %v968 = vunpack.c.l.b16 %v888
    %v969 = vunpack.c.l.b16 %v889
    %v970 = vunpack.c.h.b16 %v886
    %v971 = vunpack.c.h.b16 %v887
    %v972 = vunpack.c.h.b16 %v888
    %v973 = vunpack.c.h.b16 %v889
    %v974 = vunpack.c.l.b16 %v890
    %v975 = vunpack.c.l.b16 %v891
    %v976 = vunpack.c.l.b16 %v892
    %v977 = vunpack.c.l.b16 %v893
    %v978 = vunpack.c.h.b16 %v890
    %v979 = vunpack.c.h.b16 %v891
    %v980 = vunpack.c.h.b16 %v892
    %v981 = vunpack.c.h.b16 %v893
    %v982 = vunpack.c.l.b16 %v894
    %v983 = vunpack.c.l.b16 %v895
    %v984 = vunpack.c.l.b16 %v896
    %v985 = vunpack.c.l.b16 %v897
    %v986 = vunpack.c.h.b16 %v894
    %v987 = vunpack.c.h.b16 %v895
    %v988 = vunpack.c.h.b16 %v896
    %v989 = vunpack.c.h.b16 %v897
    %v990 = vunpack.c.l.b16 %v898
    %v991 = vunpack.c.l.b16 %v899
    %v992 = vunpack.c.l.b16 %v900
    %v993 = vunpack.c.l.b16 %v901
    %v994 = vunpack.c.h.b16 %v898
    %v995 = vunpack.c.h.b16 %v899
    %v996 = vunpack.c.h.b16 %v900
    %v997 = vunpack.c.h.b16 %v901
    %v998 = vpack.c.b16 %v935, %v934
    %v999 = vpack.c.b16 %v937, %v936
    %v1000 = vpack.c.b16 %v939, %v938
    %v1001 = vpack.c.b16 %v941, %v940
    %v1002 = vpack.c.b16 %v943, %v942
    %v1003 = vpack.c.b16 %v945, %v944
    %v1004 = vpack.c.b16 %v947, %v946
    %v1005 = vpack.c.b16 %v949, %v948
    %v1006 = vpack.c.b16 %v951, %v950
    %v1007 = vpack.c.b16 %v953, %v952
    %v1008 = vpack.c.b16 %v955, %v954
    %v1009 = vpack.c.b16 %v957, %v956
    %v1010 = vpack.c.b16 %v959, %v958
    %v1011 = vpack.c.b16 %v961, %v960
    %v1012 = vpack.c.b16 %v963, %v962
    %v1013 = vpack.c.b16 %v965, %v964
    %v1014 = vpack.c.b16 %v967, %v966
    %v1015 = vpack.c.b16 %v969, %v968
    %v1016 = vpack.c.b16 %v971, %v970
    %v1017 = vpack.c.b16 %v973, %v972
    %v1018 = vpack.c.b16 %v975, %v974
    %v1019 = vpack.c.b16 %v977, %v976
    %v1020 = vpack.c.b16 %v979, %v978
    %v1021 = vpack.c.b16 %v981, %v980
    %v1022 = vpack.c.b16 %v983, %v982
    %v1023 = vpack.c.b16 %v985, %v984
    %v1024 = vpack.c.b16 %v987, %v986
    %v1025 = vpack.c.b16 %v989, %v988
    %v1026 = vpack.c.b16 %v991, %v990
    %v1027 = vpack.c.b16 %v993, %v992
    %v1028 = vpack.c.b16 %v995, %v994
    %v1029 = vpack.c.b16 %v997, %v996
    %1062 = vst [vmem:[%s3] sm:$0xff] %v998
    %1063 = vst [vmem:[%s3 + $0x8] sm:$0xff] %v999
    %1064 = vst [vmem:[%s3 + $0x10] sm:$0xff] %v1000
    %1065 = vst [vmem:[%s3 + $0x18] sm:$0xff] %v1001
    %1066 = vst [vmem:[%s3 + $0x20] sm:$0xff] %v1002
    %1067 = vst [vmem:[%s3 + $0x28] sm:$0xff] %v1003
    %1068 = vst [vmem:[%s3 + $0x30] sm:$0xff] %v1004
    %1069 = vst [vmem:[%s3 + $0x38] sm:$0xff] %v1005
    %1070 = vst [vmem:[%s3 + $0x40] sm:$0xff] %v1006
    %1071 = vst [vmem:[%s3 + $0x48] sm:$0xff] %v1007
    %1072 = vst [vmem:[%s3 + $0x50] sm:$0xff] %v1008
    %1073 = vst [vmem:[%s3 + $0x58] sm:$0xff] %v1009
    %1074 = vst [vmem:[%s3 + $0x60] sm:$0xff] %v1010
    %1075 = vst [vmem:[%s3 + $0x68] sm:$0xff] %v1011
    %1076 = vst [vmem:[%s3 + $0x70] sm:$0xff] %v1012
    %1077 = vst [vmem:[%s3 + $0x78] sm:$0xff] %v1013
    %1078 = vst [vmem:[%s3 + $0x80] sm:$0xff] %v1014
    %1079 = vst [vmem:[%s3 + $0x88] sm:$0xff] %v1015
    %1080 = vst [vmem:[%s3 + $0x90] sm:$0xff] %v1016
    %1081 = vst [vmem:[%s3 + $0x98] sm:$0xff] %v1017
    %1082 = vst [vmem:[%s3 + $0xa0] sm:$0xff] %v1018
    %1083 = vst [vmem:[%s3 + $0xa8] sm:$0xff] %v1019
    %1084 = vst [vmem:[%s3 + $0xb0] sm:$0xff] %v1020
    %1085 = vst [vmem:[%s3 + $0xb8] sm:$0xff] %v1021
    %1086 = vst [vmem:[%s3 + $0xc0] sm:$0xff] %v1022
    %1087 = vst [vmem:[%s3 + $0xc8] sm:$0xff] %v1023
    %1088 = vst [vmem:[%s3 + $0xd0] sm:$0xff] %v1024
    %1089 = vst [vmem:[%s3 + $0xd8] sm:$0xff] %v1025
    %1090 = vst [vmem:[%s3 + $0xe0] sm:$0xff] %v1026
    %1091 = vst [vmem:[%s3 + $0xe8] sm:$0xff] %v1027
    %1092 = vst [vmem:[%s3 + $0xf0] sm:$0xff] %v1028
    %1093 = vst [vmem:[%s3 + $0xf8] sm:$0xff] %v1029
  $region21: #{lstm_model_forward.3} parent=0 // pred_fallthru
    _
  // Predicated region
  $region22: #{lstm_model_forward.3} parent=0 // pred_check
    _
  $region23: #{lstm_model_forward.3} parent=0 // pred_check_branch
    %1095 = sbr.rel (0) target = $region25
  $region24: #{lstm_model_forward.3} parent=0 // pred_region
    _
  $region25: #{lstm_model_forward.3} parent=0 // pred_fallthru
    _
  // Predicated region
  $region26: #{lstm_model_forward.3} parent=0 // pred_check
    _
  $region27: #{lstm_model_forward.3} parent=0 // pred_check_branch
    %1097 = sbr.rel (0) target = $region29
  $region28: #{lstm_model_forward.3} parent=0 // pred_region
    _
  $region29: #{lstm_model_forward.3} parent=0 // pred_fallthru
    _

// kernel: lstm_model_forward.4
$region0: #{lstm_model_forward.4}
  #allocation0 [shape = 'u32[]', space=smem, size = 0x4, offset = 0x4, fixed_abs, tag = 'smem constant byte address 0x4 - core index']
  #allocation1 [shape = 'u32[144,128]{1,0:T(1,128)}', space=vmem, size = 0x12000, scoped, tag = 'internal scratch']
  #allocation2 [shape = 'f32[8,128]{1,0:T(8,128)}', space=vmem, size = 0x1000, scoped, tag = 'scratch operand']
  #allocation3 [shape = 'f32[8,128]{1,0:T(8,128)}', space=vmem, size = 0x1000, scoped, tag = 'scratch operand']
  #allocation4 [shape = 'bf16[4,128,128]{2,1,0:T(16,128)(2,1)}', space=vmem, size = 0x20000, scoped, tag = 'scratch operand']
  #allocation5 [shape = 's32[4]{0}', space=sflag, size = 0x10, scoped, tag = 'scratch operand']
  #allocation6 [shape = 's32[]', space=sflag, size = 0x4, offset = 0, fixed_abs, tag = 'sflag constant byte address 0x0 - dummy sync flag']
  #allocation7 [shape = 's32[]', space=sflag, size = 0x4, offset = 0, fixed_abs, tag = 'sflag constant byte address 0x0 - dummy sync flag']
  #allocation8 [shape = 's32[]', space=sflag, size = 0x4, offset = 0, fixed_abs, tag = 'sflag constant byte address 0x0 - dummy sync flag']
  #allocation9 [shape = 's32[]', space=sflag, size = 0x4, offset = 0, fixed_abs, tag = 'sflag constant byte address 0x0 - dummy sync flag']
  %s0 = inlined_call_operand.vmem [shape: bf16[8,8192], index: 0, kind: input, shape index: {}]
  %s1 = inlined_call_operand.vmem [shape: bf16[4,128,128], index: 1, kind: input, shape index: {}]
  %s2 = inlined_call_operand.vmem [shape: bf16[8,2048], index: 2, kind: output, shape index: {}]
  %s3 = sld [smem:[#allocation0]]
  $region193: #{lstm_model_forward.4} parent=0
    _
  %s5 = ssub.s32 1, %s3
  %s6 = scalar_select 0, %s5, %s3
  loop: start=0, step=1, limit=4
  $region2: #{lstm_model_forward.4} parent=0 // loop_pre_header
    _
  $region3: #{lstm_model_forward.4} parent=0 // loop_header
    %s8 = sphi 0, %s12
    %p9 = scmp.ge.s32.totalorder %s8, 4
    %s18 = sphi 0, %s20
    %s21 = sphi 0, %s18
    %s22 = sphi 0, %s21
    %s38 = sphi 0, %s22
    %s44 = sphi 0, %s46
    %s47 = sphi 0, %s44
    %s48 = sphi 0, %s47
    %s64 = sphi 0, %s48
  $region4: #{lstm_model_forward.4} parent=0 // loop_header_branch
    %11 = sbr.rel (%p9) target = $region8
  $region5: #{lstm_model_forward.4} parent=0 // loop_body
    %s13 = ssub.s32 %s8, 1
    %s14 = ssub.s32 %s8, 2
    %s15 = sadd.s32 %s8, 1
    %s16 = ssub.s32 %s8, %s15
    %p17 = scmp.eq.s32.totalorder %s16, 0
    %s19 = sadd.s32 %s18, 1
    %s20 = scalar_select %p17, %s18, %s19
    %p23 = pneg %p17
    %p24 = scmp.eq.s32.totalorder %s8, 1
    %p25 = por %p23, %p24
    %p26 = scmp.ne.s32.totalorder %s18, %s21
    %p27 = scmp.eq.s32.totalorder %s8, 0
    %p28 = por %p26, %p27
    %p29 = scmp.ne.s32.totalorder %s18, %s21
    %p30 = scmp.eq.s32.totalorder %s13, 1
    %p31 = por %p29, %p30
    %p32 = scmp.ne.s32.totalorder %s21, %s22
    %p33 = scmp.eq.s32.totalorder %s13, 0
    %p34 = por %p32, %p33
    %p35 = scmp.ne.s32.totalorder %s21, %s22
    %p36 = scmp.eq.s32.totalorder %s14, 1
    %p37 = por %p35, %p36
    %p39 = scmp.ne.s32.totalorder %s22, %s38
    %p40 = scmp.eq.s32.totalorder %s14, 0
    %p41 = por %p39, %p40
    %s42 = ssub.s32 %s8, %s15
    %p43 = scmp.eq.s32.totalorder %s42, 0
    %s45 = sadd.s32 %s44, 1
    %s46 = scalar_select %p43, %s44, %s45
    %p49 = pneg %p43
    %p50 = scmp.eq.s32.totalorder %s8, 1
    %p51 = por %p49, %p50
    %p52 = scmp.ne.s32.totalorder %s44, %s47
    %p53 = scmp.eq.s32.totalorder %s8, 0
    %p54 = por %p52, %p53
    %p55 = scmp.ne.s32.totalorder %s44, %s47
    %p56 = scmp.eq.s32.totalorder %s13, 1
    %p57 = por %p55, %p56
    %p58 = scmp.ne.s32.totalorder %s47, %s48
    %p59 = scmp.eq.s32.totalorder %s13, 0
    %p60 = por %p58, %p59
    %p61 = scmp.ne.s32.totalorder %s47, %s48
    %p62 = scmp.eq.s32.totalorder %s14, 1
    %p63 = por %p61, %p62
    %p65 = scmp.ne.s32.totalorder %s48, %s64
    %p66 = scmp.eq.s32.totalorder %s14, 0
    %p67 = por %p65, %p66
    %p68 = scmp.le.s32.totalorder 1, %s8
    %p69 = scmp.lt.s32.totalorder %s8, 3
    %p70 = pnand %p68, %p69
    %p71 = pneg %p70
    // Predicated region
    $region9: #{lstm_model_forward.4} parent=5 // pred_check
      _
    $region10: #{lstm_model_forward.4} parent=5 // pred_check_branch
      %73 = sbr.rel (%p70) target = $region12
    $region11: #{lstm_model_forward.4} parent=5 // pred_region
      %s74 = ssub.s32 %s8, 1
    $region12: #{lstm_model_forward.4} parent=5 // pred_fallthru
      _
    %p75 = scmp.lt.s32.totalorder %s8, 2
    // Predicated region
    $region13: #{lstm_model_forward.4} parent=5 // pred_check
      %p76 = pneg %p75
    $region14: #{lstm_model_forward.4} parent=5 // pred_check_branch
      %78 = sbr.rel (%p76) target = $region16
    $region15: #{lstm_model_forward.4} parent=5 // pred_region
      // Predicated region
      $region17: #{lstm_model_forward.4} parent=15 // pred_check
        %p79 = pneg %p28
      $region18: #{lstm_model_forward.4} parent=15 // pred_check_branch
        %81 = sbr.rel (%p79) target = $region20
      $region19: #{lstm_model_forward.4} parent=15 // pred_region
        %s82 = smul.u32 32, %s8
        %p83 = scmp.lt.s32.totalorder %s82, 63
        %s84 = scalar_select %p83, %s82, 63
        %s85 = smul.addr %s84, 4
        %s86 = scalar_lea.vmem %s0, %s85
        %s87 = smul.u32 32, %s8
      $region20: #{lstm_model_forward.4} parent=15 // pred_fallthru
        _
    $region16: #{lstm_model_forward.4} parent=5 // pred_fallthru
      _
    %p88 = scmp.le.s32.totalorder 1, %s8
    %p89 = scmp.lt.s32.totalorder %s8, 3
    %p90 = pnand %p88, %p89
    %p91 = pneg %p90
    // Predicated region
    $region21: #{lstm_model_forward.4} parent=5 // pred_check
      _
    $region22: #{lstm_model_forward.4} parent=5 // pred_check_branch
      %93 = sbr.rel (%p90) target = $region24
    $region23: #{lstm_model_forward.4} parent=5 // pred_region
      %s94 = ssub.s32 %s8, 1
      %s95 = smul.u32 32, %s13
      %p96 = scmp.lt.s32.totalorder %s95, 63
      %s97 = scalar_select %p96, %s95, 63
      %s98 = smul.addr %s97, 4
      %s99 = scalar_lea.vmem %s0, %s98
      %p100 = pneg %p34
      %p101 = pneg %p31
      %p102 = pneg %p60
      %p103 = pneg %p57
      %s104 = smul.u32 8, %s13
      %p105 = scmp.lt.s32.totalorder %s104, 15
      %s106 = scalar_select %p105, %s104, 15
      %s107 = smul.addr %s106, 4
      %s108 = scalar_lea.vmem %s2, %s107
      %s109 = smul.u32 32, %s13
      %p110 = scmp.lt.s32.totalorder %s109, 63
      %s111 = scalar_select %p110, %s109, 63
      %s112 = smul.addr %s111, 4
      %s113 = scalar_lea.vmem %s0, %s112
      %s114 = smul.u32 32, %s13
      %s115 = smul.u32 8, %s13
      %p116 = scmp.lt.s32.totalorder %s115, 15
      %s117 = scalar_select %p116, %s115, 15
      %s118 = smul.addr %s117, 4
      %s119 = scalar_lea.vmem %s2, %s118
      %s120 = smul.u32 8, %s13
      %p122 = scmp.eq.s32.totalorder %s13, 0
      // Predicated region
      $region25: #{lstm_model_forward.4} parent=23 // pred_check
        %p123 = pneg %p122
      $region26: #{lstm_model_forward.4} parent=23 // pred_check_branch
        %125 = sbr.rel (%p123) target = $region28
      $region27: #{lstm_model_forward.4} parent=23 // pred_region
        %126 = vst [vmem:[#allocation2] sm:$0xff] 0.0
        %127 = vst [vmem:[#allocation3] sm:$0xff] 0.0
        %p129 = scmp.lt.u32.totalorder 64, 8
        %p130 = pneg %p129
        // Predicated region
        $region29: #{lstm_model_forward.4} parent=27 // pred_check
          _
        $region30: #{lstm_model_forward.4} parent=27 // pred_check_branch
          %132 = sbr.rel (%p129) target = $region32
        $region31: #{lstm_model_forward.4} parent=27 // pred_region
          %s147 = sand.u32 64, 7
          %p148 = scmp.eq.s32.totalorder %s147, 0
          // Predicated region
          $region44: #{lstm_model_forward.4} parent=31 // pred_check
            %p149 = pneg %p148
          $region45: #{lstm_model_forward.4} parent=31 // pred_check_branch
            %151 = sbr.rel (%p149) target = $region47
          $region46: #{lstm_model_forward.4} parent=31 // pred_region
            loop: start=0, step=1, limit=1
            $region48: #{lstm_model_forward.4} parent=46 // loop_pre_header
              _
            $region49: #{lstm_model_forward.4} parent=46 // loop_header
              %s153 = sphi 0, %s157
              %p154 = scmp.ge.s32.totalorder %s153, 1
              %s158 = sphi %s1, %s1
              %s159 = sphi [#allocation4], [#allocation4]
            $region50: #{lstm_model_forward.4} parent=46 // loop_header_branch
              %156 = sbr.rel (%p154) target = $region54
            $region51: #{lstm_model_forward.4} parent=46 // loop_body
              %v160 = vld [vmem:[%s158] sm:$0xff]
              %161 = vst [vmem:[%s159] sm:$0xff] %v160
              %v162 = vld [vmem:[%s158 + $0x8] sm:$0xff]
              %163 = vst [vmem:[%s159 + $0x8] sm:$0xff] %v162
              %v164 = vld [vmem:[%s158 + $0x10] sm:$0xff]
              %165 = vst [vmem:[%s159 + $0x10] sm:$0xff] %v164
              %v166 = vld [vmem:[%s158 + $0x18] sm:$0xff]
              %167 = vst [vmem:[%s159 + $0x18] sm:$0xff] %v166
              %v168 = vld [vmem:[%s158 + $0x20] sm:$0xff]
              %169 = vst [vmem:[%s159 + $0x20] sm:$0xff] %v168
              %v170 = vld [vmem:[%s158 + $0x28] sm:$0xff]
              %171 = vst [vmem:[%s159 + $0x28] sm:$0xff] %v170
              %v172 = vld [vmem:[%s158 + $0x30] sm:$0xff]
              %173 = vst [vmem:[%s159 + $0x30] sm:$0xff] %v172
              %v174 = vld [vmem:[%s158 + $0x38] sm:$0xff]
              %175 = vst [vmem:[%s159 + $0x38] sm:$0xff] %v174
            $region52: #{lstm_model_forward.4} parent=46 // loop_footer
              %s157 = sadd.s32 1, %s153
            $region53: #{lstm_model_forward.4} parent=46 // loop_footer_branch
              %152 = sbr.rel target = $region49
            $region54: #{lstm_model_forward.4} parent=46 // loop_exit
              _
          $region47: #{lstm_model_forward.4} parent=31 // pred_fallthru
            _
          %p176 = pneg %p148
          // Predicated region
          $region55: #{lstm_model_forward.4} parent=31 // pred_check
            _
          $region56: #{lstm_model_forward.4} parent=31 // pred_check_branch
            %178 = sbr.rel (%p148) target = $region58
          $region57: #{lstm_model_forward.4} parent=31 // pred_region
            %s179 = sand.u32 64, 7
          $region58: #{lstm_model_forward.4} parent=31 // pred_fallthru
            _
        $region32: #{lstm_model_forward.4} parent=27 // pred_fallthru
          _
        // Predicated region
        $region33: #{lstm_model_forward.4} parent=27 // pred_check
          %p133 = pneg %p129
        $region34: #{lstm_model_forward.4} parent=27 // pred_check_branch
          %135 = sbr.rel (%p133) target = $region36
        $region35: #{lstm_model_forward.4} parent=27 // pred_region
          %s136 = sshllo.u32 0, 64
          loop: start=0, step=1, limit=1
          $region37: #{lstm_model_forward.4} parent=35 // loop_pre_header
            _
          $region38: #{lstm_model_forward.4} parent=35 // loop_header
            %s138 = sphi 0, %s142
            %p139 = scmp.ge.s32.totalorder %s138, 1
            %s143 = sphi %s1, %s1
            %s144 = sphi [#allocation4], [#allocation4]
          $region39: #{lstm_model_forward.4} parent=35 // loop_header_branch
            %141 = sbr.rel (%p139) target = $region43
          $region40: #{lstm_model_forward.4} parent=35 // loop_body
            %v145 = vld [vmem:[%s143] sm:%s136]
            %146 = vst [vmem:[%s144] sm:%s136] %v145
          $region41: #{lstm_model_forward.4} parent=35 // loop_footer
            %s142 = sadd.s32 1, %s138
          $region42: #{lstm_model_forward.4} parent=35 // loop_footer_branch
            %137 = sbr.rel target = $region38
          $region43: #{lstm_model_forward.4} parent=35 // loop_exit
            _
        $region36: #{lstm_model_forward.4} parent=27 // pred_fallthru
          _
        // Predicated region
        $region59: #{lstm_model_forward.4} parent=27 // pred_check
          _
        $region60: #{lstm_model_forward.4} parent=27 // pred_check_branch
          %182 = sbr.rel (0) target = $region62
        $region61: #{lstm_model_forward.4} parent=27 // pred_region
          %183 = vsyncadd [#allocation5], 1024
        $region62: #{lstm_model_forward.4} parent=27 // pred_fallthru
          _
        %s184 = scalar_lea.vmem %s1, 64
        %s185 = scalar_lea.vmem [#allocation4], 64
        %s186 = scalar_lea.sflag [#allocation5], 1
        %p188 = scmp.lt.u32.totalorder 64, 8
        %p189 = pneg %p188
        // Predicated region
        $region63: #{lstm_model_forward.4} parent=27 // pred_check
          _
        $region64: #{lstm_model_forward.4} parent=27 // pred_check_branch
          %191 = sbr.rel (%p188) target = $region66
        $region65: #{lstm_model_forward.4} parent=27 // pred_region
          %s206 = sand.u32 64, 7
          %p207 = scmp.eq.s32.totalorder %s206, 0
          // Predicated region
          $region78: #{lstm_model_forward.4} parent=65 // pred_check
            %p208 = pneg %p207
          $region79: #{lstm_model_forward.4} parent=65 // pred_check_branch
            %210 = sbr.rel (%p208) target = $region81
          $region80: #{lstm_model_forward.4} parent=65 // pred_region
            loop: start=0, step=1, limit=1
            $region82: #{lstm_model_forward.4} parent=80 // loop_pre_header
              _
            $region83: #{lstm_model_forward.4} parent=80 // loop_header
              %s212 = sphi 0, %s216
              %p213 = scmp.ge.s32.totalorder %s212, 1
              %s217 = sphi %s184, %s184
              %s218 = sphi %s185, %s185
            $region84: #{lstm_model_forward.4} parent=80 // loop_header_branch
              %215 = sbr.rel (%p213) target = $region88
            $region85: #{lstm_model_forward.4} parent=80 // loop_body
              %v219 = vld [vmem:[%s217] sm:$0xff]
              %220 = vst [vmem:[%s218] sm:$0xff] %v219
              %v221 = vld [vmem:[%s217 + $0x8] sm:$0xff]
              %222 = vst [vmem:[%s218 + $0x8] sm:$0xff] %v221
              %v223 = vld [vmem:[%s217 + $0x10] sm:$0xff]
              %224 = vst [vmem:[%s218 + $0x10] sm:$0xff] %v223
              %v225 = vld [vmem:[%s217 + $0x18] sm:$0xff]
              %226 = vst [vmem:[%s218 + $0x18] sm:$0xff] %v225
              %v227 = vld [vmem:[%s217 + $0x20] sm:$0xff]
              %228 = vst [vmem:[%s218 + $0x20] sm:$0xff] %v227
              %v229 = vld [vmem:[%s217 + $0x28] sm:$0xff]
              %230 = vst [vmem:[%s218 + $0x28] sm:$0xff] %v229
              %v231 = vld [vmem:[%s217 + $0x30] sm:$0xff]
              %232 = vst [vmem:[%s218 + $0x30] sm:$0xff] %v231
              %v233 = vld [vmem:[%s217 + $0x38] sm:$0xff]
              %234 = vst [vmem:[%s218 + $0x38] sm:$0xff] %v233
            $region86: #{lstm_model_forward.4} parent=80 // loop_footer
              %s216 = sadd.s32 1, %s212
            $region87: #{lstm_model_forward.4} parent=80 // loop_footer_branch
              %211 = sbr.rel target = $region83
            $region88: #{lstm_model_forward.4} parent=80 // loop_exit
              _
          $region81: #{lstm_model_forward.4} parent=65 // pred_fallthru
            _
          %p235 = pneg %p207
          // Predicated region
          $region89: #{lstm_model_forward.4} parent=65 // pred_check
            _
          $region90: #{lstm_model_forward.4} parent=65 // pred_check_branch
            %237 = sbr.rel (%p207) target = $region92
          $region91: #{lstm_model_forward.4} parent=65 // pred_region
            %s238 = sand.u32 64, 7
          $region92: #{lstm_model_forward.4} parent=65 // pred_fallthru
            _
        $region66: #{lstm_model_forward.4} parent=27 // pred_fallthru
          _
        // Predicated region
        $region67: #{lstm_model_forward.4} parent=27 // pred_check
          %p192 = pneg %p188
        $region68: #{lstm_model_forward.4} parent=27 // pred_check_branch
          %194 = sbr.rel (%p192) target = $region70
        $region69: #{lstm_model_forward.4} parent=27 // pred_region
          %s195 = sshllo.u32 0, 64
          loop: start=0, step=1, limit=1
          $region71: #{lstm_model_forward.4} parent=69 // loop_pre_header
            _
          $region72: #{lstm_model_forward.4} parent=69 // loop_header
            %s197 = sphi 0, %s201
            %p198 = scmp.ge.s32.totalorder %s197, 1
            %s202 = sphi %s184, %s184
            %s203 = sphi %s185, %s185
          $region73: #{lstm_model_forward.4} parent=69 // loop_header_branch
            %200 = sbr.rel (%p198) target = $region77
          $region74: #{lstm_model_forward.4} parent=69 // loop_body
            %v204 = vld [vmem:[%s202] sm:%s195]
            %205 = vst [vmem:[%s203] sm:%s195] %v204
          $region75: #{lstm_model_forward.4} parent=69 // loop_footer
            %s201 = sadd.s32 1, %s197
          $region76: #{lstm_model_forward.4} parent=69 // loop_footer_branch
            %196 = sbr.rel target = $region72
          $region77: #{lstm_model_forward.4} parent=69 // loop_exit
            _
        $region70: #{lstm_model_forward.4} parent=27 // pred_fallthru
          _
        // Predicated region
        $region93: #{lstm_model_forward.4} parent=27 // pred_check
          _
        $region94: #{lstm_model_forward.4} parent=27 // pred_check_branch
          %241 = sbr.rel (0) target = $region96
        $region95: #{lstm_model_forward.4} parent=27 // pred_region
          %242 = vsyncadd %s186, 1024
        $region96: #{lstm_model_forward.4} parent=27 // pred_fallthru
          _
        %s243 = scalar_lea.vmem %s1, 128
        %s244 = scalar_lea.vmem [#allocation4], 128
        %s245 = scalar_lea.sflag [#allocation5], 2
        %p247 = scmp.lt.u32.totalorder 64, 8
        %p248 = pneg %p247
        // Predicated region
        $region97: #{lstm_model_forward.4} parent=27 // pred_check
          _
        $region98: #{lstm_model_forward.4} parent=27 // pred_check_branch
          %250 = sbr.rel (%p247) target = $region100
        $region99: #{lstm_model_forward.4} parent=27 // pred_region
          %s265 = sand.u32 64, 7
          %p266 = scmp.eq.s32.totalorder %s265, 0
          // Predicated region
          $region112: #{lstm_model_forward.4} parent=99 // pred_check
            %p267 = pneg %p266
          $region113: #{lstm_model_forward.4} parent=99 // pred_check_branch
            %269 = sbr.rel (%p267) target = $region115
          $region114: #{lstm_model_forward.4} parent=99 // pred_region
            loop: start=0, step=1, limit=1
            $region116: #{lstm_model_forward.4} parent=114 // loop_pre_header
              _
            $region117: #{lstm_model_forward.4} parent=114 // loop_header
              %s271 = sphi 0, %s275
              %p272 = scmp.ge.s32.totalorder %s271, 1
              %s276 = sphi %s243, %s243
              %s277 = sphi %s244, %s244
            $region118: #{lstm_model_forward.4} parent=114 // loop_header_branch
              %274 = sbr.rel (%p272) target = $region122
            $region119: #{lstm_model_forward.4} parent=114 // loop_body
              %v278 = vld [vmem:[%s276] sm:$0xff]
              %279 = vst [vmem:[%s277] sm:$0xff] %v278
              %v280 = vld [vmem:[%s276 + $0x8] sm:$0xff]
              %281 = vst [vmem:[%s277 + $0x8] sm:$0xff] %v280
              %v282 = vld [vmem:[%s276 + $0x10] sm:$0xff]
              %283 = vst [vmem:[%s277 + $0x10] sm:$0xff] %v282
              %v284 = vld [vmem:[%s276 + $0x18] sm:$0xff]
              %285 = vst [vmem:[%s277 + $0x18] sm:$0xff] %v284
              %v286 = vld [vmem:[%s276 + $0x20] sm:$0xff]
              %287 = vst [vmem:[%s277 + $0x20] sm:$0xff] %v286
              %v288 = vld [vmem:[%s276 + $0x28] sm:$0xff]
              %289 = vst [vmem:[%s277 + $0x28] sm:$0xff] %v288
              %v290 = vld [vmem:[%s276 + $0x30] sm:$0xff]
              %291 = vst [vmem:[%s277 + $0x30] sm:$0xff] %v290
              %v292 = vld [vmem:[%s276 + $0x38] sm:$0xff]
              %293 = vst [vmem:[%s277 + $0x38] sm:$0xff] %v292
            $region120: #{lstm_model_forward.4} parent=114 // loop_footer
              %s275 = sadd.s32 1, %s271
            $region121: #{lstm_model_forward.4} parent=114 // loop_footer_branch
              %270 = sbr.rel target = $region117
            $region122: #{lstm_model_forward.4} parent=114 // loop_exit
              _
          $region115: #{lstm_model_forward.4} parent=99 // pred_fallthru
            _
          %p294 = pneg %p266
          // Predicated region
          $region123: #{lstm_model_forward.4} parent=99 // pred_check
            _
          $region124: #{lstm_model_forward.4} parent=99 // pred_check_branch
            %296 = sbr.rel (%p266) target = $region126
          $region125: #{lstm_model_forward.4} parent=99 // pred_region
            %s297 = sand.u32 64, 7
          $region126: #{lstm_model_forward.4} parent=99 // pred_fallthru
            _
        $region100: #{lstm_model_forward.4} parent=27 // pred_fallthru
          _
        // Predicated region
        $region101: #{lstm_model_forward.4} parent=27 // pred_check
          %p251 = pneg %p247
        $region102: #{lstm_model_forward.4} parent=27 // pred_check_branch
          %253 = sbr.rel (%p251) target = $region104
        $region103: #{lstm_model_forward.4} parent=27 // pred_region
          %s254 = sshllo.u32 0, 64
          loop: start=0, step=1, limit=1
          $region105: #{lstm_model_forward.4} parent=103 // loop_pre_header
            _
          $region106: #{lstm_model_forward.4} parent=103 // loop_header
            %s256 = sphi 0, %s260
            %p257 = scmp.ge.s32.totalorder %s256, 1
            %s261 = sphi %s243, %s243
            %s262 = sphi %s244, %s244
          $region107: #{lstm_model_forward.4} parent=103 // loop_header_branch
            %259 = sbr.rel (%p257) target = $region111
          $region108: #{lstm_model_forward.4} parent=103 // loop_body
            %v263 = vld [vmem:[%s261] sm:%s254]
            %264 = vst [vmem:[%s262] sm:%s254] %v263
          $region109: #{lstm_model_forward.4} parent=103 // loop_footer
            %s260 = sadd.s32 1, %s256
          $region110: #{lstm_model_forward.4} parent=103 // loop_footer_branch
            %255 = sbr.rel target = $region106
          $region111: #{lstm_model_forward.4} parent=103 // loop_exit
            _
        $region104: #{lstm_model_forward.4} parent=27 // pred_fallthru
          _
        // Predicated region
        $region127: #{lstm_model_forward.4} parent=27 // pred_check
          _
        $region128: #{lstm_model_forward.4} parent=27 // pred_check_branch
          %300 = sbr.rel (0) target = $region130
        $region129: #{lstm_model_forward.4} parent=27 // pred_region
          %301 = vsyncadd %s245, 1024
        $region130: #{lstm_model_forward.4} parent=27 // pred_fallthru
          _
        %s302 = scalar_lea.vmem %s1, 192
        %s303 = scalar_lea.vmem [#allocation4], 192
        %s304 = scalar_lea.sflag [#allocation5], 3
        %p306 = scmp.lt.u32.totalorder 64, 8
        %p307 = pneg %p306
        // Predicated region
        $region131: #{lstm_model_forward.4} parent=27 // pred_check
          _
        $region132: #{lstm_model_forward.4} parent=27 // pred_check_branch
          %309 = sbr.rel (%p306) target = $region134
        $region133: #{lstm_model_forward.4} parent=27 // pred_region
          %s324 = sand.u32 64, 7
          %p325 = scmp.eq.s32.totalorder %s324, 0
          // Predicated region
          $region146: #{lstm_model_forward.4} parent=133 // pred_check
            %p326 = pneg %p325
          $region147: #{lstm_model_forward.4} parent=133 // pred_check_branch
            %328 = sbr.rel (%p326) target = $region149
          $region148: #{lstm_model_forward.4} parent=133 // pred_region
            loop: start=0, step=1, limit=1
            $region150: #{lstm_model_forward.4} parent=148 // loop_pre_header
              _
            $region151: #{lstm_model_forward.4} parent=148 // loop_header
              %s330 = sphi 0, %s334
              %p331 = scmp.ge.s32.totalorder %s330, 1
              %s335 = sphi %s302, %s302
              %s336 = sphi %s303, %s303
            $region152: #{lstm_model_forward.4} parent=148 // loop_header_branch
              %333 = sbr.rel (%p331) target = $region156
            $region153: #{lstm_model_forward.4} parent=148 // loop_body
              %v337 = vld [vmem:[%s335] sm:$0xff]
              %338 = vst [vmem:[%s336] sm:$0xff] %v337
              %v339 = vld [vmem:[%s335 + $0x8] sm:$0xff]
              %340 = vst [vmem:[%s336 + $0x8] sm:$0xff] %v339
              %v341 = vld [vmem:[%s335 + $0x10] sm:$0xff]
              %342 = vst [vmem:[%s336 + $0x10] sm:$0xff] %v341
              %v343 = vld [vmem:[%s335 + $0x18] sm:$0xff]
              %344 = vst [vmem:[%s336 + $0x18] sm:$0xff] %v343
              %v345 = vld [vmem:[%s335 + $0x20] sm:$0xff]
              %346 = vst [vmem:[%s336 + $0x20] sm:$0xff] %v345
              %v347 = vld [vmem:[%s335 + $0x28] sm:$0xff]
              %348 = vst [vmem:[%s336 + $0x28] sm:$0xff] %v347
              %v349 = vld [vmem:[%s335 + $0x30] sm:$0xff]
              %350 = vst [vmem:[%s336 + $0x30] sm:$0xff] %v349
              %v351 = vld [vmem:[%s335 + $0x38] sm:$0xff]
              %352 = vst [vmem:[%s336 + $0x38] sm:$0xff] %v351
            $region154: #{lstm_model_forward.4} parent=148 // loop_footer
              %s334 = sadd.s32 1, %s330
            $region155: #{lstm_model_forward.4} parent=148 // loop_footer_branch
              %329 = sbr.rel target = $region151
            $region156: #{lstm_model_forward.4} parent=148 // loop_exit
              _
          $region149: #{lstm_model_forward.4} parent=133 // pred_fallthru
            _
          %p353 = pneg %p325
          // Predicated region
          $region157: #{lstm_model_forward.4} parent=133 // pred_check
            _
          $region158: #{lstm_model_forward.4} parent=133 // pred_check_branch
            %355 = sbr.rel (%p325) target = $region160
          $region159: #{lstm_model_forward.4} parent=133 // pred_region
            %s356 = sand.u32 64, 7
          $region160: #{lstm_model_forward.4} parent=133 // pred_fallthru
            _
        $region134: #{lstm_model_forward.4} parent=27 // pred_fallthru
          _
        // Predicated region
        $region135: #{lstm_model_forward.4} parent=27 // pred_check
          %p310 = pneg %p306
        $region136: #{lstm_model_forward.4} parent=27 // pred_check_branch
          %312 = sbr.rel (%p310) target = $region138
        $region137: #{lstm_model_forward.4} parent=27 // pred_region
          %s313 = sshllo.u32 0, 64
          loop: start=0, step=1, limit=1
          $region139: #{lstm_model_forward.4} parent=137 // loop_pre_header
            _
          $region140: #{lstm_model_forward.4} parent=137 // loop_header
            %s315 = sphi 0, %s319
            %p316 = scmp.ge.s32.totalorder %s315, 1
            %s320 = sphi %s302, %s302
            %s321 = sphi %s303, %s303
          $region141: #{lstm_model_forward.4} parent=137 // loop_header_branch
            %318 = sbr.rel (%p316) target = $region145
          $region142: #{lstm_model_forward.4} parent=137 // loop_body
            %v322 = vld [vmem:[%s320] sm:%s313]
            %323 = vst [vmem:[%s321] sm:%s313] %v322
          $region143: #{lstm_model_forward.4} parent=137 // loop_footer
            %s319 = sadd.s32 1, %s315
          $region144: #{lstm_model_forward.4} parent=137 // loop_footer_branch
            %314 = sbr.rel target = $region140
          $region145: #{lstm_model_forward.4} parent=137 // loop_exit
            _
        $region138: #{lstm_model_forward.4} parent=27 // pred_fallthru
          _
        // Predicated region
        $region161: #{lstm_model_forward.4} parent=27 // pred_check
          _
        $region162: #{lstm_model_forward.4} parent=27 // pred_check_branch
          %359 = sbr.rel (0) target = $region164
        $region163: #{lstm_model_forward.4} parent=27 // pred_region
          %360 = vsyncadd %s304, 1024
        $region164: #{lstm_model_forward.4} parent=27 // pred_fallthru
          _
      $region28: #{lstm_model_forward.4} parent=23 // pred_fallthru
        _
      %v361 = vld [vmem:[#allocation2] sm:$0xff]
      %v362 = vpack.c.bf16 %v361, %v361
      %v363 = vld [vmem:[#allocation3] sm:$0xff]
      // Predicated region
      $region165: #{lstm_model_forward.4} parent=23 // pred_check
        %p364 = pneg %p122
      $region166: #{lstm_model_forward.4} parent=23 // pred_check_branch
        %366 = sbr.rel (%p364) target = $region168
      $region167: #{lstm_model_forward.4} parent=23 // pred_region
        %s367 = smul.u32 4, 16
        %s368 = smul.u32 %s367, 1
        %s369 = sshll.u32 %s368, 4
        %370 = dma.done [#allocation5], %s369
      $region168: #{lstm_model_forward.4} parent=23 // pred_fallthru
        _
      %v371 = vld [vmem:[%s113] sm:$0xf]
      %v372 = vunpack.c.l.bf16 %v371
      %v373 = vld [vmem:[#allocation4] sm:$0xff]
      %v374 = vld [vmem:[#allocation4 + $0x8] sm:$0xff]
      %v375 = vld [vmem:[#allocation4 + $0x10] sm:$0xff]
      %v376 = vld [vmem:[#allocation4 + $0x18] sm:$0xff]
      %v377 = vld [vmem:[#allocation4 + $0x20] sm:$0xff]
      %v378 = vld [vmem:[#allocation4 + $0x28] sm:$0xff]
      %v379 = vld [vmem:[#allocation4 + $0x30] sm:$0xff]
      %v380 = vld [vmem:[#allocation4 + $0x38] sm:$0xff]
      %381 = vmatprep.subr.bf16.mxu0 0
      %382 = vmatpush1.bf16.msra.mxu0 %v373
      %383 = vmatprep.subr.bf16.mxu0 0
      %384 = vmatpush1.bf16.msra.mxu0 %v374
      %385 = vmatprep.subr.bf16.mxu0 0
      %386 = vmatpush1.bf16.msra.mxu0 %v375
      %387 = vmatprep.subr.bf16.mxu0 0
      %388 = vmatpush1.bf16.msra.mxu0 %v376
      %389 = vmatprep.subr.bf16.mxu0 0
      %390 = vmatpush1.bf16.msra.mxu0 %v377
      %391 = vmatprep.subr.bf16.mxu0 0
      %392 = vmatpush1.bf16.msra.mxu0 %v378
      %393 = vmatprep.subr.bf16.mxu0 0
      %394 = vmatpush1.bf16.msra.mxu0 %v379
      %395 = vmatprep.subr.bf16.mxu0 0
      %396 = vmatpush1.bf16.msra.mxu0 %v380
      %397 = vmatprep.subr.bf16.mxu0 0
      %398 = vmatpush1.bf16.msra.mxu0 0
      %399 = vmatprep.subr.bf16.mxu0 0
      %400 = vmatpush1.bf16.msra.mxu0 0
      %401 = vmatprep.subr.bf16.mxu0 0
      %402 = vmatpush1.bf16.msra.mxu0 0
      %403 = vmatprep.subr.bf16.mxu0 0
      %404 = vmatpush1.bf16.msra.mxu0 0
      %405 = vmatprep.subr.bf16.mxu0 0
      %406 = vmatpush1.bf16.msra.mxu0 0
      %407 = vmatprep.subr.bf16.mxu0 0
      %408 = vmatpush1.bf16.msra.mxu0 0
      %409 = vmatprep.subr.bf16.mxu0 0
      %410 = vmatpush1.bf16.msra.mxu0 0
      %411 = vmatprep.subr.bf16.mxu0 0
      %412 = vmatpush1.bf16.msra.mxu0 0
      %413 = vmatprep.mubr.bf16.mxu0 0
      %414 = vmatmul.mubr.bf16.gmra.mrb[0].mxu0 %v362
      %v415 = vpop.f32.mrb[0].mxu0
      %v416 = vadd.f32 0.0, %v415
      %v417 = vpop.f32.mrb[0].mxu0
      %v418 = vpop.f32.mrb[0].mxu0
      %v419 = vpop.f32.mrb[0].mxu0
      %420 = vdwg.mxu0
      %v421 = vadd.f32 %v372, %v416
      %v422 = vxor.u32 %v421, 2147483648
      %v423 = vmul.f32 %v422, 1.442695
      %v424 = vpow.pop %v423
      %v425 = vadd.f32 %v424, 1.0
      %v426 = vrcp.pop %v425
      %v427 = vmul.f32 1.0, %v426
      // Predicated region
      $region169: #{lstm_model_forward.4} parent=23 // pred_check
        %p428 = pneg %p122
      $region170: #{lstm_model_forward.4} parent=23 // pred_check_branch
        %430 = sbr.rel (%p428) target = $region172
      $region171: #{lstm_model_forward.4} parent=23 // pred_region
        %s431 = scalar_lea.sflag [#allocation5], 1
        %s432 = smul.u32 4, 16
        %s433 = smul.u32 %s432, 1
        %s434 = sshll.u32 %s433, 4
        %435 = dma.done %s431, %s434
      $region172: #{lstm_model_forward.4} parent=23 // pred_fallthru
        _
      %v436 = vld [vmem:[%s113 + $0x4] sm:$0xf]
      %v437 = vunpack.c.l.bf16 %v436
      %s438 = scalar_lea.vmem [#allocation4], 64
      %v439 = vld [vmem:[%s438] sm:$0xff]
      %v440 = vld [vmem:[%s438 + $0x8] sm:$0xff]
      %v441 = vld [vmem:[%s438 + $0x10] sm:$0xff]
      %v442 = vld [vmem:[%s438 + $0x18] sm:$0xff]
      %v443 = vld [vmem:[%s438 + $0x20] sm:$0xff]
      %v444 = vld [vmem:[%s438 + $0x28] sm:$0xff]
      %v445 = vld [vmem:[%s438 + $0x30] sm:$0xff]
      %v446 = vld [vmem:[%s438 + $0x38] sm:$0xff]
      %447 = vmatprep.subr.bf16.mxu0 0
      %448 = vmatpush1.bf16.msra.mxu0 %v439
      %449 = vmatprep.subr.bf16.mxu0 0
      %450 = vmatpush1.bf16.msra.mxu0 %v440
      %451 = vmatprep.subr.bf16.mxu0 0
      %452 = vmatpush1.bf16.msra.mxu0 %v441
      %453 = vmatprep.subr.bf16.mxu0 0
      %454 = vmatpush1.bf16.msra.mxu0 %v442
      %455 = vmatprep.subr.bf16.mxu0 0
      %456 = vmatpush1.bf16.msra.mxu0 %v443
      %457 = vmatprep.subr.bf16.mxu0 0
      %458 = vmatpush1.bf16.msra.mxu0 %v444
      %459 = vmatprep.subr.bf16.mxu0 0
      %460 = vmatpush1.bf16.msra.mxu0 %v445
      %461 = vmatprep.subr.bf16.mxu0 0
      %462 = vmatpush1.bf16.msra.mxu0 %v446
      %463 = vmatprep.subr.bf16.mxu0 0
      %464 = vmatpush1.bf16.msra.mxu0 0
      %465 = vmatprep.subr.bf16.mxu0 0
      %466 = vmatpush1.bf16.msra.mxu0 0
      %467 = vmatprep.subr.bf16.mxu0 0
      %468 = vmatpush1.bf16.msra.mxu0 0
      %469 = vmatprep.subr.bf16.mxu0 0
      %470 = vmatpush1.bf16.msra.mxu0 0
      %471 = vmatprep.subr.bf16.mxu0 0
      %472 = vmatpush1.bf16.msra.mxu0 0
      %473 = vmatprep.subr.bf16.mxu0 0
      %474 = vmatpush1.bf16.msra.mxu0 0
      %475 = vmatprep.subr.bf16.mxu0 0
      %476 = vmatpush1.bf16.msra.mxu0 0
      %477 = vmatprep.subr.bf16.mxu0 0
      %478 = vmatpush1.bf16.msra.mxu0 0
      %479 = vmatprep.mubr.bf16.mxu0 0
      %480 = vmatmul.mubr.bf16.gmra.mrb[0].mxu0 %v362
      %v481 = vpop.f32.mrb[0].mxu0
      %v482 = vadd.f32 0.0, %v481
      %v483 = vpop.f32.mrb[0].mxu0
      %v484 = vpop.f32.mrb[0].mxu0
      %v485 = vpop.f32.mrb[0].mxu0
      %486 = vdwg.mxu0
      %v487 = vadd.f32 %v437, %v482
      %v488 = vxor.u32 %v487, 2147483648
      %v489 = vmul.f32 %v488, 1.442695
      %v490 = vpow.pop %v489
      %v491 = vadd.f32 %v490, 1.0
      %v492 = vrcp.pop %v491
      %v493 = vmul.f32 1.0, %v492
      // Predicated region
      $region173: #{lstm_model_forward.4} parent=23 // pred_check
        %p494 = pneg %p122
      $region174: #{lstm_model_forward.4} parent=23 // pred_check_branch
        %496 = sbr.rel (%p494) target = $region176
      $region175: #{lstm_model_forward.4} parent=23 // pred_region
        %s497 = scalar_lea.sflag [#allocation5], 2
        %s498 = smul.u32 4, 16
        %s499 = smul.u32 %s498, 1
        %s500 = sshll.u32 %s499, 4
        %501 = dma.done %s497, %s500
      $region176: #{lstm_model_forward.4} parent=23 // pred_fallthru
        _
      %v502 = vld [vmem:[%s113 + $0x8] sm:$0xf]
      %v503 = vunpack.c.l.bf16 %v502
      %s504 = scalar_lea.vmem [#allocation4], 128
      %v505 = vld [vmem:[%s504] sm:$0xff]
      %v506 = vld [vmem:[%s504 + $0x8] sm:$0xff]
      %v507 = vld [vmem:[%s504 + $0x10] sm:$0xff]
      %v508 = vld [vmem:[%s504 + $0x18] sm:$0xff]
      %v509 = vld [vmem:[%s504 + $0x20] sm:$0xff]
      %v510 = vld [vmem:[%s504 + $0x28] sm:$0xff]
      %v511 = vld [vmem:[%s504 + $0x30] sm:$0xff]
      %v512 = vld [vmem:[%s504 + $0x38] sm:$0xff]
      %513 = vmatprep.subr.bf16.mxu0 0
      %514 = vmatpush1.bf16.msra.mxu0 %v505
      %515 = vmatprep.subr.bf16.mxu0 0
      %516 = vmatpush1.bf16.msra.mxu0 %v506
      %517 = vmatprep.subr.bf16.mxu0 0
      %518 = vmatpush1.bf16.msra.mxu0 %v507
      %519 = vmatprep.subr.bf16.mxu0 0
      %520 = vmatpush1.bf16.msra.mxu0 %v508
      %521 = vmatprep.subr.bf16.mxu0 0
      %522 = vmatpush1.bf16.msra.mxu0 %v509
      %523 = vmatprep.subr.bf16.mxu0 0
      %524 = vmatpush1.bf16.msra.mxu0 %v510
      %525 = vmatprep.subr.bf16.mxu0 0
      %526 = vmatpush1.bf16.msra.mxu0 %v511
      %527 = vmatprep.subr.bf16.mxu0 0
      %528 = vmatpush1.bf16.msra.mxu0 %v512
      %529 = vmatprep.subr.bf16.mxu0 0
      %530 = vmatpush1.bf16.msra.mxu0 0
      %531 = vmatprep.subr.bf16.mxu0 0
      %532 = vmatpush1.bf16.msra.mxu0 0
      %533 = vmatprep.subr.bf16.mxu0 0
      %534 = vmatpush1.bf16.msra.mxu0 0
      %535 = vmatprep.subr.bf16.mxu0 0
      %536 = vmatpush1.bf16.msra.mxu0 0
      %537 = vmatprep.subr.bf16.mxu0 0
      %538 = vmatpush1.bf16.msra.mxu0 0
      %539 = vmatprep.subr.bf16.mxu0 0
      %540 = vmatpush1.bf16.msra.mxu0 0
      %541 = vmatprep.subr.bf16.mxu0 0
      %542 = vmatpush1.bf16.msra.mxu0 0
      %543 = vmatprep.subr.bf16.mxu0 0
      %544 = vmatpush1.bf16.msra.mxu0 0
      %545 = vmatprep.mubr.bf16.mxu0 0
      %546 = vmatmul.mubr.bf16.gmra.mrb[0].mxu0 %v362
      %v547 = vpop.f32.mrb[0].mxu0
      %v548 = vadd.f32 0.0, %v547
      %v549 = vpop.f32.mrb[0].mxu0
      %v550 = vpop.f32.mrb[0].mxu0
      %v551 = vpop.f32.mrb[0].mxu0
      %552 = vdwg.mxu0
      %v553 = vadd.f32 %v503, %v548
      %v554 = vtanh.pop %v553
      // Predicated region
      $region177: #{lstm_model_forward.4} parent=23 // pred_check
        %p555 = pneg %p122
      $region178: #{lstm_model_forward.4} parent=23 // pred_check_branch
        %557 = sbr.rel (%p555) target = $region180
      $region179: #{lstm_model_forward.4} parent=23 // pred_region
        %s558 = scalar_lea.sflag [#allocation5], 3
        %s559 = smul.u32 4, 16
        %s560 = smul.u32 %s559, 1
        %s561 = sshll.u32 %s560, 4
        %562 = dma.done %s558, %s561
      $region180: #{lstm_model_forward.4} parent=23 // pred_fallthru
        _
      %v563 = vld [vmem:[%s113 + $0xc] sm:$0xf]
      %v564 = vunpack.c.l.bf16 %v563
      %s565 = scalar_lea.vmem [#allocation4], 192
      %v566 = vld [vmem:[%s565] sm:$0xff]
      %v567 = vld [vmem:[%s565 + $0x8] sm:$0xff]
      %v568 = vld [vmem:[%s565 + $0x10] sm:$0xff]
      %v569 = vld [vmem:[%s565 + $0x18] sm:$0xff]
      %v570 = vld [vmem:[%s565 + $0x20] sm:$0xff]
      %v571 = vld [vmem:[%s565 + $0x28] sm:$0xff]
      %v572 = vld [vmem:[%s565 + $0x30] sm:$0xff]
      %v573 = vld [vmem:[%s565 + $0x38] sm:$0xff]
      %574 = vmatprep.subr.bf16.mxu0 0
      %575 = vmatpush1.bf16.msra.mxu0 %v566
      %576 = vmatprep.subr.bf16.mxu0 0
      %577 = vmatpush1.bf16.msra.mxu0 %v567
      %578 = vmatprep.subr.bf16.mxu0 0
      %579 = vmatpush1.bf16.msra.mxu0 %v568
      %580 = vmatprep.subr.bf16.mxu0 0
      %581 = vmatpush1.bf16.msra.mxu0 %v569
      %582 = vmatprep.subr.bf16.mxu0 0
      %583 = vmatpush1.bf16.msra.mxu0 %v570
      %584 = vmatprep.subr.bf16.mxu0 0
      %585 = vmatpush1.bf16.msra.mxu0 %v571
      %586 = vmatprep.subr.bf16.mxu0 0
      %587 = vmatpush1.bf16.msra.mxu0 %v572
      %588 = vmatprep.subr.bf16.mxu0 0
      %589 = vmatpush1.bf16.msra.mxu0 %v573
      %590 = vmatprep.subr.bf16.mxu0 0
      %591 = vmatpush1.bf16.msra.mxu0 0
      %592 = vmatprep.subr.bf16.mxu0 0
      %593 = vmatpush1.bf16.msra.mxu0 0
      %594 = vmatprep.subr.bf16.mxu0 0
      %595 = vmatpush1.bf16.msra.mxu0 0
      %596 = vmatprep.subr.bf16.mxu0 0
      %597 = vmatpush1.bf16.msra.mxu0 0
      %598 = vmatprep.subr.bf16.mxu0 0
      %599 = vmatpush1.bf16.msra.mxu0 0
      %600 = vmatprep.subr.bf16.mxu0 0
      %601 = vmatpush1.bf16.msra.mxu0 0
      %602 = vmatprep.subr.bf16.mxu0 0
      %603 = vmatpush1.bf16.msra.mxu0 0
      %604 = vmatprep.subr.bf16.mxu0 0
      %605 = vmatpush1.bf16.msra.mxu0 0
      %606 = vmatprep.mubr.bf16.mxu0 0
      %607 = vmatmul.mubr.bf16.gmra.mrb[0].mxu0 %v362
      %v608 = vpop.f32.mrb[0].mxu0
      %v609 = vadd.f32 0.0, %v608
      %v610 = vpop.f32.mrb[0].mxu0
      %v611 = vpop.f32.mrb[0].mxu0
      %v612 = vpop.f32.mrb[0].mxu0
      %613 = vdwg.mxu0
      %v614 = vadd.f32 %v564, %v609
      %v615 = vxor.u32 %v614, 2147483648
      %v616 = vmul.f32 %v615, 1.442695
      %v617 = vpow.pop %v616
      %v618 = vadd.f32 %v617, 1.0
      %v619 = vrcp.pop %v618
      %v620 = vmul.f32 1.0, %v619
      %v621 = vmul.f32 %v493, %v363
      %v622 = vmul.f32 %v427, %v554
      %v623 = vadd.f32 %v621, %v622
      %v624 = vtanh.pop %v623
      %v625 = vmul.f32 %v620, %v624
      %626 = vst [vmem:[#allocation3] sm:$0xff] %v623
      %627 = vst [vmem:[#allocation2] sm:$0xff] %v625
      %v628 = vpack.c.bf16 %v625, %v625
      %629 = vst [vmem:[%s119] sm:$0xf] %v628
      %v630 = vld [vmem:[#allocation2] sm:$0xff]
      %v631 = vpack.c.bf16 %v630, %v630
      %v632 = vld [vmem:[#allocation3] sm:$0xff]
      %v633 = vld [vmem:[%s113 + $0x10] sm:$0xf]
      %v634 = vunpack.c.l.bf16 %v633
      %v635 = vld [vmem:[#allocation4] sm:$0xff]
      %v636 = vld [vmem:[#allocation4 + $0x8] sm:$0xff]
      %v637 = vld [vmem:[#allocation4 + $0x10] sm:$0xff]
      %v638 = vld [vmem:[#allocation4 + $0x18] sm:$0xff]
      %v639 = vld [vmem:[#allocation4 + $0x20] sm:$0xff]
      %v640 = vld [vmem:[#allocation4 + $0x28] sm:$0xff]
      %v641 = vld [vmem:[#allocation4 + $0x30] sm:$0xff]
      %v642 = vld [vmem:[#allocation4 + $0x38] sm:$0xff]
      %643 = vmatprep.subr.bf16.mxu0 0
      %644 = vmatpush1.bf16.msra.mxu0 %v635
      %645 = vmatprep.subr.bf16.mxu0 0
      %646 = vmatpush1.bf16.msra.mxu0 %v636
      %647 = vmatprep.subr.bf16.mxu0 0
      %648 = vmatpush1.bf16.msra.mxu0 %v637
      %649 = vmatprep.subr.bf16.mxu0 0
      %650 = vmatpush1.bf16.msra.mxu0 %v638
      %651 = vmatprep.subr.bf16.mxu0 0
      %652 = vmatpush1.bf16.msra.mxu0 %v639
      %653 = vmatprep.subr.bf16.mxu0 0
      %654 = vmatpush1.bf16.msra.mxu0 %v640
      %655 = vmatprep.subr.bf16.mxu0 0
      %656 = vmatpush1.bf16.msra.mxu0 %v641
      %657 = vmatprep.subr.bf16.mxu0 0
      %658 = vmatpush1.bf16.msra.mxu0 %v642
      %659 = vmatprep.subr.bf16.mxu0 0
      %660 = vmatpush1.bf16.msra.mxu0 0
      %661 = vmatprep.subr.bf16.mxu0 0
      %662 = vmatpush1.bf16.msra.mxu0 0
      %663 = vmatprep.subr.bf16.mxu0 0
      %664 = vmatpush1.bf16.msra.mxu0 0
      %665 = vmatprep.subr.bf16.mxu0 0
      %666 = vmatpush1.bf16.msra.mxu0 0
      %667 = vmatprep.subr.bf16.mxu0 0
      %668 = vmatpush1.bf16.msra.mxu0 0
      %669 = vmatprep.subr.bf16.mxu0 0
      %670 = vmatpush1.bf16.msra.mxu0 0
      %671 = vmatprep.subr.bf16.mxu0 0
      %672 = vmatpush1.bf16.msra.mxu0 0
      %673 = vmatprep.subr.bf16.mxu0 0
      %674 = vmatpush1.bf16.msra.mxu0 0
      %675 = vmatprep.mubr.bf16.mxu0 0
      %676 = vmatmul.mubr.bf16.gmra.mrb[0].mxu0 %v631
      %v677 = vpop.f32.mrb[0].mxu0
      %v678 = vadd.f32 0.0, %v677
      %v679 = vpop.f32.mrb[0].mxu0
      %v680 = vpop.f32.mrb[0].mxu0
      %v681 = vpop.f32.mrb[0].mxu0
      %682 = vdwg.mxu0
      %v683 = vadd.f32 %v634, %v678
      %v684 = vxor.u32 %v683, 2147483648
      %v685 = vmul.f32 %v684, 1.442695
      %v686 = vpow.pop %v685
      %v687 = vadd.f32 %v686, 1.0
      %v688 = vrcp.pop %v687
      %v689 = vmul.f32 1.0, %v688
      %v690 = vld [vmem:[%s113 + $0x14] sm:$0xf]
      %v691 = vunpack.c.l.bf16 %v690
      %v692 = vld [vmem:[%s438] sm:$0xff]
      %v693 = vld [vmem:[%s438 + $0x8] sm:$0xff]
      %v694 = vld [vmem:[%s438 + $0x10] sm:$0xff]
      %v695 = vld [vmem:[%s438 + $0x18] sm:$0xff]
      %v696 = vld [vmem:[%s438 + $0x20] sm:$0xff]
      %v697 = vld [vmem:[%s438 + $0x28] sm:$0xff]
      %v698 = vld [vmem:[%s438 + $0x30] sm:$0xff]
      %v699 = vld [vmem:[%s438 + $0x38] sm:$0xff]
      %700 = vmatprep.subr.bf16.mxu0 0
      %701 = vmatpush1.bf16.msra.mxu0 %v692
      %702 = vmatprep.subr.bf16.mxu0 0
      %703 = vmatpush1.bf16.msra.mxu0 %v693
      %704 = vmatprep.subr.bf16.mxu0 0
      %705 = vmatpush1.bf16.msra.mxu0 %v694
      %706 = vmatprep.subr.bf16.mxu0 0
      %707 = vmatpush1.bf16.msra.mxu0 %v695
      %708 = vmatprep.subr.bf16.mxu0 0
      %709 = vmatpush1.bf16.msra.mxu0 %v696
      %710 = vmatprep.subr.bf16.mxu0 0
      %711 = vmatpush1.bf16.msra.mxu0 %v697
      %712 = vmatprep.subr.bf16.mxu0 0
      %713 = vmatpush1.bf16.msra.mxu0 %v698
      %714 = vmatprep.subr.bf16.mxu0 0
      %715 = vmatpush1.bf16.msra.mxu0 %v699
      %716 = vmatprep.subr.bf16.mxu0 0
      %717 = vmatpush1.bf16.msra.mxu0 0
      %718 = vmatprep.subr.bf16.mxu0 0
      %719 = vmatpush1.bf16.msra.mxu0 0
      %720 = vmatprep.subr.bf16.mxu0 0
      %721 = vmatpush1.bf16.msra.mxu0 0
      %722 = vmatprep.subr.bf16.mxu0 0
      %723 = vmatpush1.bf16.msra.mxu0 0
      %724 = vmatprep.subr.bf16.mxu0 0
      %725 = vmatpush1.bf16.msra.mxu0 0
      %726 = vmatprep.subr.bf16.mxu0 0
      %727 = vmatpush1.bf16.msra.mxu0 0
      %728 = vmatprep.subr.bf16.mxu0 0
      %729 = vmatpush1.bf16.msra.mxu0 0
      %730 = vmatprep.subr.bf16.mxu0 0
      %731 = vmatpush1.bf16.msra.mxu0 0
      %732 = vmatprep.mubr.bf16.mxu0 0
      %733 = vmatmul.mubr.bf16.gmra.mrb[0].mxu0 %v631
      %v734 = vpop.f32.mrb[0].mxu0
      %v735 = vadd.f32 0.0, %v734
      %v736 = vpop.f32.mrb[0].mxu0
      %v737 = vpop.f32.mrb[0].mxu0
      %v738 = vpop.f32.mrb[0].mxu0
      %739 = vdwg.mxu0
      %v740 = vadd.f32 %v691, %v735
      %v741 = vxor.u32 %v740, 2147483648
      %v742 = vmul.f32 %v741, 1.442695
      %v743 = vpow.pop %v742
      %v744 = vadd.f32 %v743, 1.0
      %v745 = vrcp.pop %v744
      %v746 = vmul.f32 1.0, %v745
      %v747 = vld [vmem:[%s113 + $0x18] sm:$0xf]
      %v748 = vunpack.c.l.bf16 %v747
      %v749 = vld [vmem:[%s504] sm:$0xff]
      %v750 = vld [vmem:[%s504 + $0x8] sm:$0xff]
      %v751 = vld [vmem:[%s504 + $0x10] sm:$0xff]
      %v752 = vld [vmem:[%s504 + $0x18] sm:$0xff]
      %v753 = vld [vmem:[%s504 + $0x20] sm:$0xff]
      %v754 = vld [vmem:[%s504 + $0x28] sm:$0xff]
      %v755 = vld [vmem:[%s504 + $0x30] sm:$0xff]
      %v756 = vld [vmem:[%s504 + $0x38] sm:$0xff]
      %757 = vmatprep.subr.bf16.mxu0 0
      %758 = vmatpush1.bf16.msra.mxu0 %v749
      %759 = vmatprep.subr.bf16.mxu0 0
      %760 = vmatpush1.bf16.msra.mxu0 %v750
      %761 = vmatprep.subr.bf16.mxu0 0
      %762 = vmatpush1.bf16.msra.mxu0 %v751
      %763 = vmatprep.subr.bf16.mxu0 0
      %764 = vmatpush1.bf16.msra.mxu0 %v752
      %765 = vmatprep.subr.bf16.mxu0 0
      %766 = vmatpush1.bf16.msra.mxu0 %v753
      %767 = vmatprep.subr.bf16.mxu0 0
      %768 = vmatpush1.bf16.msra.mxu0 %v754
      %769 = vmatprep.subr.bf16.mxu0 0
      %770 = vmatpush1.bf16.msra.mxu0 %v755
      %771 = vmatprep.subr.bf16.mxu0 0
      %772 = vmatpush1.bf16.msra.mxu0 %v756
      %773 = vmatprep.subr.bf16.mxu0 0
      %774 = vmatpush1.bf16.msra.mxu0 0
      %775 = vmatprep.subr.bf16.mxu0 0
      %776 = vmatpush1.bf16.msra.mxu0 0
      %777 = vmatprep.subr.bf16.mxu0 0
      %778 = vmatpush1.bf16.msra.mxu0 0
      %779 = vmatprep.subr.bf16.mxu0 0
      %780 = vmatpush1.bf16.msra.mxu0 0
      %781 = vmatprep.subr.bf16.mxu0 0
      %782 = vmatpush1.bf16.msra.mxu0 0
      %783 = vmatprep.subr.bf16.mxu0 0
      %784 = vmatpush1.bf16.msra.mxu0 0
      %785 = vmatprep.subr.bf16.mxu0 0
      %786 = vmatpush1.bf16.msra.mxu0 0
      %787 = vmatprep.subr.bf16.mxu0 0
      %788 = vmatpush1.bf16.msra.mxu0 0
      %789 = vmatprep.mubr.bf16.mxu0 0
      %790 = vmatmul.mubr.bf16.gmra.mrb[0].mxu0 %v631
      %v791 = vpop.f32.mrb[0].mxu0
      %v792 = vadd.f32 0.0, %v791
      %v793 = vpop.f32.mrb[0].mxu0
      %v794 = vpop.f32.mrb[0].mxu0
      %v795 = vpop.f32.mrb[0].mxu0
      %796 = vdwg.mxu0
      %v797 = vadd.f32 %v748, %v792
      %v798 = vtanh.pop %v797
      %v799 = vld [vmem:[%s113 + $0x1c] sm:$0xf]
      %v800 = vunpack.c.l.bf16 %v799
      %v801 = vld [vmem:[%s565] sm:$0xff]
      %v802 = vld [vmem:[%s565 + $0x8] sm:$0xff]
      %v803 = vld [vmem:[%s565 + $0x10] sm:$0xff]
      %v804 = vld [vmem:[%s565 + $0x18] sm:$0xff]
      %v805 = vld [vmem:[%s565 + $0x20] sm:$0xff]
      %v806 = vld [vmem:[%s565 + $0x28] sm:$0xff]
      %v807 = vld [vmem:[%s565 + $0x30] sm:$0xff]
      %v808 = vld [vmem:[%s565 + $0x38] sm:$0xff]
      %809 = vmatprep.subr.bf16.mxu0 0
      %810 = vmatpush1.bf16.msra.mxu0 %v801
      %811 = vmatprep.subr.bf16.mxu0 0
      %812 = vmatpush1.bf16.msra.mxu0 %v802
      %813 = vmatprep.subr.bf16.mxu0 0
      %814 = vmatpush1.bf16.msra.mxu0 %v803
      %815 = vmatprep.subr.bf16.mxu0 0
      %816 = vmatpush1.bf16.msra.mxu0 %v804
      %817 = vmatprep.subr.bf16.mxu0 0
      %818 = vmatpush1.bf16.msra.mxu0 %v805
      %819 = vmatprep.subr.bf16.mxu0 0
      %820 = vmatpush1.bf16.msra.mxu0 %v806
      %821 = vmatprep.subr.bf16.mxu0 0
      %822 = vmatpush1.bf16.msra.mxu0 %v807
      %823 = vmatprep.subr.bf16.mxu0 0
      %824 = vmatpush1.bf16.msra.mxu0 %v808
      %825 = vmatprep.subr.bf16.mxu0 0
      %826 = vmatpush1.bf16.msra.mxu0 0
      %827 = vmatprep.subr.bf16.mxu0 0
      %828 = vmatpush1.bf16.msra.mxu0 0
      %829 = vmatprep.subr.bf16.mxu0 0
      %830 = vmatpush1.bf16.msra.mxu0 0
      %831 = vmatprep.subr.bf16.mxu0 0
      %832 = vmatpush1.bf16.msra.mxu0 0
      %833 = vmatprep.subr.bf16.mxu0 0
      %834 = vmatpush1.bf16.msra.mxu0 0
      %835 = vmatprep.subr.bf16.mxu0 0
      %836 = vmatpush1.bf16.msra.mxu0 0
      %837 = vmatprep.subr.bf16.mxu0 0
      %838 = vmatpush1.bf16.msra.mxu0 0
      %839 = vmatprep.subr.bf16.mxu0 0
      %840 = vmatpush1.bf16.msra.mxu0 0
      %841 = vmatprep.mubr.bf16.mxu0 0
      %842 = vmatmul.mubr.bf16.gmra.mrb[0].mxu0 %v631
      %v843 = vpop.f32.mrb[0].mxu0
      %v844 = vadd.f32 0.0, %v843
      %v845 = vpop.f32.mrb[0].mxu0
      %v846 = vpop.f32.mrb[0].mxu0
      %v847 = vpop.f32.mrb[0].mxu0
      %848 = vdwg.mxu0
      %v849 = vadd.f32 %v800, %v844
      %v850 = vxor.u32 %v849, 2147483648
      %v851 = vmul.f32 %v850, 1.442695
      %v852 = vpow.pop %v851
      %v853 = vadd.f32 %v852, 1.0
      %v854 = vrcp.pop %v853
      %v855 = vmul.f32 1.0, %v854
      %v856 = vmul.f32 %v746, %v632
      %v857 = vmul.f32 %v689, %v798
      %v858 = vadd.f32 %v856, %v857
      %v859 = vtanh.pop %v858
      %v860 = vmul.f32 %v855, %v859
      %861 = vst [vmem:[#allocation3] sm:$0xff] %v858
      %862 = vst [vmem:[#allocation2] sm:$0xff] %v860
      %v863 = vpack.c.bf16 %v860, %v860
      %864 = vst [vmem:[%s119 + $0x4] sm:$0xf] %v863
      %v865 = vld [vmem:[#allocation2] sm:$0xff]
      %v866 = vpack.c.bf16 %v865, %v865
      %v867 = vld [vmem:[#allocation3] sm:$0xff]
      %v868 = vld [vmem:[%s113 + $0x20] sm:$0xf]
      %v869 = vunpack.c.l.bf16 %v868
      %v870 = vld [vmem:[#allocation4] sm:$0xff]
      %v871 = vld [vmem:[#allocation4 + $0x8] sm:$0xff]
      %v872 = vld [vmem:[#allocation4 + $0x10] sm:$0xff]
      %v873 = vld [vmem:[#allocation4 + $0x18] sm:$0xff]
      %v874 = vld [vmem:[#allocation4 + $0x20] sm:$0xff]
      %v875 = vld [vmem:[#allocation4 + $0x28] sm:$0xff]
      %v876 = vld [vmem:[#allocation4 + $0x30] sm:$0xff]
      %v877 = vld [vmem:[#allocation4 + $0x38] sm:$0xff]
      %878 = vmatprep.subr.bf16.mxu0 0
      %879 = vmatpush1.bf16.msra.mxu0 %v870
      %880 = vmatprep.subr.bf16.mxu0 0
      %881 = vmatpush1.bf16.msra.mxu0 %v871
      %882 = vmatprep.subr.bf16.mxu0 0
      %883 = vmatpush1.bf16.msra.mxu0 %v872
      %884 = vmatprep.subr.bf16.mxu0 0
      %885 = vmatpush1.bf16.msra.mxu0 %v873
      %886 = vmatprep.subr.bf16.mxu0 0
      %887 = vmatpush1.bf16.msra.mxu0 %v874
      %888 = vmatprep.subr.bf16.mxu0 0
      %889 = vmatpush1.bf16.msra.mxu0 %v875
      %890 = vmatprep.subr.bf16.mxu0 0
      %891 = vmatpush1.bf16.msra.mxu0 %v876
      %892 = vmatprep.subr.bf16.mxu0 0
      %893 = vmatpush1.bf16.msra.mxu0 %v877
      %894 = vmatprep.subr.bf16.mxu0 0
      %895 = vmatpush1.bf16.msra.mxu0 0
      %896 = vmatprep.subr.bf16.mxu0 0
      %897 = vmatpush1.bf16.msra.mxu0 0
      %898 = vmatprep.subr.bf16.mxu0 0
      %899 = vmatpush1.bf16.msra.mxu0 0
      %900 = vmatprep.subr.bf16.mxu0 0
      %901 = vmatpush1.bf16.msra.mxu0 0
      %902 = vmatprep.subr.bf16.mxu0 0
      %903 = vmatpush1.bf16.msra.mxu0 0
      %904 = vmatprep.subr.bf16.mxu0 0
      %905 = vmatpush1.bf16.msra.mxu0 0
      %906 = vmatprep.subr.bf16.mxu0 0
      %907 = vmatpush1.bf16.msra.mxu0 0
      %908 = vmatprep.subr.bf16.mxu0 0
      %909 = vmatpush1.bf16.msra.mxu0 0
      %910 = vmatprep.mubr.bf16.mxu0 0
      %911 = vmatmul.mubr.bf16.gmra.mrb[0].mxu0 %v866
      %v912 = vpop.f32.mrb[0].mxu0
      %v913 = vadd.f32 0.0, %v912
      %v914 = vpop.f32.mrb[0].mxu0
      %v915 = vpop.f32.mrb[0].mxu0
      %v916 = vpop.f32.mrb[0].mxu0
      %917 = vdwg.mxu0
      %v918 = vadd.f32 %v869, %v913
      %v919 = vxor.u32 %v918, 2147483648
      %v920 = vmul.f32 %v919, 1.442695
      %v921 = vpow.pop %v920
      %v922 = vadd.f32 %v921, 1.0
      %v923 = vrcp.pop %v922
      %v924 = vmul.f32 1.0, %v923
      %v925 = vld [vmem:[%s113 + $0x24] sm:$0xf]
      %v926 = vunpack.c.l.bf16 %v925
      %v927 = vld [vmem:[%s438] sm:$0xff]
      %v928 = vld [vmem:[%s438 + $0x8] sm:$0xff]
      %v929 = vld [vmem:[%s438 + $0x10] sm:$0xff]
      %v930 = vld [vmem:[%s438 + $0x18] sm:$0xff]
      %v931 = vld [vmem:[%s438 + $0x20] sm:$0xff]
      %v932 = vld [vmem:[%s438 + $0x28] sm:$0xff]
      %v933 = vld [vmem:[%s438 + $0x30] sm:$0xff]
      %v934 = vld [vmem:[%s438 + $0x38] sm:$0xff]
      %935 = vmatprep.subr.bf16.mxu0 0
      %936 = vmatpush1.bf16.msra.mxu0 %v927
      %937 = vmatprep.subr.bf16.mxu0 0
      %938 = vmatpush1.bf16.msra.mxu0 %v928
      %939 = vmatprep.subr.bf16.mxu0 0
      %940 = vmatpush1.bf16.msra.mxu0 %v929
      %941 = vmatprep.subr.bf16.mxu0 0
      %942 = vmatpush1.bf16.msra.mxu0 %v930
      %943 = vmatprep.subr.bf16.mxu0 0
      %944 = vmatpush1.bf16.msra.mxu0 %v931
      %945 = vmatprep.subr.bf16.mxu0 0
      %946 = vmatpush1.bf16.msra.mxu0 %v932
      %947 = vmatprep.subr.bf16.mxu0 0
      %948 = vmatpush1.bf16.msra.mxu0 %v933
      %949 = vmatprep.subr.bf16.mxu0 0
      %950 = vmatpush1.bf16.msra.mxu0 %v934
      %951 = vmatprep.subr.bf16.mxu0 0
      %952 = vmatpush1.bf16.msra.mxu0 0
      %953 = vmatprep.subr.bf16.mxu0 0
      %954 = vmatpush1.bf16.msra.mxu0 0
      %955 = vmatprep.subr.bf16.mxu0 0
      %956 = vmatpush1.bf16.msra.mxu0 0
      %957 = vmatprep.subr.bf16.mxu0 0
      %958 = vmatpush1.bf16.msra.mxu0 0
      %959 = vmatprep.subr.bf16.mxu0 0
      %960 = vmatpush1.bf16.msra.mxu0 0
      %961 = vmatprep.subr.bf16.mxu0 0
      %962 = vmatpush1.bf16.msra.mxu0 0
      %963 = vmatprep.subr.bf16.mxu0 0
      %964 = vmatpush1.bf16.msra.mxu0 0
      %965 = vmatprep.subr.bf16.mxu0 0
      %966 = vmatpush1.bf16.msra.mxu0 0
      %967 = vmatprep.mubr.bf16.mxu0 0
      %968 = vmatmul.mubr.bf16.gmra.mrb[0].mxu0 %v866
      %v969 = vpop.f32.mrb[0].mxu0
      %v970 = vadd.f32 0.0, %v969
      %v971 = vpop.f32.mrb[0].mxu0
      %v972 = vpop.f32.mrb[0].mxu0
      %v973 = vpop.f32.mrb[0].mxu0
      %974 = vdwg.mxu0
      %v975 = vadd.f32 %v926, %v970
      %v976 = vxor.u32 %v975, 2147483648
      %v977 = vmul.f32 %v976, 1.442695
      %v978 = vpow.pop %v977
      %v979 = vadd.f32 %v978, 1.0
      %v980 = vrcp.pop %v979
      %v981 = vmul.f32 1.0, %v980
      %v982 = vld [vmem:[%s113 + $0x28] sm:$0xf]
      %v983 = vunpack.c.l.bf16 %v982
      %v984 = vld [vmem:[%s504] sm:$0xff]
      %v985 = vld [vmem:[%s504 + $0x8] sm:$0xff]
      %v986 = vld [vmem:[%s504 + $0x10] sm:$0xff]
      %v987 = vld [vmem:[%s504 + $0x18] sm:$0xff]
      %v988 = vld [vmem:[%s504 + $0x20] sm:$0xff]
      %v989 = vld [vmem:[%s504 + $0x28] sm:$0xff]
      %v990 = vld [vmem:[%s504 + $0x30] sm:$0xff]
      %v991 = vld [vmem:[%s504 + $0x38] sm:$0xff]
      %992 = vmatprep.subr.bf16.mxu0 0
      %993 = vmatpush1.bf16.msra.mxu0 %v984
      %994 = vmatprep.subr.bf16.mxu0 0
      %995 = vmatpush1.bf16.msra.mxu0 %v985
      %996 = vmatprep.subr.bf16.mxu0 0
      %997 = vmatpush1.bf16.msra.mxu0 %v986
      %998 = vmatprep.subr.bf16.mxu0 0
      %999 = vmatpush1.bf16.msra.mxu0 %v987
      %1000 = vmatprep.subr.bf16.mxu0 0
      %1001 = vmatpush1.bf16.msra.mxu0 %v988
      %1002 = vmatprep.subr.bf16.mxu0 0
      %1003 = vmatpush1.bf16.msra.mxu0 %v989
      %1004 = vmatprep.subr.bf16.mxu0 0
      %1005 = vmatpush1.bf16.msra.mxu0 %v990
      %1006 = vmatprep.subr.bf16.mxu0 0
      %1007 = vmatpush1.bf16.msra.mxu0 %v991
      %1008 = vmatprep.subr.bf16.mxu0 0
      %1009 = vmatpush1.bf16.msra.mxu0 0
      %1010 = vmatprep.subr.bf16.mxu0 0
      %1011 = vmatpush1.bf16.msra.mxu0 0
      %1012 = vmatprep.subr.bf16.mxu0 0
      %1013 = vmatpush1.bf16.msra.mxu0 0
      %1014 = vmatprep.subr.bf16.mxu0 0
      %1015 = vmatpush1.bf16.msra.mxu0 0
      %1016 = vmatprep.subr.bf16.mxu0 0
      %1017 = vmatpush1.bf16.msra.mxu0 0
      %1018 = vmatprep.subr.bf16.mxu0 0
      %1019 = vmatpush1.bf16.msra.mxu0 0
      %1020 = vmatprep.subr.bf16.mxu0 0
      %1021 = vmatpush1.bf16.msra.mxu0 0
      %1022 = vmatprep.subr.bf16.mxu0 0
      %1023 = vmatpush1.bf16.msra.mxu0 0
      %1024 = vmatprep.mubr.bf16.mxu0 0
      %1025 = vmatmul.mubr.bf16.gmra.mrb[0].mxu0 %v866
      %v1026 = vpop.f32.mrb[0].mxu0
      %v1027 = vadd.f32 0.0, %v1026
      %v1028 = vpop.f32.mrb[0].mxu0
      %v1029 = vpop.f32.mrb[0].mxu0
      %v1030 = vpop.f32.mrb[0].mxu0
      %1031 = vdwg.mxu0
      %v1032 = vadd.f32 %v983, %v1027
      %v1033 = vtanh.pop %v1032
      %v1034 = vld [vmem:[%s113 + $0x2c] sm:$0xf]
      %v1035 = vunpack.c.l.bf16 %v1034
      %v1036 = vld [vmem:[%s565] sm:$0xff]
      %v1037 = vld [vmem:[%s565 + $0x8] sm:$0xff]
      %v1038 = vld [vmem:[%s565 + $0x10] sm:$0xff]
      %v1039 = vld [vmem:[%s565 + $0x18] sm:$0xff]
      %v1040 = vld [vmem:[%s565 + $0x20] sm:$0xff]
      %v1041 = vld [vmem:[%s565 + $0x28] sm:$0xff]
      %v1042 = vld [vmem:[%s565 + $0x30] sm:$0xff]
      %v1043 = vld [vmem:[%s565 + $0x38] sm:$0xff]
      %1044 = vmatprep.subr.bf16.mxu0 0
      %1045 = vmatpush1.bf16.msra.mxu0 %v1036
      %1046 = vmatprep.subr.bf16.mxu0 0
      %1047 = vmatpush1.bf16.msra.mxu0 %v1037
      %1048 = vmatprep.subr.bf16.mxu0 0
      %1049 = vmatpush1.bf16.msra.mxu0 %v1038
      %1050 = vmatprep.subr.bf16.mxu0 0
      %1051 = vmatpush1.bf16.msra.mxu0 %v1039
      %1052 = vmatprep.subr.bf16.mxu0 0
      %1053 = vmatpush1.bf16.msra.mxu0 %v1040
      %1054 = vmatprep.subr.bf16.mxu0 0
      %1055 = vmatpush1.bf16.msra.mxu0 %v1041
      %1056 = vmatprep.subr.bf16.mxu0 0
      %1057 = vmatpush1.bf16.msra.mxu0 %v1042
      %1058 = vmatprep.subr.bf16.mxu0 0
      %1059 = vmatpush1.bf16.msra.mxu0 %v1043
      %1060 = vmatprep.subr.bf16.mxu0 0
      %1061 = vmatpush1.bf16.msra.mxu0 0
      %1062 = vmatprep.subr.bf16.mxu0 0
      %1063 = vmatpush1.bf16.msra.mxu0 0
      %1064 = vmatprep.subr.bf16.mxu0 0
      %1065 = vmatpush1.bf16.msra.mxu0 0
      %1066 = vmatprep.subr.bf16.mxu0 0
      %1067 = vmatpush1.bf16.msra.mxu0 0
      %1068 = vmatprep.subr.bf16.mxu0 0
      %1069 = vmatpush1.bf16.msra.mxu0 0
      %1070 = vmatprep.subr.bf16.mxu0 0
      %1071 = vmatpush1.bf16.msra.mxu0 0
      %1072 = vmatprep.subr.bf16.mxu0 0
      %1073 = vmatpush1.bf16.msra.mxu0 0
      %1074 = vmatprep.subr.bf16.mxu0 0
      %1075 = vmatpush1.bf16.msra.mxu0 0
      %1076 = vmatprep.mubr.bf16.mxu0 0
      %1077 = vmatmul.mubr.bf16.gmra.mrb[0].mxu0 %v866
      %v1078 = vpop.f32.mrb[0].mxu0
      %v1079 = vadd.f32 0.0, %v1078
      %v1080 = vpop.f32.mrb[0].mxu0
      %v1081 = vpop.f32.mrb[0].mxu0
      %v1082 = vpop.f32.mrb[0].mxu0
      %1083 = vdwg.mxu0
      %v1084 = vadd.f32 %v1035, %v1079
      %v1085 = vxor.u32 %v1084, 2147483648
      %v1086 = vmul.f32 %v1085, 1.442695
      %v1087 = vpow.pop %v1086
      %v1088 = vadd.f32 %v1087, 1.0
      %v1089 = vrcp.pop %v1088
      %v1090 = vmul.f32 1.0, %v1089
      %v1091 = vmul.f32 %v981, %v867
      %v1092 = vmul.f32 %v924, %v1033
      %v1093 = vadd.f32 %v1091, %v1092
      %v1094 = vtanh.pop %v1093
      %v1095 = vmul.f32 %v1090, %v1094
      %1096 = vst [vmem:[#allocation3] sm:$0xff] %v1093
      %1097 = vst [vmem:[#allocation2] sm:$0xff] %v1095
      %v1098 = vpack.c.bf16 %v1095, %v1095
      %1099 = vst [vmem:[%s119 + $0x8] sm:$0xf] %v1098
      %v1100 = vld [vmem:[#allocation2] sm:$0xff]
      %v1101 = vpack.c.bf16 %v1100, %v1100
      %v1102 = vld [vmem:[#allocation3] sm:$0xff]
      %v1103 = vld [vmem:[%s113 + $0x30] sm:$0xf]
      %v1104 = vunpack.c.l.bf16 %v1103
      %v1105 = vld [vmem:[#allocation4] sm:$0xff]
      %v1106 = vld [vmem:[#allocation4 + $0x8] sm:$0xff]
      %v1107 = vld [vmem:[#allocation4 + $0x10] sm:$0xff]
      %v1108 = vld [vmem:[#allocation4 + $0x18] sm:$0xff]
      %v1109 = vld [vmem:[#allocation4 + $0x20] sm:$0xff]
      %v1110 = vld [vmem:[#allocation4 + $0x28] sm:$0xff]
      %v1111 = vld [vmem:[#allocation4 + $0x30] sm:$0xff]
      %v1112 = vld [vmem:[#allocation4 + $0x38] sm:$0xff]
      %1113 = vmatprep.subr.bf16.mxu0 0
      %1114 = vmatpush1.bf16.msra.mxu0 %v1105
      %1115 = vmatprep.subr.bf16.mxu0 0
      %1116 = vmatpush1.bf16.msra.mxu0 %v1106
      %1117 = vmatprep.subr.bf16.mxu0 0
      %1118 = vmatpush1.bf16.msra.mxu0 %v1107
      %1119 = vmatprep.subr.bf16.mxu0 0
      %1120 = vmatpush1.bf16.msra.mxu0 %v1108
      %1121 = vmatprep.subr.bf16.mxu0 0
      %1122 = vmatpush1.bf16.msra.mxu0 %v1109
      %1123 = vmatprep.subr.bf16.mxu0 0
      %1124 = vmatpush1.bf16.msra.mxu0 %v1110
      %1125 = vmatprep.subr.bf16.mxu0 0
      %1126 = vmatpush1.bf16.msra.mxu0 %v1111
      %1127 = vmatprep.subr.bf16.mxu0 0
      %1128 = vmatpush1.bf16.msra.mxu0 %v1112
      %1129 = vmatprep.subr.bf16.mxu0 0
      %1130 = vmatpush1.bf16.msra.mxu0 0
      %1131 = vmatprep.subr.bf16.mxu0 0
      %1132 = vmatpush1.bf16.msra.mxu0 0
      %1133 = vmatprep.subr.bf16.mxu0 0
      %1134 = vmatpush1.bf16.msra.mxu0 0
      %1135 = vmatprep.subr.bf16.mxu0 0
      %1136 = vmatpush1.bf16.msra.mxu0 0
      %1137 = vmatprep.subr.bf16.mxu0 0
      %1138 = vmatpush1.bf16.msra.mxu0 0
      %1139 = vmatprep.subr.bf16.mxu0 0
      %1140 = vmatpush1.bf16.msra.mxu0 0
      %1141 = vmatprep.subr.bf16.mxu0 0
      %1142 = vmatpush1.bf16.msra.mxu0 0
      %1143 = vmatprep.subr.bf16.mxu0 0
      %1144 = vmatpush1.bf16.msra.mxu0 0
      %1145 = vmatprep.mubr.bf16.mxu0 0
      %1146 = vmatmul.mubr.bf16.gmra.mrb[0].mxu0 %v1101
      %v1147 = vpop.f32.mrb[0].mxu0
      %v1148 = vadd.f32 0.0, %v1147
      %v1149 = vpop.f32.mrb[0].mxu0
      %v1150 = vpop.f32.mrb[0].mxu0
      %v1151 = vpop.f32.mrb[0].mxu0
      %1152 = vdwg.mxu0
      %v1153 = vadd.f32 %v1104, %v1148
      %v1154 = vxor.u32 %v1153, 2147483648
      %v1155 = vmul.f32 %v1154, 1.442695
      %v1156 = vpow.pop %v1155
      %v1157 = vadd.f32 %v1156, 1.0
      %v1158 = vrcp.pop %v1157
      %v1159 = vmul.f32 1.0, %v1158
      %v1160 = vld [vmem:[%s113 + $0x34] sm:$0xf]
      %v1161 = vunpack.c.l.bf16 %v1160
      %v1162 = vld [vmem:[%s438] sm:$0xff]
      %v1163 = vld [vmem:[%s438 + $0x8] sm:$0xff]
      %v1164 = vld [vmem:[%s438 + $0x10] sm:$0xff]
      %v1165 = vld [vmem:[%s438 + $0x18] sm:$0xff]
      %v1166 = vld [vmem:[%s438 + $0x20] sm:$0xff]
      %v1167 = vld [vmem:[%s438 + $0x28] sm:$0xff]
      %v1168 = vld [vmem:[%s438 + $0x30] sm:$0xff]
      %v1169 = vld [vmem:[%s438 + $0x38] sm:$0xff]
      %1170 = vmatprep.subr.bf16.mxu0 0
      %1171 = vmatpush1.bf16.msra.mxu0 %v1162
      %1172 = vmatprep.subr.bf16.mxu0 0
      %1173 = vmatpush1.bf16.msra.mxu0 %v1163
      %1174 = vmatprep.subr.bf16.mxu0 0
      %1175 = vmatpush1.bf16.msra.mxu0 %v1164
      %1176 = vmatprep.subr.bf16.mxu0 0
      %1177 = vmatpush1.bf16.msra.mxu0 %v1165
      %1178 = vmatprep.subr.bf16.mxu0 0
      %1179 = vmatpush1.bf16.msra.mxu0 %v1166
      %1180 = vmatprep.subr.bf16.mxu0 0
      %1181 = vmatpush1.bf16.msra.mxu0 %v1167
      %1182 = vmatprep.subr.bf16.mxu0 0
      %1183 = vmatpush1.bf16.msra.mxu0 %v1168
      %1184 = vmatprep.subr.bf16.mxu0 0
      %1185 = vmatpush1.bf16.msra.mxu0 %v1169
      %1186 = vmatprep.subr.bf16.mxu0 0
      %1187 = vmatpush1.bf16.msra.mxu0 0
      %1188 = vmatprep.subr.bf16.mxu0 0
      %1189 = vmatpush1.bf16.msra.mxu0 0
      %1190 = vmatprep.subr.bf16.mxu0 0
      %1191 = vmatpush1.bf16.msra.mxu0 0
      %1192 = vmatprep.subr.bf16.mxu0 0
      %1193 = vmatpush1.bf16.msra.mxu0 0
      %1194 = vmatprep.subr.bf16.mxu0 0
      %1195 = vmatpush1.bf16.msra.mxu0 0
      %1196 = vmatprep.subr.bf16.mxu0 0
      %1197 = vmatpush1.bf16.msra.mxu0 0
      %1198 = vmatprep.subr.bf16.mxu0 0
      %1199 = vmatpush1.bf16.msra.mxu0 0
      %1200 = vmatprep.subr.bf16.mxu0 0
      %1201 = vmatpush1.bf16.msra.mxu0 0
      %1202 = vmatprep.mubr.bf16.mxu0 0
      %1203 = vmatmul.mubr.bf16.gmra.mrb[0].mxu0 %v1101
      %v1204 = vpop.f32.mrb[0].mxu0
      %v1205 = vadd.f32 0.0, %v1204
      %v1206 = vpop.f32.mrb[0].mxu0
      %v1207 = vpop.f32.mrb[0].mxu0
      %v1208 = vpop.f32.mrb[0].mxu0
      %1209 = vdwg.mxu0
      %v1210 = vadd.f32 %v1161, %v1205
      %v1211 = vxor.u32 %v1210, 2147483648
      %v1212 = vmul.f32 %v1211, 1.442695
      %v1213 = vpow.pop %v1212
      %v1214 = vadd.f32 %v1213, 1.0
      %v1215 = vrcp.pop %v1214
      %v1216 = vmul.f32 1.0, %v1215
      %v1217 = vld [vmem:[%s113 + $0x38] sm:$0xf]
      %v1218 = vunpack.c.l.bf16 %v1217
      %v1219 = vld [vmem:[%s504] sm:$0xff]
      %v1220 = vld [vmem:[%s504 + $0x8] sm:$0xff]
      %v1221 = vld [vmem:[%s504 + $0x10] sm:$0xff]
      %v1222 = vld [vmem:[%s504 + $0x18] sm:$0xff]
      %v1223 = vld [vmem:[%s504 + $0x20] sm:$0xff]
      %v1224 = vld [vmem:[%s504 + $0x28] sm:$0xff]
      %v1225 = vld [vmem:[%s504 + $0x30] sm:$0xff]
      %v1226 = vld [vmem:[%s504 + $0x38] sm:$0xff]
      %1227 = vmatprep.subr.bf16.mxu0 0
      %1228 = vmatpush1.bf16.msra.mxu0 %v1219
      %1229 = vmatprep.subr.bf16.mxu0 0
      %1230 = vmatpush1.bf16.msra.mxu0 %v1220
      %1231 = vmatprep.subr.bf16.mxu0 0
      %1232 = vmatpush1.bf16.msra.mxu0 %v1221
      %1233 = vmatprep.subr.bf16.mxu0 0
      %1234 = vmatpush1.bf16.msra.mxu0 %v1222
      %1235 = vmatprep.subr.bf16.mxu0 0
      %1236 = vmatpush1.bf16.msra.mxu0 %v1223
      %1237 = vmatprep.subr.bf16.mxu0 0
      %1238 = vmatpush1.bf16.msra.mxu0 %v1224
      %1239 = vmatprep.subr.bf16.mxu0 0
      %1240 = vmatpush1.bf16.msra.mxu0 %v1225
      %1241 = vmatprep.subr.bf16.mxu0 0
      %1242 = vmatpush1.bf16.msra.mxu0 %v1226
      %1243 = vmatprep.subr.bf16.mxu0 0
      %1244 = vmatpush1.bf16.msra.mxu0 0
      %1245 = vmatprep.subr.bf16.mxu0 0
      %1246 = vmatpush1.bf16.msra.mxu0 0
      %1247 = vmatprep.subr.bf16.mxu0 0
      %1248 = vmatpush1.bf16.msra.mxu0 0
      %1249 = vmatprep.subr.bf16.mxu0 0
      %1250 = vmatpush1.bf16.msra.mxu0 0
      %1251 = vmatprep.subr.bf16.mxu0 0
      %1252 = vmatpush1.bf16.msra.mxu0 0
      %1253 = vmatprep.subr.bf16.mxu0 0
      %1254 = vmatpush1.bf16.msra.mxu0 0
      %1255 = vmatprep.subr.bf16.mxu0 0
      %1256 = vmatpush1.bf16.msra.mxu0 0
      %1257 = vmatprep.subr.bf16.mxu0 0
      %1258 = vmatpush1.bf16.msra.mxu0 0
      %1259 = vmatprep.mubr.bf16.mxu0 0
      %1260 = vmatmul.mubr.bf16.gmra.mrb[0].mxu0 %v1101
      %v1261 = vpop.f32.mrb[0].mxu0
      %v1262 = vadd.f32 0.0, %v1261
      %v1263 = vpop.f32.mrb[0].mxu0
      %v1264 = vpop.f32.mrb[0].mxu0
      %v1265 = vpop.f32.mrb[0].mxu0
      %1266 = vdwg.mxu0
      %v1267 = vadd.f32 %v1218, %v1262
      %v1268 = vtanh.pop %v1267
      %v1269 = vld [vmem:[%s113 + $0x3c] sm:$0xf]
      %v1270 = vunpack.c.l.bf16 %v1269
      %v1271 = vld [vmem:[%s565] sm:$0xff]
      %v1272 = vld [vmem:[%s565 + $0x8] sm:$0xff]
      %v1273 = vld [vmem:[%s565 + $0x10] sm:$0xff]
      %v1274 = vld [vmem:[%s565 + $0x18] sm:$0xff]
      %v1275 = vld [vmem:[%s565 + $0x20] sm:$0xff]
      %v1276 = vld [vmem:[%s565 + $0x28] sm:$0xff]
      %v1277 = vld [vmem:[%s565 + $0x30] sm:$0xff]
      %v1278 = vld [vmem:[%s565 + $0x38] sm:$0xff]
      %1279 = vmatprep.subr.bf16.mxu0 0
      %1280 = vmatpush1.bf16.msra.mxu0 %v1271
      %1281 = vmatprep.subr.bf16.mxu0 0
      %1282 = vmatpush1.bf16.msra.mxu0 %v1272
      %1283 = vmatprep.subr.bf16.mxu0 0
      %1284 = vmatpush1.bf16.msra.mxu0 %v1273
      %1285 = vmatprep.subr.bf16.mxu0 0
      %1286 = vmatpush1.bf16.msra.mxu0 %v1274
      %1287 = vmatprep.subr.bf16.mxu0 0
      %1288 = vmatpush1.bf16.msra.mxu0 %v1275
      %1289 = vmatprep.subr.bf16.mxu0 0
      %1290 = vmatpush1.bf16.msra.mxu0 %v1276
      %1291 = vmatprep.subr.bf16.mxu0 0
      %1292 = vmatpush1.bf16.msra.mxu0 %v1277
      %1293 = vmatprep.subr.bf16.mxu0 0
      %1294 = vmatpush1.bf16.msra.mxu0 %v1278
      %1295 = vmatprep.subr.bf16.mxu0 0
      %1296 = vmatpush1.bf16.msra.mxu0 0
      %1297 = vmatprep.subr.bf16.mxu0 0
      %1298 = vmatpush1.bf16.msra.mxu0 0
      %1299 = vmatprep.subr.bf16.mxu0 0
      %1300 = vmatpush1.bf16.msra.mxu0 0
      %1301 = vmatprep.subr.bf16.mxu0 0
      %1302 = vmatpush1.bf16.msra.mxu0 0
      %1303 = vmatprep.subr.bf16.mxu0 0
      %1304 = vmatpush1.bf16.msra.mxu0 0
      %1305 = vmatprep.subr.bf16.mxu0 0
      %1306 = vmatpush1.bf16.msra.mxu0 0
      %1307 = vmatprep.subr.bf16.mxu0 0
      %1308 = vmatpush1.bf16.msra.mxu0 0
      %1309 = vmatprep.subr.bf16.mxu0 0
      %1310 = vmatpush1.bf16.msra.mxu0 0
      %1311 = vmatprep.mubr.bf16.mxu0 0
      %1312 = vmatmul.mubr.bf16.gmra.mrb[0].mxu0 %v1101
      %v1313 = vpop.f32.mrb[0].mxu0
      %v1314 = vadd.f32 0.0, %v1313
      %v1315 = vpop.f32.mrb[0].mxu0
      %v1316 = vpop.f32.mrb[0].mxu0
      %v1317 = vpop.f32.mrb[0].mxu0
      %1318 = vdwg.mxu0
      %v1319 = vadd.f32 %v1270, %v1314
      %v1320 = vxor.u32 %v1319, 2147483648
      %v1321 = vmul.f32 %v1320, 1.442695
      %v1322 = vpow.pop %v1321
      %v1323 = vadd.f32 %v1322, 1.0
      %v1324 = vrcp.pop %v1323
      %v1325 = vmul.f32 1.0, %v1324
      %v1326 = vmul.f32 %v1216, %v1102
      %v1327 = vmul.f32 %v1159, %v1268
      %v1328 = vadd.f32 %v1326, %v1327
      %v1329 = vtanh.pop %v1328
      %v1330 = vmul.f32 %v1325, %v1329
      %1331 = vst [vmem:[#allocation3] sm:$0xff] %v1328
      %1332 = vst [vmem:[#allocation2] sm:$0xff] %v1330
      %v1333 = vpack.c.bf16 %v1330, %v1330
      %1334 = vst [vmem:[%s119 + $0xc] sm:$0xf] %v1333
      %v1335 = vld [vmem:[#allocation2] sm:$0xff]
      %v1336 = vpack.c.bf16 %v1335, %v1335
      %v1337 = vld [vmem:[#allocation3] sm:$0xff]
      %v1338 = vld [vmem:[%s113 + $0x40] sm:$0xf]
      %v1339 = vunpack.c.l.bf16 %v1338
      %v1340 = vld [vmem:[#allocation4] sm:$0xff]
      %v1341 = vld [vmem:[#allocation4 + $0x8] sm:$0xff]
      %v1342 = vld [vmem:[#allocation4 + $0x10] sm:$0xff]
      %v1343 = vld [vmem:[#allocation4 + $0x18] sm:$0xff]
      %v1344 = vld [vmem:[#allocation4 + $0x20] sm:$0xff]
      %v1345 = vld [vmem:[#allocation4 + $0x28] sm:$0xff]
      %v1346 = vld [vmem:[#allocation4 + $0x30] sm:$0xff]
      %v1347 = vld [vmem:[#allocation4 + $0x38] sm:$0xff]
      %1348 = vmatprep.subr.bf16.mxu0 0
      %1349 = vmatpush1.bf16.msra.mxu0 %v1340
      %1350 = vmatprep.subr.bf16.mxu0 0
      %1351 = vmatpush1.bf16.msra.mxu0 %v1341
      %1352 = vmatprep.subr.bf16.mxu0 0
      %1353 = vmatpush1.bf16.msra.mxu0 %v1342
      %1354 = vmatprep.subr.bf16.mxu0 0
      %1355 = vmatpush1.bf16.msra.mxu0 %v1343
      %1356 = vmatprep.subr.bf16.mxu0 0
      %1357 = vmatpush1.bf16.msra.mxu0 %v1344
      %1358 = vmatprep.subr.bf16.mxu0 0
      %1359 = vmatpush1.bf16.msra.mxu0 %v1345
      %1360 = vmatprep.subr.bf16.mxu0 0
      %1361 = vmatpush1.bf16.msra.mxu0 %v1346
      %1362 = vmatprep.subr.bf16.mxu0 0
      %1363 = vmatpush1.bf16.msra.mxu0 %v1347
      %1364 = vmatprep.subr.bf16.mxu0 0
      %1365 = vmatpush1.bf16.msra.mxu0 0
      %1366 = vmatprep.subr.bf16.mxu0 0
      %1367 = vmatpush1.bf16.msra.mxu0 0
      %1368 = vmatprep.subr.bf16.mxu0 0
      %1369 = vmatpush1.bf16.msra.mxu0 0
      %1370 = vmatprep.subr.bf16.mxu0 0
      %1371 = vmatpush1.bf16.msra.mxu0 0
      %1372 = vmatprep.subr.bf16.mxu0 0
      %1373 = vmatpush1.bf16.msra.mxu0 0
      %1374 = vmatprep.subr.bf16.mxu0 0
      %1375 = vmatpush1.bf16.msra.mxu0 0
      %1376 = vmatprep.subr.bf16.mxu0 0
      %1377 = vmatpush1.bf16.msra.mxu0 0
      %1378 = vmatprep.subr.bf16.mxu0 0
      %1379 = vmatpush1.bf16.msra.mxu0 0
      %1380 = vmatprep.mubr.bf16.mxu0 0
      %1381 = vmatmul.mubr.bf16.gmra.mrb[0].mxu0 %v1336
      %v1382 = vpop.f32.mrb[0].mxu0
      %v1383 = vadd.f32 0.0, %v1382
      %v1384 = vpop.f32.mrb[0].mxu0
      %v1385 = vpop.f32.mrb[0].mxu0
      %v1386 = vpop.f32.mrb[0].mxu0
      %1387 = vdwg.mxu0
      %v1388 = vadd.f32 %v1339, %v1383
      %v1389 = vxor.u32 %v1388, 2147483648
      %v1390 = vmul.f32 %v1389, 1.442695
      %v1391 = vpow.pop %v1390
      %v1392 = vadd.f32 %v1391, 1.0
      %v1393 = vrcp.pop %v1392
      %v1394 = vmul.f32 1.0, %v1393
      %v1395 = vld [vmem:[%s113 + $0x44] sm:$0xf]
      %v1396 = vunpack.c.l.bf16 %v1395
      %v1397 = vld [vmem:[%s438] sm:$0xff]
      %v1398 = vld [vmem:[%s438 + $0x8] sm:$0xff]
      %v1399 = vld [vmem:[%s438 + $0x10] sm:$0xff]
      %v1400 = vld [vmem:[%s438 + $0x18] sm:$0xff]
      %v1401 = vld [vmem:[%s438 + $0x20] sm:$0xff]
      %v1402 = vld [vmem:[%s438 + $0x28] sm:$0xff]
      %v1403 = vld [vmem:[%s438 + $0x30] sm:$0xff]
      %v1404 = vld [vmem:[%s438 + $0x38] sm:$0xff]
      %1405 = vmatprep.subr.bf16.mxu0 0
      %1406 = vmatpush1.bf16.msra.mxu0 %v1397
      %1407 = vmatprep.subr.bf16.mxu0 0
      %1408 = vmatpush1.bf16.msra.mxu0 %v1398
      %1409 = vmatprep.subr.bf16.mxu0 0
      %1410 = vmatpush1.bf16.msra.mxu0 %v1399
      %1411 = vmatprep.subr.bf16.mxu0 0
      %1412 = vmatpush1.bf16.msra.mxu0 %v1400
      %1413 = vmatprep.subr.bf16.mxu0 0
      %1414 = vmatpush1.bf16.msra.mxu0 %v1401
      %1415 = vmatprep.subr.bf16.mxu0 0
      %1416 = vmatpush1.bf16.msra.mxu0 %v1402
      %1417 = vmatprep.subr.bf16.mxu0 0
      %1418 = vmatpush1.bf16.msra.mxu0 %v1403
      %1419 = vmatprep.subr.bf16.mxu0 0
      %1420 = vmatpush1.bf16.msra.mxu0 %v1404
      %1421 = vmatprep.subr.bf16.mxu0 0
      %1422 = vmatpush1.bf16.msra.mxu0 0
      %1423 = vmatprep.subr.bf16.mxu0 0
      %1424 = vmatpush1.bf16.msra.mxu0 0
      %1425 = vmatprep.subr.bf16.mxu0 0
      %1426 = vmatpush1.bf16.msra.mxu0 0
      %1427 = vmatprep.subr.bf16.mxu0 0
      %1428 = vmatpush1.bf16.msra.mxu0 0
      %1429 = vmatprep.subr.bf16.mxu0 0
      %1430 = vmatpush1.bf16.msra.mxu0 0
      %1431 = vmatprep.subr.bf16.mxu0 0
      %1432 = vmatpush1.bf16.msra.mxu0 0
      %1433 = vmatprep.subr.bf16.mxu0 0
      %1434 = vmatpush1.bf16.msra.mxu0 0
      %1435 = vmatprep.subr.bf16.mxu0 0
      %1436 = vmatpush1.bf16.msra.mxu0 0
      %1437 = vmatprep.mubr.bf16.mxu0 0
      %1438 = vmatmul.mubr.bf16.gmra.mrb[0].mxu0 %v1336
      %v1439 = vpop.f32.mrb[0].mxu0
      %v1440 = vadd.f32 0.0, %v1439
      %v1441 = vpop.f32.mrb[0].mxu0
      %v1442 = vpop.f32.mrb[0].mxu0
      %v1443 = vpop.f32.mrb[0].mxu0
      %1444 = vdwg.mxu0
      %v1445 = vadd.f32 %v1396, %v1440
      %v1446 = vxor.u32 %v1445, 2147483648
      %v1447 = vmul.f32 %v1446, 1.442695
      %v1448 = vpow.pop %v1447
      %v1449 = vadd.f32 %v1448, 1.0
      %v1450 = vrcp.pop %v1449
      %v1451 = vmul.f32 1.0, %v1450
      %v1452 = vld [vmem:[%s113 + $0x48] sm:$0xf]
      %v1453 = vunpack.c.l.bf16 %v1452
      %v1454 = vld [vmem:[%s504] sm:$0xff]
      %v1455 = vld [vmem:[%s504 + $0x8] sm:$0xff]
      %v1456 = vld [vmem:[%s504 + $0x10] sm:$0xff]
      %v1457 = vld [vmem:[%s504 + $0x18] sm:$0xff]
      %v1458 = vld [vmem:[%s504 + $0x20] sm:$0xff]
      %v1459 = vld [vmem:[%s504 + $0x28] sm:$0xff]
      %v1460 = vld [vmem:[%s504 + $0x30] sm:$0xff]
      %v1461 = vld [vmem:[%s504 + $0x38] sm:$0xff]
      %1462 = vmatprep.subr.bf16.mxu0 0
      %1463 = vmatpush1.bf16.msra.mxu0 %v1454
      %1464 = vmatprep.subr.bf16.mxu0 0
      %1465 = vmatpush1.bf16.msra.mxu0 %v1455
      %1466 = vmatprep.subr.bf16.mxu0 0
      %1467 = vmatpush1.bf16.msra.mxu0 %v1456
      %1468 = vmatprep.subr.bf16.mxu0 0
      %1469 = vmatpush1.bf16.msra.mxu0 %v1457
      %1470 = vmatprep.subr.bf16.mxu0 0
      %1471 = vmatpush1.bf16.msra.mxu0 %v1458
      %1472 = vmatprep.subr.bf16.mxu0 0
      %1473 = vmatpush1.bf16.msra.mxu0 %v1459
      %1474 = vmatprep.subr.bf16.mxu0 0
      %1475 = vmatpush1.bf16.msra.mxu0 %v1460
      %1476 = vmatprep.subr.bf16.mxu0 0
      %1477 = vmatpush1.bf16.msra.mxu0 %v1461
      %1478 = vmatprep.subr.bf16.mxu0 0
      %1479 = vmatpush1.bf16.msra.mxu0 0
      %1480 = vmatprep.subr.bf16.mxu0 0
      %1481 = vmatpush1.bf16.msra.mxu0 0
      %1482 = vmatprep.subr.bf16.mxu0 0
      %1483 = vmatpush1.bf16.msra.mxu0 0
      %1484 = vmatprep.subr.bf16.mxu0 0
      %1485 = vmatpush1.bf16.msra.mxu0 0
      %1486 = vmatprep.subr.bf16.mxu0 0
      %1487 = vmatpush1.bf16.msra.mxu0 0
      %1488 = vmatprep.subr.bf16.mxu0 0
      %1489 = vmatpush1.bf16.msra.mxu0 0
      %1490 = vmatprep.subr.bf16.mxu0 0
      %1491 = vmatpush1.bf16.msra.mxu0 0
      %1492 = vmatprep.subr.bf16.mxu0 0
      %1493 = vmatpush1.bf16.msra.mxu0 0
      %1494 = vmatprep.mubr.bf16.mxu0 0
      %1495 = vmatmul.mubr.bf16.gmra.mrb[0].mxu0 %v1336
      %v1496 = vpop.f32.mrb[0].mxu0
      %v1497 = vadd.f32 0.0, %v1496
      %v1498 = vpop.f32.mrb[0].mxu0
      %v1499 = vpop.f32.mrb[0].mxu0
      %v1500 = vpop.f32.mrb[0].mxu0
      %1501 = vdwg.mxu0
      %v1502 = vadd.f32 %v1453, %v1497
      %v1503 = vtanh.pop %v1502
      %v1504 = vld [vmem:[%s113 + $0x4c] sm:$0xf]
      %v1505 = vunpack.c.l.bf16 %v1504
      %v1506 = vld [vmem:[%s565] sm:$0xff]
      %v1507 = vld [vmem:[%s565 + $0x8] sm:$0xff]
      %v1508 = vld [vmem:[%s565 + $0x10] sm:$0xff]
      %v1509 = vld [vmem:[%s565 + $0x18] sm:$0xff]
      %v1510 = vld [vmem:[%s565 + $0x20] sm:$0xff]
      %v1511 = vld [vmem:[%s565 + $0x28] sm:$0xff]
      %v1512 = vld [vmem:[%s565 + $0x30] sm:$0xff]
      %v1513 = vld [vmem:[%s565 + $0x38] sm:$0xff]
      %1514 = vmatprep.subr.bf16.mxu0 0
      %1515 = vmatpush1.bf16.msra.mxu0 %v1506
      %1516 = vmatprep.subr.bf16.mxu0 0
      %1517 = vmatpush1.bf16.msra.mxu0 %v1507
      %1518 = vmatprep.subr.bf16.mxu0 0
      %1519 = vmatpush1.bf16.msra.mxu0 %v1508
      %1520 = vmatprep.subr.bf16.mxu0 0
      %1521 = vmatpush1.bf16.msra.mxu0 %v1509
      %1522 = vmatprep.subr.bf16.mxu0 0
      %1523 = vmatpush1.bf16.msra.mxu0 %v1510
      %1524 = vmatprep.subr.bf16.mxu0 0
      %1525 = vmatpush1.bf16.msra.mxu0 %v1511
      %1526 = vmatprep.subr.bf16.mxu0 0
      %1527 = vmatpush1.bf16.msra.mxu0 %v1512
      %1528 = vmatprep.subr.bf16.mxu0 0
      %1529 = vmatpush1.bf16.msra.mxu0 %v1513
      %1530 = vmatprep.subr.bf16.mxu0 0
      %1531 = vmatpush1.bf16.msra.mxu0 0
      %1532 = vmatprep.subr.bf16.mxu0 0
      %1533 = vmatpush1.bf16.msra.mxu0 0
      %1534 = vmatprep.subr.bf16.mxu0 0
      %1535 = vmatpush1.bf16.msra.mxu0 0
      %1536 = vmatprep.subr.bf16.mxu0 0
      %1537 = vmatpush1.bf16.msra.mxu0 0
      %1538 = vmatprep.subr.bf16.mxu0 0
      %1539 = vmatpush1.bf16.msra.mxu0 0
      %1540 = vmatprep.subr.bf16.mxu0 0
      %1541 = vmatpush1.bf16.msra.mxu0 0
      %1542 = vmatprep.subr.bf16.mxu0 0
      %1543 = vmatpush1.bf16.msra.mxu0 0
      %1544 = vmatprep.subr.bf16.mxu0 0
      %1545 = vmatpush1.bf16.msra.mxu0 0
      %1546 = vmatprep.mubr.bf16.mxu0 0
      %1547 = vmatmul.mubr.bf16.gmra.mrb[0].mxu0 %v1336
      %v1548 = vpop.f32.mrb[0].mxu0
      %v1549 = vadd.f32 0.0, %v1548
      %v1550 = vpop.f32.mrb[0].mxu0
      %v1551 = vpop.f32.mrb[0].mxu0
      %v1552 = vpop.f32.mrb[0].mxu0
      %1553 = vdwg.mxu0
      %v1554 = vadd.f32 %v1505, %v1549
      %v1555 = vxor.u32 %v1554, 2147483648
      %v1556 = vmul.f32 %v1555, 1.442695
      %v1557 = vpow.pop %v1556
      %v1558 = vadd.f32 %v1557, 1.0
      %v1559 = vrcp.pop %v1558
      %v1560 = vmul.f32 1.0, %v1559
      %v1561 = vmul.f32 %v1451, %v1337
      %v1562 = vmul.f32 %v1394, %v1503
      %v1563 = vadd.f32 %v1561, %v1562
      %v1564 = vtanh.pop %v1563
      %v1565 = vmul.f32 %v1560, %v1564
      %1566 = vst [vmem:[#allocation3] sm:$0xff] %v1563
      %1567 = vst [vmem:[#allocation2] sm:$0xff] %v1565
      %v1568 = vpack.c.bf16 %v1565, %v1565
      %1569 = vst [vmem:[%s119 + $0x10] sm:$0xf] %v1568
      %v1570 = vld [vmem:[#allocation2] sm:$0xff]
      %v1571 = vpack.c.bf16 %v1570, %v1570
      %v1572 = vld [vmem:[#allocation3] sm:$0xff]
      %v1573 = vld [vmem:[%s113 + $0x50] sm:$0xf]
      %v1574 = vunpack.c.l.bf16 %v1573
      %v1575 = vld [vmem:[#allocation4] sm:$0xff]
      %v1576 = vld [vmem:[#allocation4 + $0x8] sm:$0xff]
      %v1577 = vld [vmem:[#allocation4 + $0x10] sm:$0xff]
      %v1578 = vld [vmem:[#allocation4 + $0x18] sm:$0xff]
      %v1579 = vld [vmem:[#allocation4 + $0x20] sm:$0xff]
      %v1580 = vld [vmem:[#allocation4 + $0x28] sm:$0xff]
      %v1581 = vld [vmem:[#allocation4 + $0x30] sm:$0xff]
      %v1582 = vld [vmem:[#allocation4 + $0x38] sm:$0xff]
      %1583 = vmatprep.subr.bf16.mxu0 0
      %1584 = vmatpush1.bf16.msra.mxu0 %v1575
      %1585 = vmatprep.subr.bf16.mxu0 0
      %1586 = vmatpush1.bf16.msra.mxu0 %v1576
      %1587 = vmatprep.subr.bf16.mxu0 0
      %1588 = vmatpush1.bf16.msra.mxu0 %v1577
      %1589 = vmatprep.subr.bf16.mxu0 0
      %1590 = vmatpush1.bf16.msra.mxu0 %v1578
      %1591 = vmatprep.subr.bf16.mxu0 0
      %1592 = vmatpush1.bf16.msra.mxu0 %v1579
      %1593 = vmatprep.subr.bf16.mxu0 0
      %1594 = vmatpush1.bf16.msra.mxu0 %v1580
      %1595 = vmatprep.subr.bf16.mxu0 0
      %1596 = vmatpush1.bf16.msra.mxu0 %v1581
      %1597 = vmatprep.subr.bf16.mxu0 0
      %1598 = vmatpush1.bf16.msra.mxu0 %v1582
      %1599 = vmatprep.subr.bf16.mxu0 0
      %1600 = vmatpush1.bf16.msra.mxu0 0
      %1601 = vmatprep.subr.bf16.mxu0 0
      %1602 = vmatpush1.bf16.msra.mxu0 0
      %1603 = vmatprep.subr.bf16.mxu0 0
      %1604 = vmatpush1.bf16.msra.mxu0 0
      %1605 = vmatprep.subr.bf16.mxu0 0
      %1606 = vmatpush1.bf16.msra.mxu0 0
      %1607 = vmatprep.subr.bf16.mxu0 0
      %1608 = vmatpush1.bf16.msra.mxu0 0
      %1609 = vmatprep.subr.bf16.mxu0 0
      %1610 = vmatpush1.bf16.msra.mxu0 0
      %1611 = vmatprep.subr.bf16.mxu0 0
      %1612 = vmatpush1.bf16.msra.mxu0 0
      %1613 = vmatprep.subr.bf16.mxu0 0
      %1614 = vmatpush1.bf16.msra.mxu0 0
      %1615 = vmatprep.mubr.bf16.mxu0 0
      %1616 = vmatmul.mubr.bf16.gmra.mrb[0].mxu0 %v1571
      %v1617 = vpop.f32.mrb[0].mxu0
      %v1618 = vadd.f32 0.0, %v1617
      %v1619 = vpop.f32.mrb[0].mxu0
      %v1620 = vpop.f32.mrb[0].mxu0
      %v1621 = vpop.f32.mrb[0].mxu0
      %1622 = vdwg.mxu0
      %v1623 = vadd.f32 %v1574, %v1618
      %v1624 = vxor.u32 %v1623, 2147483648
      %v1625 = vmul.f32 %v1624, 1.442695
      %v1626 = vpow.pop %v1625
      %v1627 = vadd.f32 %v1626, 1.0
      %v1628 = vrcp.pop %v1627
      %v1629 = vmul.f32 1.0, %v1628
      %v1630 = vld [vmem:[%s113 + $0x54] sm:$0xf]
      %v1631 = vunpack.c.l.bf16 %v1630
      %v1632 = vld [vmem:[%s438] sm:$0xff]
      %v1633 = vld [vmem:[%s438 + $0x8] sm:$0xff]
      %v1634 = vld [vmem:[%s438 + $0x10] sm:$0xff]
      %v1635 = vld [vmem:[%s438 + $0x18] sm:$0xff]
      %v1636 = vld [vmem:[%s438 + $0x20] sm:$0xff]
      %v1637 = vld [vmem:[%s438 + $0x28] sm:$0xff]
      %v1638 = vld [vmem:[%s438 + $0x30] sm:$0xff]
      %v1639 = vld [vmem:[%s438 + $0x38] sm:$0xff]
      %1640 = vmatprep.subr.bf16.mxu0 0
      %1641 = vmatpush1.bf16.msra.mxu0 %v1632
      %1642 = vmatprep.subr.bf16.mxu0 0
      %1643 = vmatpush1.bf16.msra.mxu0 %v1633
      %1644 = vmatprep.subr.bf16.mxu0 0
      %1645 = vmatpush1.bf16.msra.mxu0 %v1634
      %1646 = vmatprep.subr.bf16.mxu0 0
      %1647 = vmatpush1.bf16.msra.mxu0 %v1635
      %1648 = vmatprep.subr.bf16.mxu0 0
      %1649 = vmatpush1.bf16.msra.mxu0 %v1636
      %1650 = vmatprep.subr.bf16.mxu0 0
      %1651 = vmatpush1.bf16.msra.mxu0 %v1637
      %1652 = vmatprep.subr.bf16.mxu0 0
      %1653 = vmatpush1.bf16.msra.mxu0 %v1638
      %1654 = vmatprep.subr.bf16.mxu0 0
      %1655 = vmatpush1.bf16.msra.mxu0 %v1639
      %1656 = vmatprep.subr.bf16.mxu0 0
      %1657 = vmatpush1.bf16.msra.mxu0 0
      %1658 = vmatprep.subr.bf16.mxu0 0
      %1659 = vmatpush1.bf16.msra.mxu0 0
      %1660 = vmatprep.subr.bf16.mxu0 0
      %1661 = vmatpush1.bf16.msra.mxu0 0
      %1662 = vmatprep.subr.bf16.mxu0 0
      %1663 = vmatpush1.bf16.msra.mxu0 0
      %1664 = vmatprep.subr.bf16.mxu0 0
      %1665 = vmatpush1.bf16.msra.mxu0 0
      %1666 = vmatprep.subr.bf16.mxu0 0
      %1667 = vmatpush1.bf16.msra.mxu0 0
      %1668 = vmatprep.subr.bf16.mxu0 0
      %1669 = vmatpush1.bf16.msra.mxu0 0
      %1670 = vmatprep.subr.bf16.mxu0 0
      %1671 = vmatpush1.bf16.msra.mxu0 0
      %1672 = vmatprep.mubr.bf16.mxu0 0
      %1673 = vmatmul.mubr.bf16.gmra.mrb[0].mxu0 %v1571
      %v1674 = vpop.f32.mrb[0].mxu0
      %v1675 = vadd.f32 0.0, %v1674
      %v1676 = vpop.f32.mrb[0].mxu0
      %v1677 = vpop.f32.mrb[0].mxu0
      %v1678 = vpop.f32.mrb[0].mxu0
      %1679 = vdwg.mxu0
      %v1680 = vadd.f32 %v1631, %v1675
      %v1681 = vxor.u32 %v1680, 2147483648
      %v1682 = vmul.f32 %v1681, 1.442695
      %v1683 = vpow.pop %v1682
      %v1684 = vadd.f32 %v1683, 1.0
      %v1685 = vrcp.pop %v1684
      %v1686 = vmul.f32 1.0, %v1685
      %v1687 = vld [vmem:[%s113 + $0x58] sm:$0xf]
      %v1688 = vunpack.c.l.bf16 %v1687
      %v1689 = vld [vmem:[%s504] sm:$0xff]
      %v1690 = vld [vmem:[%s504 + $0x8] sm:$0xff]
      %v1691 = vld [vmem:[%s504 + $0x10] sm:$0xff]
      %v1692 = vld [vmem:[%s504 + $0x18] sm:$0xff]
      %v1693 = vld [vmem:[%s504 + $0x20] sm:$0xff]
      %v1694 = vld [vmem:[%s504 + $0x28] sm:$0xff]
      %v1695 = vld [vmem:[%s504 + $0x30] sm:$0xff]
      %v1696 = vld [vmem:[%s504 + $0x38] sm:$0xff]
      %1697 = vmatprep.subr.bf16.mxu0 0
      %1698 = vmatpush1.bf16.msra.mxu0 %v1689
      %1699 = vmatprep.subr.bf16.mxu0 0
      %1700 = vmatpush1.bf16.msra.mxu0 %v1690
      %1701 = vmatprep.subr.bf16.mxu0 0
      %1702 = vmatpush1.bf16.msra.mxu0 %v1691
      %1703 = vmatprep.subr.bf16.mxu0 0
      %1704 = vmatpush1.bf16.msra.mxu0 %v1692
      %1705 = vmatprep.subr.bf16.mxu0 0
      %1706 = vmatpush1.bf16.msra.mxu0 %v1693
      %1707 = vmatprep.subr.bf16.mxu0 0
      %1708 = vmatpush1.bf16.msra.mxu0 %v1694
      %1709 = vmatprep.subr.bf16.mxu0 0
      %1710 = vmatpush1.bf16.msra.mxu0 %v1695
      %1711 = vmatprep.subr.bf16.mxu0 0
      %1712 = vmatpush1.bf16.msra.mxu0 %v1696
      %1713 = vmatprep.subr.bf16.mxu0 0
      %1714 = vmatpush1.bf16.msra.mxu0 0
      %1715 = vmatprep.subr.bf16.mxu0 0
      %1716 = vmatpush1.bf16.msra.mxu0 0
      %1717 = vmatprep.subr.bf16.mxu0 0
      %1718 = vmatpush1.bf16.msra.mxu0 0
      %1719 = vmatprep.subr.bf16.mxu0 0
      %1720 = vmatpush1.bf16.msra.mxu0 0
      %1721 = vmatprep.subr.bf16.mxu0 0
      %1722 = vmatpush1.bf16.msra.mxu0 0
      %1723 = vmatprep.subr.bf16.mxu0 0
      %1724 = vmatpush1.bf16.msra.mxu0 0
      %1725 = vmatprep.subr.bf16.mxu0 0
      %1726 = vmatpush1.bf16.msra.mxu0 0
      %1727 = vmatprep.subr.bf16.mxu0 0
      %1728 = vmatpush1.bf16.msra.mxu0 0
      %1729 = vmatprep.mubr.bf16.mxu0 0
      %1730 = vmatmul.mubr.bf16.gmra.mrb[0].mxu0 %v1571
      %v1731 = vpop.f32.mrb[0].mxu0
      %v1732 = vadd.f32 0.0, %v1731
      %v1733 = vpop.f32.mrb[0].mxu0
      %v1734 = vpop.f32.mrb[0].mxu0
      %v1735 = vpop.f32.mrb[0].mxu0
      %1736 = vdwg.mxu0
      %v1737 = vadd.f32 %v1688, %v1732
      %v1738 = vtanh.pop %v1737
      %v1739 = vld [vmem:[%s113 + $0x5c] sm:$0xf]
      %v1740 = vunpack.c.l.bf16 %v1739
      %v1741 = vld [vmem:[%s565] sm:$0xff]
      %v1742 = vld [vmem:[%s565 + $0x8] sm:$0xff]
      %v1743 = vld [vmem:[%s565 + $0x10] sm:$0xff]
      %v1744 = vld [vmem:[%s565 + $0x18] sm:$0xff]
      %v1745 = vld [vmem:[%s565 + $0x20] sm:$0xff]
      %v1746 = vld [vmem:[%s565 + $0x28] sm:$0xff]
      %v1747 = vld [vmem:[%s565 + $0x30] sm:$0xff]
      %v1748 = vld [vmem:[%s565 + $0x38] sm:$0xff]
      %1749 = vmatprep.subr.bf16.mxu0 0
      %1750 = vmatpush1.bf16.msra.mxu0 %v1741
      %1751 = vmatprep.subr.bf16.mxu0 0
      %1752 = vmatpush1.bf16.msra.mxu0 %v1742
      %1753 = vmatprep.subr.bf16.mxu0 0
      %1754 = vmatpush1.bf16.msra.mxu0 %v1743
      %1755 = vmatprep.subr.bf16.mxu0 0
      %1756 = vmatpush1.bf16.msra.mxu0 %v1744
      %1757 = vmatprep.subr.bf16.mxu0 0
      %1758 = vmatpush1.bf16.msra.mxu0 %v1745
      %1759 = vmatprep.subr.bf16.mxu0 0
      %1760 = vmatpush1.bf16.msra.mxu0 %v1746
      %1761 = vmatprep.subr.bf16.mxu0 0
      %1762 = vmatpush1.bf16.msra.mxu0 %v1747
      %1763 = vmatprep.subr.bf16.mxu0 0
      %1764 = vmatpush1.bf16.msra.mxu0 %v1748
      %1765 = vmatprep.subr.bf16.mxu0 0
      %1766 = vmatpush1.bf16.msra.mxu0 0
      %1767 = vmatprep.subr.bf16.mxu0 0
      %1768 = vmatpush1.bf16.msra.mxu0 0
      %1769 = vmatprep.subr.bf16.mxu0 0
      %1770 = vmatpush1.bf16.msra.mxu0 0
      %1771 = vmatprep.subr.bf16.mxu0 0
      %1772 = vmatpush1.bf16.msra.mxu0 0
      %1773 = vmatprep.subr.bf16.mxu0 0
      %1774 = vmatpush1.bf16.msra.mxu0 0
      %1775 = vmatprep.subr.bf16.mxu0 0
      %1776 = vmatpush1.bf16.msra.mxu0 0
      %1777 = vmatprep.subr.bf16.mxu0 0
      %1778 = vmatpush1.bf16.msra.mxu0 0
      %1779 = vmatprep.subr.bf16.mxu0 0
      %1780 = vmatpush1.bf16.msra.mxu0 0
      %1781 = vmatprep.mubr.bf16.mxu0 0
      %1782 = vmatmul.mubr.bf16.gmra.mrb[0].mxu0 %v1571
      %v1783 = vpop.f32.mrb[0].mxu0
      %v1784 = vadd.f32 0.0, %v1783
      %v1785 = vpop.f32.mrb[0].mxu0
      %v1786 = vpop.f32.mrb[0].mxu0
      %v1787 = vpop.f32.mrb[0].mxu0
      %1788 = vdwg.mxu0
      %v1789 = vadd.f32 %v1740, %v1784
      %v1790 = vxor.u32 %v1789, 2147483648
      %v1791 = vmul.f32 %v1790, 1.442695
      %v1792 = vpow.pop %v1791
      %v1793 = vadd.f32 %v1792, 1.0
      %v1794 = vrcp.pop %v1793
      %v1795 = vmul.f32 1.0, %v1794
      %v1796 = vmul.f32 %v1686, %v1572
      %v1797 = vmul.f32 %v1629, %v1738
      %v1798 = vadd.f32 %v1796, %v1797
      %v1799 = vtanh.pop %v1798
      %v1800 = vmul.f32 %v1795, %v1799
      %1801 = vst [vmem:[#allocation3] sm:$0xff] %v1798
      %1802 = vst [vmem:[#allocation2] sm:$0xff] %v1800
      %v1803 = vpack.c.bf16 %v1800, %v1800
      %1804 = vst [vmem:[%s119 + $0x14] sm:$0xf] %v1803
      %v1805 = vld [vmem:[#allocation2] sm:$0xff]
      %v1806 = vpack.c.bf16 %v1805, %v1805
      %v1807 = vld [vmem:[#allocation3] sm:$0xff]
      %v1808 = vld [vmem:[%s113 + $0x60] sm:$0xf]
      %v1809 = vunpack.c.l.bf16 %v1808
      %v1810 = vld [vmem:[#allocation4] sm:$0xff]
      %v1811 = vld [vmem:[#allocation4 + $0x8] sm:$0xff]
      %v1812 = vld [vmem:[#allocation4 + $0x10] sm:$0xff]
      %v1813 = vld [vmem:[#allocation4 + $0x18] sm:$0xff]
      %v1814 = vld [vmem:[#allocation4 + $0x20] sm:$0xff]
      %v1815 = vld [vmem:[#allocation4 + $0x28] sm:$0xff]
      %v1816 = vld [vmem:[#allocation4 + $0x30] sm:$0xff]
      %v1817 = vld [vmem:[#allocation4 + $0x38] sm:$0xff]
      %1818 = vmatprep.subr.bf16.mxu0 0
      %1819 = vmatpush1.bf16.msra.mxu0 %v1810
      %1820 = vmatprep.subr.bf16.mxu0 0
      %1821 = vmatpush1.bf16.msra.mxu0 %v1811
      %1822 = vmatprep.subr.bf16.mxu0 0
      %1823 = vmatpush1.bf16.msra.mxu0 %v1812
      %1824 = vmatprep.subr.bf16.mxu0 0
      %1825 = vmatpush1.bf16.msra.mxu0 %v1813
      %1826 = vmatprep.subr.bf16.mxu0 0
      %1827 = vmatpush1.bf16.msra.mxu0 %v1814
      %1828 = vmatprep.subr.bf16.mxu0 0
      %1829 = vmatpush1.bf16.msra.mxu0 %v1815
      %1830 = vmatprep.subr.bf16.mxu0 0
      %1831 = vmatpush1.bf16.msra.mxu0 %v1816
      %1832 = vmatprep.subr.bf16.mxu0 0
      %1833 = vmatpush1.bf16.msra.mxu0 %v1817
      %1834 = vmatprep.subr.bf16.mxu0 0
      %1835 = vmatpush1.bf16.msra.mxu0 0
      %1836 = vmatprep.subr.bf16.mxu0 0
      %1837 = vmatpush1.bf16.msra.mxu0 0
      %1838 = vmatprep.subr.bf16.mxu0 0
      %1839 = vmatpush1.bf16.msra.mxu0 0
      %1840 = vmatprep.subr.bf16.mxu0 0
      %1841 = vmatpush1.bf16.msra.mxu0 0
      %1842 = vmatprep.subr.bf16.mxu0 0
      %1843 = vmatpush1.bf16.msra.mxu0 0
      %1844 = vmatprep.subr.bf16.mxu0 0
      %1845 = vmatpush1.bf16.msra.mxu0 0
      %1846 = vmatprep.subr.bf16.mxu0 0
      %1847 = vmatpush1.bf16.msra.mxu0 0
      %1848 = vmatprep.subr.bf16.mxu0 0
      %1849 = vmatpush1.bf16.msra.mxu0 0
      %1850 = vmatprep.mubr.bf16.mxu0 0
      %1851 = vmatmul.mubr.bf16.gmra.mrb[0].mxu0 %v1806
      %v1852 = vpop.f32.mrb[0].mxu0
      %v1853 = vadd.f32 0.0, %v1852
      %v1854 = vpop.f32.mrb[0].mxu0
      %v1855 = vpop.f32.mrb[0].mxu0
      %v1856 = vpop.f32.mrb[0].mxu0
      %1857 = vdwg.mxu0
      %v1858 = vadd.f32 %v1809, %v1853
      %v1859 = vxor.u32 %v1858, 2147483648
      %v1860 = vmul.f32 %v1859, 1.442695
      %v1861 = vpow.pop %v1860
      %v1862 = vadd.f32 %v1861, 1.0
      %v1863 = vrcp.pop %v1862
      %v1864 = vmul.f32 1.0, %v1863
      %v1865 = vld [vmem:[%s113 + $0x64] sm:$0xf]
      %v1866 = vunpack.c.l.bf16 %v1865
      %v1867 = vld [vmem:[%s438] sm:$0xff]
      %v1868 = vld [vmem:[%s438 + $0x8] sm:$0xff]
      %v1869 = vld [vmem:[%s438 + $0x10] sm:$0xff]
      %v1870 = vld [vmem:[%s438 + $0x18] sm:$0xff]
      %v1871 = vld [vmem:[%s438 + $0x20] sm:$0xff]
      %v1872 = vld [vmem:[%s438 + $0x28] sm:$0xff]
      %v1873 = vld [vmem:[%s438 + $0x30] sm:$0xff]
      %v1874 = vld [vmem:[%s438 + $0x38] sm:$0xff]
      %1875 = vmatprep.subr.bf16.mxu0 0
      %1876 = vmatpush1.bf16.msra.mxu0 %v1867
      %1877 = vmatprep.subr.bf16.mxu0 0
      %1878 = vmatpush1.bf16.msra.mxu0 %v1868
      %1879 = vmatprep.subr.bf16.mxu0 0
      %1880 = vmatpush1.bf16.msra.mxu0 %v1869
      %1881 = vmatprep.subr.bf16.mxu0 0
      %1882 = vmatpush1.bf16.msra.mxu0 %v1870
      %1883 = vmatprep.subr.bf16.mxu0 0
      %1884 = vmatpush1.bf16.msra.mxu0 %v1871
      %1885 = vmatprep.subr.bf16.mxu0 0
      %1886 = vmatpush1.bf16.msra.mxu0 %v1872
      %1887 = vmatprep.subr.bf16.mxu0 0
      %1888 = vmatpush1.bf16.msra.mxu0 %v1873
      %1889 = vmatprep.subr.bf16.mxu0 0
      %1890 = vmatpush1.bf16.msra.mxu0 %v1874
      %1891 = vmatprep.subr.bf16.mxu0 0
      %1892 = vmatpush1.bf16.msra.mxu0 0
      %1893 = vmatprep.subr.bf16.mxu0 0
      %1894 = vmatpush1.bf16.msra.mxu0 0
      %1895 = vmatprep.subr.bf16.mxu0 0
      %1896 = vmatpush1.bf16.msra.mxu0 0
      %1897 = vmatprep.subr.bf16.mxu0 0
      %1898 = vmatpush1.bf16.msra.mxu0 0
      %1899 = vmatprep.subr.bf16.mxu0 0
      %1900 = vmatpush1.bf16.msra.mxu0 0
      %1901 = vmatprep.subr.bf16.mxu0 0
      %1902 = vmatpush1.bf16.msra.mxu0 0
      %1903 = vmatprep.subr.bf16.mxu0 0
      %1904 = vmatpush1.bf16.msra.mxu0 0
      %1905 = vmatprep.subr.bf16.mxu0 0
      %1906 = vmatpush1.bf16.msra.mxu0 0
      %1907 = vmatprep.mubr.bf16.mxu0 0
      %1908 = vmatmul.mubr.bf16.gmra.mrb[0].mxu0 %v1806
      %v1909 = vpop.f32.mrb[0].mxu0
      %v1910 = vadd.f32 0.0, %v1909
      %v1911 = vpop.f32.mrb[0].mxu0
      %v1912 = vpop.f32.mrb[0].mxu0
      %v1913 = vpop.f32.mrb[0].mxu0
      %1914 = vdwg.mxu0
      %v1915 = vadd.f32 %v1866, %v1910
      %v1916 = vxor.u32 %v1915, 2147483648
      %v1917 = vmul.f32 %v1916, 1.442695
      %v1918 = vpow.pop %v1917
      %v1919 = vadd.f32 %v1918, 1.0
      %v1920 = vrcp.pop %v1919
      %v1921 = vmul.f32 1.0, %v1920
      %v1922 = vld [vmem:[%s113 + $0x68] sm:$0xf]
      %v1923 = vunpack.c.l.bf16 %v1922
      %v1924 = vld [vmem:[%s504] sm:$0xff]
      %v1925 = vld [vmem:[%s504 + $0x8] sm:$0xff]
      %v1926 = vld [vmem:[%s504 + $0x10] sm:$0xff]
      %v1927 = vld [vmem:[%s504 + $0x18] sm:$0xff]
      %v1928 = vld [vmem:[%s504 + $0x20] sm:$0xff]
      %v1929 = vld [vmem:[%s504 + $0x28] sm:$0xff]
      %v1930 = vld [vmem:[%s504 + $0x30] sm:$0xff]
      %v1931 = vld [vmem:[%s504 + $0x38] sm:$0xff]
      %1932 = vmatprep.subr.bf16.mxu0 0
      %1933 = vmatpush1.bf16.msra.mxu0 %v1924
      %1934 = vmatprep.subr.bf16.mxu0 0
      %1935 = vmatpush1.bf16.msra.mxu0 %v1925
      %1936 = vmatprep.subr.bf16.mxu0 0
      %1937 = vmatpush1.bf16.msra.mxu0 %v1926
      %1938 = vmatprep.subr.bf16.mxu0 0
      %1939 = vmatpush1.bf16.msra.mxu0 %v1927
      %1940 = vmatprep.subr.bf16.mxu0 0
      %1941 = vmatpush1.bf16.msra.mxu0 %v1928
      %1942 = vmatprep.subr.bf16.mxu0 0
      %1943 = vmatpush1.bf16.msra.mxu0 %v1929
      %1944 = vmatprep.subr.bf16.mxu0 0
      %1945 = vmatpush1.bf16.msra.mxu0 %v1930
      %1946 = vmatprep.subr.bf16.mxu0 0
      %1947 = vmatpush1.bf16.msra.mxu0 %v1931
      %1948 = vmatprep.subr.bf16.mxu0 0
      %1949 = vmatpush1.bf16.msra.mxu0 0
      %1950 = vmatprep.subr.bf16.mxu0 0
      %1951 = vmatpush1.bf16.msra.mxu0 0
      %1952 = vmatprep.subr.bf16.mxu0 0
      %1953 = vmatpush1.bf16.msra.mxu0 0
      %1954 = vmatprep.subr.bf16.mxu0 0
      %1955 = vmatpush1.bf16.msra.mxu0 0
      %1956 = vmatprep.subr.bf16.mxu0 0
      %1957 = vmatpush1.bf16.msra.mxu0 0
      %1958 = vmatprep.subr.bf16.mxu0 0
      %1959 = vmatpush1.bf16.msra.mxu0 0
      %1960 = vmatprep.subr.bf16.mxu0 0
      %1961 = vmatpush1.bf16.msra.mxu0 0
      %1962 = vmatprep.subr.bf16.mxu0 0
      %1963 = vmatpush1.bf16.msra.mxu0 0
      %1964 = vmatprep.mubr.bf16.mxu0 0
      %1965 = vmatmul.mubr.bf16.gmra.mrb[0].mxu0 %v1806
      %v1966 = vpop.f32.mrb[0].mxu0
      %v1967 = vadd.f32 0.0, %v1966
      %v1968 = vpop.f32.mrb[0].mxu0
      %v1969 = vpop.f32.mrb[0].mxu0
      %v1970 = vpop.f32.mrb[0].mxu0
      %1971 = vdwg.mxu0
      %v1972 = vadd.f32 %v1923, %v1967
      %v1973 = vtanh.pop %v1972
      %v1974 = vld [vmem:[%s113 + $0x6c] sm:$0xf]
      %v1975 = vunpack.c.l.bf16 %v1974
      %v1976 = vld [vmem:[%s565] sm:$0xff]
      %v1977 = vld [vmem:[%s565 + $0x8] sm:$0xff]
      %v1978 = vld [vmem:[%s565 + $0x10] sm:$0xff]
      %v1979 = vld [vmem:[%s565 + $0x18] sm:$0xff]
      %v1980 = vld [vmem:[%s565 + $0x20] sm:$0xff]
      %v1981 = vld [vmem:[%s565 + $0x28] sm:$0xff]
      %v1982 = vld [vmem:[%s565 + $0x30] sm:$0xff]
      %v1983 = vld [vmem:[%s565 + $0x38] sm:$0xff]
      %1984 = vmatprep.subr.bf16.mxu0 0
      %1985 = vmatpush1.bf16.msra.mxu0 %v1976
      %1986 = vmatprep.subr.bf16.mxu0 0
      %1987 = vmatpush1.bf16.msra.mxu0 %v1977
      %1988 = vmatprep.subr.bf16.mxu0 0
      %1989 = vmatpush1.bf16.msra.mxu0 %v1978
      %1990 = vmatprep.subr.bf16.mxu0 0
      %1991 = vmatpush1.bf16.msra.mxu0 %v1979
      %1992 = vmatprep.subr.bf16.mxu0 0
      %1993 = vmatpush1.bf16.msra.mxu0 %v1980
      %1994 = vmatprep.subr.bf16.mxu0 0
      %1995 = vmatpush1.bf16.msra.mxu0 %v1981
      %1996 = vmatprep.subr.bf16.mxu0 0
      %1997 = vmatpush1.bf16.msra.mxu0 %v1982
      %1998 = vmatprep.subr.bf16.mxu0 0
      %1999 = vmatpush1.bf16.msra.mxu0 %v1983
      %2000 = vmatprep.subr.bf16.mxu0 0
      %2001 = vmatpush1.bf16.msra.mxu0 0
      %2002 = vmatprep.subr.bf16.mxu0 0
      %2003 = vmatpush1.bf16.msra.mxu0 0
      %2004 = vmatprep.subr.bf16.mxu0 0
      %2005 = vmatpush1.bf16.msra.mxu0 0
      %2006 = vmatprep.subr.bf16.mxu0 0
      %2007 = vmatpush1.bf16.msra.mxu0 0
      %2008 = vmatprep.subr.bf16.mxu0 0
      %2009 = vmatpush1.bf16.msra.mxu0 0
      %2010 = vmatprep.subr.bf16.mxu0 0
      %2011 = vmatpush1.bf16.msra.mxu0 0
      %2012 = vmatprep.subr.bf16.mxu0 0
      %2013 = vmatpush1.bf16.msra.mxu0 0
      %2014 = vmatprep.subr.bf16.mxu0 0
      %2015 = vmatpush1.bf16.msra.mxu0 0
      %2016 = vmatprep.mubr.bf16.mxu0 0
      %2017 = vmatmul.mubr.bf16.gmra.mrb[0].mxu0 %v1806
      %v2018 = vpop.f32.mrb[0].mxu0
      %v2019 = vadd.f32 0.0, %v2018
      %v2020 = vpop.f32.mrb[0].mxu0
      %v2021 = vpop.f32.mrb[0].mxu0
      %v2022 = vpop.f32.mrb[0].mxu0
      %2023 = vdwg.mxu0
      %v2024 = vadd.f32 %v1975, %v2019
      %v2025 = vxor.u32 %v2024, 2147483648
      %v2026 = vmul.f32 %v2025, 1.442695
      %v2027 = vpow.pop %v2026
      %v2028 = vadd.f32 %v2027, 1.0
      %v2029 = vrcp.pop %v2028
      %v2030 = vmul.f32 1.0, %v2029
      %v2031 = vmul.f32 %v1921, %v1807
      %v2032 = vmul.f32 %v1864, %v1973
      %v2033 = vadd.f32 %v2031, %v2032
      %v2034 = vtanh.pop %v2033
      %v2035 = vmul.f32 %v2030, %v2034
      %2036 = vst [vmem:[#allocation3] sm:$0xff] %v2033
      %2037 = vst [vmem:[#allocation2] sm:$0xff] %v2035
      %v2038 = vpack.c.bf16 %v2035, %v2035
      %2039 = vst [vmem:[%s119 + $0x18] sm:$0xf] %v2038
      %v2040 = vld [vmem:[#allocation2] sm:$0xff]
      %v2041 = vpack.c.bf16 %v2040, %v2040
      %v2042 = vld [vmem:[#allocation3] sm:$0xff]
      %v2043 = vld [vmem:[%s113 + $0x70] sm:$0xf]
      %v2044 = vunpack.c.l.bf16 %v2043
      %v2045 = vld [vmem:[#allocation4] sm:$0xff]
      %v2046 = vld [vmem:[#allocation4 + $0x8] sm:$0xff]
      %v2047 = vld [vmem:[#allocation4 + $0x10] sm:$0xff]
      %v2048 = vld [vmem:[#allocation4 + $0x18] sm:$0xff]
      %v2049 = vld [vmem:[#allocation4 + $0x20] sm:$0xff]
      %v2050 = vld [vmem:[#allocation4 + $0x28] sm:$0xff]
      %v2051 = vld [vmem:[#allocation4 + $0x30] sm:$0xff]
      %v2052 = vld [vmem:[#allocation4 + $0x38] sm:$0xff]
      %2053 = vmatprep.subr.bf16.mxu0 0
      %2054 = vmatpush1.bf16.msra.mxu0 %v2045
      %2055 = vmatprep.subr.bf16.mxu0 0
      %2056 = vmatpush1.bf16.msra.mxu0 %v2046
      %2057 = vmatprep.subr.bf16.mxu0 0
      %2058 = vmatpush1.bf16.msra.mxu0 %v2047
      %2059 = vmatprep.subr.bf16.mxu0 0
      %2060 = vmatpush1.bf16.msra.mxu0 %v2048
      %2061 = vmatprep.subr.bf16.mxu0 0
      %2062 = vmatpush1.bf16.msra.mxu0 %v2049
      %2063 = vmatprep.subr.bf16.mxu0 0
      %2064 = vmatpush1.bf16.msra.mxu0 %v2050
      %2065 = vmatprep.subr.bf16.mxu0 0
      %2066 = vmatpush1.bf16.msra.mxu0 %v2051
      %2067 = vmatprep.subr.bf16.mxu0 0
      %2068 = vmatpush1.bf16.msra.mxu0 %v2052
      %2069 = vmatprep.subr.bf16.mxu0 0
      %2070 = vmatpush1.bf16.msra.mxu0 0
      %2071 = vmatprep.subr.bf16.mxu0 0
      %2072 = vmatpush1.bf16.msra.mxu0 0
      %2073 = vmatprep.subr.bf16.mxu0 0
      %2074 = vmatpush1.bf16.msra.mxu0 0
      %2075 = vmatprep.subr.bf16.mxu0 0
      %2076 = vmatpush1.bf16.msra.mxu0 0
      %2077 = vmatprep.subr.bf16.mxu0 0
      %2078 = vmatpush1.bf16.msra.mxu0 0
      %2079 = vmatprep.subr.bf16.mxu0 0
      %2080 = vmatpush1.bf16.msra.mxu0 0
      %2081 = vmatprep.subr.bf16.mxu0 0
      %2082 = vmatpush1.bf16.msra.mxu0 0
      %2083 = vmatprep.subr.bf16.mxu0 0
      %2084 = vmatpush1.bf16.msra.mxu0 0
      %2085 = vmatprep.mubr.bf16.mxu0 0
      %2086 = vmatmul.mubr.bf16.gmra.mrb[0].mxu0 %v2041
      %v2087 = vpop.f32.mrb[0].mxu0
      %v2088 = vadd.f32 0.0, %v2087
      %v2089 = vpop.f32.mrb[0].mxu0
      %v2090 = vpop.f32.mrb[0].mxu0
      %v2091 = vpop.f32.mrb[0].mxu0
      %2092 = vdwg.mxu0
      %v2093 = vadd.f32 %v2044, %v2088
      %v2094 = vxor.u32 %v2093, 2147483648
      %v2095 = vmul.f32 %v2094, 1.442695
      %v2096 = vpow.pop %v2095
      %v2097 = vadd.f32 %v2096, 1.0
      %v2098 = vrcp.pop %v2097
      %v2099 = vmul.f32 1.0, %v2098
      %v2100 = vld [vmem:[%s113 + $0x74] sm:$0xf]
      %v2101 = vunpack.c.l.bf16 %v2100
      %v2102 = vld [vmem:[%s438] sm:$0xff]
      %v2103 = vld [vmem:[%s438 + $0x8] sm:$0xff]
      %v2104 = vld [vmem:[%s438 + $0x10] sm:$0xff]
      %v2105 = vld [vmem:[%s438 + $0x18] sm:$0xff]
      %v2106 = vld [vmem:[%s438 + $0x20] sm:$0xff]
      %v2107 = vld [vmem:[%s438 + $0x28] sm:$0xff]
      %v2108 = vld [vmem:[%s438 + $0x30] sm:$0xff]
      %v2109 = vld [vmem:[%s438 + $0x38] sm:$0xff]
      %2110 = vmatprep.subr.bf16.mxu0 0
      %2111 = vmatpush1.bf16.msra.mxu0 %v2102
      %2112 = vmatprep.subr.bf16.mxu0 0
      %2113 = vmatpush1.bf16.msra.mxu0 %v2103
      %2114 = vmatprep.subr.bf16.mxu0 0
      %2115 = vmatpush1.bf16.msra.mxu0 %v2104
      %2116 = vmatprep.subr.bf16.mxu0 0
      %2117 = vmatpush1.bf16.msra.mxu0 %v2105
      %2118 = vmatprep.subr.bf16.mxu0 0
      %2119 = vmatpush1.bf16.msra.mxu0 %v2106
      %2120 = vmatprep.subr.bf16.mxu0 0
      %2121 = vmatpush1.bf16.msra.mxu0 %v2107
      %2122 = vmatprep.subr.bf16.mxu0 0
      %2123 = vmatpush1.bf16.msra.mxu0 %v2108
      %2124 = vmatprep.subr.bf16.mxu0 0
      %2125 = vmatpush1.bf16.msra.mxu0 %v2109
      %2126 = vmatprep.subr.bf16.mxu0 0
      %2127 = vmatpush1.bf16.msra.mxu0 0
      %2128 = vmatprep.subr.bf16.mxu0 0
      %2129 = vmatpush1.bf16.msra.mxu0 0
      %2130 = vmatprep.subr.bf16.mxu0 0
      %2131 = vmatpush1.bf16.msra.mxu0 0
      %2132 = vmatprep.subr.bf16.mxu0 0
      %2133 = vmatpush1.bf16.msra.mxu0 0
      %2134 = vmatprep.subr.bf16.mxu0 0
      %2135 = vmatpush1.bf16.msra.mxu0 0
      %2136 = vmatprep.subr.bf16.mxu0 0
      %2137 = vmatpush1.bf16.msra.mxu0 0
      %2138 = vmatprep.subr.bf16.mxu0 0
      %2139 = vmatpush1.bf16.msra.mxu0 0
      %2140 = vmatprep.subr.bf16.mxu0 0
      %2141 = vmatpush1.bf16.msra.mxu0 0
      %2142 = vmatprep.mubr.bf16.mxu0 0
      %2143 = vmatmul.mubr.bf16.gmra.mrb[0].mxu0 %v2041
      %v2144 = vpop.f32.mrb[0].mxu0
      %v2145 = vadd.f32 0.0, %v2144
      %v2146 = vpop.f32.mrb[0].mxu0
      %v2147 = vpop.f32.mrb[0].mxu0
      %v2148 = vpop.f32.mrb[0].mxu0
      %2149 = vdwg.mxu0
      %v2150 = vadd.f32 %v2101, %v2145
      %v2151 = vxor.u32 %v2150, 2147483648
      %v2152 = vmul.f32 %v2151, 1.442695
      %v2153 = vpow.pop %v2152
      %v2154 = vadd.f32 %v2153, 1.0
      %v2155 = vrcp.pop %v2154
      %v2156 = vmul.f32 1.0, %v2155
      %v2157 = vld [vmem:[%s113 + $0x78] sm:$0xf]
      %v2158 = vunpack.c.l.bf16 %v2157
      %v2159 = vld [vmem:[%s504] sm:$0xff]
      %v2160 = vld [vmem:[%s504 + $0x8] sm:$0xff]
      %v2161 = vld [vmem:[%s504 + $0x10] sm:$0xff]
      %v2162 = vld [vmem:[%s504 + $0x18] sm:$0xff]
      %v2163 = vld [vmem:[%s504 + $0x20] sm:$0xff]
      %v2164 = vld [vmem:[%s504 + $0x28] sm:$0xff]
      %v2165 = vld [vmem:[%s504 + $0x30] sm:$0xff]
      %v2166 = vld [vmem:[%s504 + $0x38] sm:$0xff]
      %2167 = vmatprep.subr.bf16.mxu0 0
      %2168 = vmatpush1.bf16.msra.mxu0 %v2159
      %2169 = vmatprep.subr.bf16.mxu0 0
      %2170 = vmatpush1.bf16.msra.mxu0 %v2160
      %2171 = vmatprep.subr.bf16.mxu0 0
      %2172 = vmatpush1.bf16.msra.mxu0 %v2161
      %2173 = vmatprep.subr.bf16.mxu0 0
      %2174 = vmatpush1.bf16.msra.mxu0 %v2162
      %2175 = vmatprep.subr.bf16.mxu0 0
      %2176 = vmatpush1.bf16.msra.mxu0 %v2163
      %2177 = vmatprep.subr.bf16.mxu0 0
      %2178 = vmatpush1.bf16.msra.mxu0 %v2164
      %2179 = vmatprep.subr.bf16.mxu0 0
      %2180 = vmatpush1.bf16.msra.mxu0 %v2165
      %2181 = vmatprep.subr.bf16.mxu0 0
      %2182 = vmatpush1.bf16.msra.mxu0 %v2166
      %2183 = vmatprep.subr.bf16.mxu0 0
      %2184 = vmatpush1.bf16.msra.mxu0 0
      %2185 = vmatprep.subr.bf16.mxu0 0
      %2186 = vmatpush1.bf16.msra.mxu0 0
      %2187 = vmatprep.subr.bf16.mxu0 0
      %2188 = vmatpush1.bf16.msra.mxu0 0
      %2189 = vmatprep.subr.bf16.mxu0 0
      %2190 = vmatpush1.bf16.msra.mxu0 0
      %2191 = vmatprep.subr.bf16.mxu0 0
      %2192 = vmatpush1.bf16.msra.mxu0 0
      %2193 = vmatprep.subr.bf16.mxu0 0
      %2194 = vmatpush1.bf16.msra.mxu0 0
      %2195 = vmatprep.subr.bf16.mxu0 0
      %2196 = vmatpush1.bf16.msra.mxu0 0
      %2197 = vmatprep.subr.bf16.mxu0 0
      %2198 = vmatpush1.bf16.msra.mxu0 0
      %2199 = vmatprep.mubr.bf16.mxu0 0
      %2200 = vmatmul.mubr.bf16.gmra.mrb[0].mxu0 %v2041
      %v2201 = vpop.f32.mrb[0].mxu0
      %v2202 = vadd.f32 0.0, %v2201
      %v2203 = vpop.f32.mrb[0].mxu0
      %v2204 = vpop.f32.mrb[0].mxu0
      %v2205 = vpop.f32.mrb[0].mxu0
      %2206 = vdwg.mxu0
      %v2207 = vadd.f32 %v2158, %v2202
      %v2208 = vtanh.pop %v2207
      %v2209 = vld [vmem:[%s113 + $0x7c] sm:$0xf]
      %v2210 = vunpack.c.l.bf16 %v2209
      %v2211 = vld [vmem:[%s565] sm:$0xff]
      %v2212 = vld [vmem:[%s565 + $0x8] sm:$0xff]
      %v2213 = vld [vmem:[%s565 + $0x10] sm:$0xff]
      %v2214 = vld [vmem:[%s565 + $0x18] sm:$0xff]
      %v2215 = vld [vmem:[%s565 + $0x20] sm:$0xff]
      %v2216 = vld [vmem:[%s565 + $0x28] sm:$0xff]
      %v2217 = vld [vmem:[%s565 + $0x30] sm:$0xff]
      %v2218 = vld [vmem:[%s565 + $0x38] sm:$0xff]
      %2219 = vmatprep.subr.bf16.mxu0 0
      %2220 = vmatpush1.bf16.msra.mxu0 %v2211
      %2221 = vmatprep.subr.bf16.mxu0 0
      %2222 = vmatpush1.bf16.msra.mxu0 %v2212
      %2223 = vmatprep.subr.bf16.mxu0 0
      %2224 = vmatpush1.bf16.msra.mxu0 %v2213
      %2225 = vmatprep.subr.bf16.mxu0 0
      %2226 = vmatpush1.bf16.msra.mxu0 %v2214
      %2227 = vmatprep.subr.bf16.mxu0 0
      %2228 = vmatpush1.bf16.msra.mxu0 %v2215
      %2229 = vmatprep.subr.bf16.mxu0 0
      %2230 = vmatpush1.bf16.msra.mxu0 %v2216
      %2231 = vmatprep.subr.bf16.mxu0 0
      %2232 = vmatpush1.bf16.msra.mxu0 %v2217
      %2233 = vmatprep.subr.bf16.mxu0 0
      %2234 = vmatpush1.bf16.msra.mxu0 %v2218
      %2235 = vmatprep.subr.bf16.mxu0 0
      %2236 = vmatpush1.bf16.msra.mxu0 0
      %2237 = vmatprep.subr.bf16.mxu0 0
      %2238 = vmatpush1.bf16.msra.mxu0 0
      %2239 = vmatprep.subr.bf16.mxu0 0
      %2240 = vmatpush1.bf16.msra.mxu0 0
      %2241 = vmatprep.subr.bf16.mxu0 0
      %2242 = vmatpush1.bf16.msra.mxu0 0
      %2243 = vmatprep.subr.bf16.mxu0 0
      %2244 = vmatpush1.bf16.msra.mxu0 0
      %2245 = vmatprep.subr.bf16.mxu0 0
      %2246 = vmatpush1.bf16.msra.mxu0 0
      %2247 = vmatprep.subr.bf16.mxu0 0
      %2248 = vmatpush1.bf16.msra.mxu0 0
      %2249 = vmatprep.subr.bf16.mxu0 0
      %2250 = vmatpush1.bf16.msra.mxu0 0
      %2251 = vmatprep.mubr.bf16.mxu0 0
      %2252 = vmatmul.mubr.bf16.gmra.mrb[0].mxu0 %v2041
      %v2253 = vpop.f32.mrb[0].mxu0
      %v2254 = vadd.f32 0.0, %v2253
      %v2255 = vpop.f32.mrb[0].mxu0
      %v2256 = vpop.f32.mrb[0].mxu0
      %v2257 = vpop.f32.mrb[0].mxu0
      %2258 = vdwg.mxu0
      %v2259 = vadd.f32 %v2210, %v2254
      %v2260 = vxor.u32 %v2259, 2147483648
      %v2261 = vmul.f32 %v2260, 1.442695
      %v2262 = vpow.pop %v2261
      %v2263 = vadd.f32 %v2262, 1.0
      %v2264 = vrcp.pop %v2263
      %v2265 = vmul.f32 1.0, %v2264
      %v2266 = vmul.f32 %v2156, %v2042
      %v2267 = vmul.f32 %v2099, %v2208
      %v2268 = vadd.f32 %v2266, %v2267
      %v2269 = vtanh.pop %v2268
      %v2270 = vmul.f32 %v2265, %v2269
      %2271 = vst [vmem:[#allocation3] sm:$0xff] %v2268
      %2272 = vst [vmem:[#allocation2] sm:$0xff] %v2270
      %v2273 = vpack.c.bf16 %v2270, %v2270
      %2274 = vst [vmem:[%s119 + $0x1c] sm:$0xf] %v2273
      %s2275 = smul.u32 8, %s13
      %p2276 = scmp.lt.s32.totalorder %s2275, 15
      %s2277 = scalar_select %p2276, %s2275, 15
      %s2278 = smul.addr %s2277, 4
      %s2279 = scalar_lea.vmem %s2, %s2278
      // Predicated region
      $region181: #{lstm_model_forward.4} parent=23 // pred_check
        %p2280 = pneg %p57
      $region182: #{lstm_model_forward.4} parent=23 // pred_check_branch
        %2282 = sbr.rel (%p2280) target = $region184
      $region183: #{lstm_model_forward.4} parent=23 // pred_region
        %s2283 = smul.u32 8, %s13
      $region184: #{lstm_model_forward.4} parent=23 // pred_fallthru
        _
    $region24: #{lstm_model_forward.4} parent=5 // pred_fallthru
      _
    %p2284 = scmp.le.s32.totalorder 2, %s8
    // Predicated region
    $region185: #{lstm_model_forward.4} parent=5 // pred_check
      %p2285 = pneg %p2284
    $region186: #{lstm_model_forward.4} parent=5 // pred_check_branch
      %2287 = sbr.rel (%p2285) target = $region188
    $region187: #{lstm_model_forward.4} parent=5 // pred_region
      %s2288 = ssub.s32 %s8, 2
      // Predicated region
      $region189: #{lstm_model_forward.4} parent=187 // pred_check
        %p2289 = pneg %p63
      $region190: #{lstm_model_forward.4} parent=187 // pred_check_branch
        %2291 = sbr.rel (%p2289) target = $region192
      $region191: #{lstm_model_forward.4} parent=187 // pred_region
        %s2292 = smul.u32 8, %s14
        %p2293 = scmp.lt.s32.totalorder %s2292, 15
        %s2294 = scalar_select %p2293, %s2292, 15
        %s2295 = smul.addr %s2294, 4
        %s2296 = scalar_lea.vmem %s2, %s2295
      $region192: #{lstm_model_forward.4} parent=187 // pred_fallthru
        _
    $region188: #{lstm_model_forward.4} parent=5 // pred_fallthru
      _
  $region6: #{lstm_model_forward.4} parent=0 // loop_footer
    %s12 = sadd.s32 1, %s8
  $region7: #{lstm_model_forward.4} parent=0 // loop_footer_branch
    %7 = sbr.rel target = $region3
  $region8: #{lstm_model_forward.4} parent=0 // loop_exit
    _
  %2297 = vsyncmov [#allocation5]
  %s2298 = vpop.sfrf %2297
  %p2299 = scmp.eq.s32.totalorder %s2298, 0
  %p2300 = pneg %p2299
  %2302 = shalt.err (%p2300)
  %s2303 = scalar_lea.sflag [#allocation5], 1
  %2304 = vsyncmov %s2303
  %s2305 = vpop.sfrf %2304
  %p2306 = scmp.eq.s32.totalorder %s2305, 0
  %p2307 = pneg %p2306
  %2309 = shalt.err (%p2307)
  %s2310 = scalar_lea.sflag [#allocation5], 2
  %2311 = vsyncmov %s2310
  %s2312 = vpop.sfrf %2311
  %p2313 = scmp.eq.s32.totalorder %s2312, 0
  %p2314 = pneg %p2313
  %2316 = shalt.err (%p2314)
  %s2317 = scalar_lea.sflag [#allocation5], 3
  %2318 = vsyncmov %s2317
  %s2319 = vpop.sfrf %2318
  %p2320 = scmp.eq.s32.totalorder %s2319, 0
  %p2321 = pneg %p2320
  %2323 = shalt.err (%p2321)

</llo_original>
